<compile_context>
chip_gen: v7x
topology: tpu7x:2x2x1
jax: 0.10.0
libtpu: 0.0.40
codegen_flags: <defaults>
</compile_context>

<pallas_src>
import functools

import jax
import jax.numpy as jnp
from jax.experimental import pallas as pl
from jax.experimental.pallas import tpu as pltpu


# ----------------------------------------------------------------------------
# Generation-dependent VMEM budgets
# ----------------------------------------------------------------------------
@functools.lru_cache(maxsize=1)
def _vmem_budgets():
    """(per-step tile byte budget, scoped-vmem-limit clamp).

    v5e / v6e have 128 MiB physical VMEM -> big tiles, high clamp.
    v7x has 64 MiB -> conservative values (also the safe fallback)."""
    phys = 0
    try:
        info = pltpu.get_tpu_info()
        phys = int(getattr(info, "vmem_capacity_bytes", 0) or 0)
    except Exception:
        phys = 0
    if phys >= (96 << 20):
        return (48 << 20), (96 << 20)
    return (22 << 20), (44 << 20)


def _vmem_limit(block_bytes, clamp):
    # block_bytes already includes double buffering; add pipelining slack.
    return int(min(max(block_bytes + (16 << 20), 32 << 20), clamp))


def _pick_row_tile(ho, n, row_bytes, tile_budget):
    """Largest row tile that fits the VMEM budget, divides Ho exactly and
    leaves >= 2 grid steps on the parallel axes (v7x has 2 TensorCores)."""
    tho = max(ho, 1)
    while tho > 1 and 2 * tho * row_bytes > tile_budget:
        tho = (tho + 1) // 2
    while tho > 1 and n * ((ho + tho - 1) // tho) < 2:
        tho = (tho + 1) // 2
    while ho % tho:
        tho -= 1
    return tho


# ----------------------------------------------------------------------------
# Pallas kernels
# ----------------------------------------------------------------------------
def _stem_fused_kernel(x_ref, w1_ref, b1_ref, w2_ref, b2_ref, wl_ref, bl_ref, o_ref):
    """stem1 (2x2/s2) -> stem2 (2x2/s2) -> layer1 (1x1), bias+ReLU after each.

    x_ref : (tho, 2, 2, Wo4, 12) bf16 -- two-level space-to-depth image tile;
            (dy, dx) are stem2's taps, the 12 lanes = (ey, ex, rgb) are stem1's
            receptive field, already contiguous.  Every tap is a pair of dense
            MXU matmuls; the stride-2 stem1 activation never exists in HBM.
    w1: (12, C) bf16   w2: (4, C, C) bf16 (tap-major)   wl: (C, Cf) bf16
    b* : (1, C/Cf) f32           o_ref: (tho, Wo4, Cf)
    """
    tho, _, _, wo, kc = x_ref.shape
    rows = tho * wo
    acc = None
    for t in range(4):                                   # static tap loop (dy, dx)
        dy, dx = divmod(t, 2)
        xt = x_ref[:, dy, dx].reshape(rows, kc)          # per-tap streamed load (bf16)
        h1 = jnp.dot(xt, w1_ref[...], preferred_element_type=jnp.float32)
        h1 = jnp.maximum(h1 + b1_ref[...], 0.0).astype(jnp.bfloat16)
        d = jnp.dot(h1, w2_ref[t], preferred_element_type=jnp.float32)
        acc = d if acc is None else acc + d
    h2 = jnp.maximum(acc + b2_ref[...], 0.0).astype(jnp.bfloat16)
    f1 = jnp.dot(h2, wl_ref[...], preferred_element_type=jnp.float32)
    f1 = jnp.maximum(f1 + bl_ref[...], 0.0)
    o_ref[...] = f1.reshape(tho, wo, -1).astype(o_ref.dtype)


def _conv_tap_kernel(x_ref, w_ref, b_ref, o_ref):
    """2x2 / stride-2 conv + bias + ReLU as 2 row-tap MXU matmuls.

    x_ref : (tho, 2, Wo, 2*Cin) bf16   w_ref : (2, 2*Cin, Cout) bf16
    b_ref : (1, Cout) f32              o_ref : (tho, Wo, Cout)
    """
    tho, k, wo, kc = x_ref.shape
    rows = tho * wo
    acc = None
    for dy in range(k):                                  # per-tap ref load, no whole-block load
        xt = x_ref[:, dy].reshape(rows, kc)
        d = jnp.dot(xt, w_ref[dy], preferred_element_type=jnp.float32)
        acc = d if acc is None else acc + d
    h = jnp.maximum(acc + b_ref[...], 0.0)
    o_ref[...] = h.reshape(tho, wo, -1).astype(o_ref.dtype)


# ----------------------------------------------------------------------------
# pallas_call wrappers
# ----------------------------------------------------------------------------
def stem_layer1_fused(images_nhwc, params):
    """Fused stem1+stem2+layer1 (stride 4).  Returns the 'layer1' map in bf16."""
    N, H, W, Cin = images_nhwc.shape
    assert H % 4 == 0 and W % 4 == 0 and Cin == 3
    H4, W4 = H // 4, W // 4
    C = params["stem1_b"].shape[0]
    Cf = params["layer1_b"].shape[0]
    kC = 4 * Cin                                         # 12

    # Pad W4 to a multiple of 8 (kernel==stride: padded cols only make padded
    # output cols, sliced off below) -> lane-dense stores + free in-kernel reshapes.
    W4p = max(8, ((W4 + 7) // 8) * 8)
    img = images_nhwc.astype(jnp.bfloat16)
    if W4p != W4:
        img = jnp.pad(img, ((0, 0), (0, 0), (0, 4 * (W4p - W4)), (0, 0)))

    # Two-level space-to-depth (cheap XLA copy of a 3-channel tensor):
    #   img[n, 4i+2dy+ey, 4j+2dx+ex, c] -> x6[n, i, dy, dx, j, ey*6+ex*3+c]
    x8 = img.reshape(N, H4, 2, 2, W4p, 2, 2, Cin)        # (n,i,dy,ey,j,dx,ex,c)
    x8 = jnp.transpose(x8, (0, 1, 2, 5, 4, 3, 6, 7))     # (n,i,dy,dx,j,ey,ex,c)
    x6 = x8.reshape(N, H4, 2, 2, W4p, kC)

    tile_budget, clamp = _vmem_budgets()
    # in (bf16) + out (bf16) + in-kernel f32/bf16 temporaries, per stride-4 row
    row_bytes = 4 * W4p * kC * 2 + W4p * Cf * 2 + W4p * C * 10
    tho = _pick_row_tile(H4, N, row_bytes, tile_budget)
    w_bytes = 2 * (params["stem1_w"].size + params["stem2_w"].size
                   + params["layer1_w"].size) + 4 * (2 * C + Cf)
    block_bytes = 2 * tho * row_bytes + w_bytes

    y = pl.pallas_call(
        _stem_fused_kernel,
        out_shape=jax.ShapeDtypeStruct((N, H4, W4p, Cf), jnp.bfloat16),
        grid=(N, H4 // tho),
        in_specs=[
            pl.BlockSpec((None, tho, 2, 2, W4p, kC), lambda n, i: (n, i, 0, 0, 0, 0)),
            pl.BlockSpec((kC, C), lambda n, i: (0, 0)),
            pl.BlockSpec((1, C), lambda n, i: (0, 0)),
            pl.BlockSpec((4, C, C), lambda n, i: (0, 0, 0)),
            pl.BlockSpec((1, C), lambda n, i: (0, 0)),
            pl.BlockSpec((C, Cf), lambda n, i: (0, 0)),
            pl.BlockSpec((1, Cf), lambda n, i: (0, 0)),
        ],
        out_specs=pl.BlockSpec((None, tho, W4p, Cf), lambda n, i: (n, i, 0, 0)),
        compiler_params=pltpu.CompilerParams(
            dimension_semantics=("parallel", "parallel"),
            vmem_limit_bytes=_vmem_limit(block_bytes, clamp),
        ),
    )(x6, params["stem1_w"], params["stem1_b"].reshape(1, C),
      params["stem2_w"], params["stem2_b"].reshape(1, C),
      params["layer1_w"], params["layer1_b"].reshape(1, Cf))
    if W4p != W4:
        y = y[:, :, :W4, :]
    return y


def conv2d_s2_bias_relu(x_nhwc, w, b, out_dtype):
    """One pyramid layer: 2x2 conv, stride 2, bias, ReLU.

    x is NHWC bf16; w is (2, 2*Cin, Cout) bf16 (row-tap layout); b is f32."""
    N, H, W, Cin = x_nhwc.shape
    assert H % 2 == 0 and W % 2 == 0
    Ho, Wo = H // 2, W // 2
    kC = 2 * Cin
    Cout = w.shape[-1]

    Wop = max(8, ((Wo + 7) // 8) * 8)
    if Wop != Wo:                      # pad instead of the old HBM im2col fallback
        x_nhwc = jnp.pad(x_nhwc, ((0, 0), (0, 0), (0, 2 * (Wop - Wo)), (0, 0)))
    x5 = x_nhwc.reshape(N, Ho, 2, Wop, kC)   # free (contiguous) row-tap reshape

    tile_budget, clamp = _vmem_budgets()
    o_bytes = jnp.dtype(out_dtype).itemsize
    row_bytes = 2 * Wop * kC * 2 + Wop * Cout * (o_bytes + 4)   # + f32 acc temp
    tho = _pick_row_tile(Ho, N, row_bytes, tile_budget)
    block_bytes = 2 * tho * row_bytes + 2 * w.size + 4 * Cout

    y = pl.pallas_call(
        _conv_tap_kernel,
        out_shape=jax.ShapeDtypeStruct((N, Ho, Wop, Cout), out_dtype),
        grid=(N, Ho // tho),
        in_specs=[
            pl.BlockSpec((None, tho, 2, Wop, kC), lambda n, i: (n, i, 0, 0, 0)),
            pl.BlockSpec((2, kC, Cout), lambda n, i: (0, 0, 0)),
            pl.BlockSpec((1, Cout), lambda n, i: (0, 0)),
        ],
        out_specs=pl.BlockSpec((None, tho, Wop, Cout), lambda n, i: (n, i, 0, 0)),
        compiler_params=pltpu.CompilerParams(
            dimension_semantics=("parallel", "parallel"),
            vmem_limit_bytes=_vmem_limit(block_bytes, clamp),
        ),
    )(x5, w, b.reshape(1, Cout))
    if Wop != Wo:
        y = y[:, :, :Wo, :]
    return y


# ----------------------------------------------------------------------------
# Synthetic backbone parameters (128/256-channel, lane-dense; bf16 weights)
# ----------------------------------------------------------------------------
_C, _C4 = 128, 256
NUM_CHANNELS = _C4                      # self.num_channels analogue


def init_params(key):
    def conv_w(k, shape, fan_in):
        return (jax.random.normal(k, shape, jnp.float32)
                / jnp.sqrt(fan_in)).astype(jnp.bfloat16)

    ks = jax.random.split(key, 12)
    p = {}
    p["stem1_w"] = conv_w(ks[0], (12, _C), 12)                 # (ey*6+ex*3+c, C)
    p["stem1_b"] = 0.01 * jax.random.normal(ks[1], (_C,), jnp.float32)
    p["stem2_w"] = conv_w(ks[2], (4, _C, _C), 4 * _C)          # (dy*2+dx, C, C)
    p["stem2_b"] = 0.01 * jax.random.normal(ks[3], (_C,), jnp.float32)
    p["layer1_w"] = conv_w(ks[4], (_C, _C), _C)                # 1x1 conv
    p["layer1_b"] = 0.01 * jax.random.normal(ks[5], (_C,), jnp.float32)
    p["layer2_w"] = conv_w(ks[6], (2, 2 * _C, _C), 4 * _C)     # (dy, dx*C+c, Cout)
    p["layer2_b"] = 0.01 * jax.random.normal(ks[7], (_C,), jnp.float32)
    p["layer3_w"] = conv_w(ks[8], (2, 2 * _C, _C), 4 * _C)
    p["layer3_b"] = 0.01 * jax.random.normal(ks[9], (_C,), jnp.float32)
    p["layer4_w"] = conv_w(ks[10], (2, 2 * _C, _C4), 4 * _C)
    p["layer4_b"] = 0.01 * jax.random.normal(ks[11], (_C4,), jnp.float32)
    return p


# ----------------------------------------------------------------------------
# BackboneBase.forward equivalent
# ----------------------------------------------------------------------------
@functools.partial(jax.jit, static_argnames=("return_interm_layers",))
def backbone_base_forward(images_nchw, mask_bool, params, return_interm_layers=True):
    """Equivalent of BackboneBase.forward(NestedTensor(images, mask)).

    Returns dict[name] -> (features NHWC, mask bool at feature resolution).
    Features are NHWC (TPU lane-dense); f1/f2/f3 are carried and returned in
    bf16 per the perf review (HBM-bound chain), f4 is f32."""
    # Single boundary NCHW->NHWC transpose; everything downstream stays NHWC.
    x = jnp.transpose(images_nchw, (0, 2, 3, 1))

    # Fused stem1+stem2+layer1: the stride-2 stem activation never hits HBM.
    f1 = stem_layer1_fused(x, params)                                   # stride 4, bf16
    f2 = conv2d_s2_bias_relu(f1, params["layer2_w"], params["layer2_b"], jnp.bfloat16)
    f3 = conv2d_s2_bias_relu(f2, params["layer3_w"], params["layer3_b"], jnp.bfloat16)
    f4 = conv2d_s2_bias_relu(f3, params["layer4_w"], params["layer4_b"], jnp.float32)
    feats = {"layer1": f1, "layer2": f2, "layer3": f3, "layer4": f4}

    if return_interm_layers:
        return_layers = {"layer1": "0", "layer2": "1", "layer3": "2", "layer4": "3"}
    else:
        return_layers = {"layer4": "0"}

    H, W = mask_bool.shape[1], mask_bool.shape[2]
    out = {}
    for lname, oname in return_layers.items():
        f = feats[lname]
        Hf, Wf = f.shape[1], f.shape[2]
        # F.interpolate(m[None].float(), size=(Hf,Wf), mode='nearest').bool()[0]
        # == floor-index gather (exact PyTorch 'nearest' indices); trivially
        # memory-bound integer-factor gather kept as XLA glue per perf review.
        ridx = (jnp.arange(Hf) * H) // Hf
        cidx = (jnp.arange(Wf) * W) // Wf
        m = mask_bool[:, ridx][:, :, cidx]
        out[oname] = (f, m)                                # NestedTensor(x, mask)
    return out


# ----------------------------------------------------------------------------
# Pure-JAX f32 reference (tolerance check per perf-review correctness concern)
# ----------------------------------------------------------------------------
def reference_features(images_nhwc, params):
    def conv(x, w_hwio, b, stride):
        y = jax.lax.conv_general_dilated(
            x, w_hwio, window_strides=(stride, stride), padding="VALID",
            dimension_numbers=("NHWC", "HWIO", "NHWC"))
        return jax.nn.relu(y + b)

    f32 = lambda a: a.astype(jnp.float32)
    # Match the kernel path's (exact) bf16 rounding of the input image.
    x = images_nhwc.astype(jnp.bfloat16).astype(jnp.float32)
    h = conv(x, f32(params["stem1_w"]).reshape(2, 2, 3, _C), params["stem1_b"], 2)
    h = conv(h, f32(params["stem2_w"]).reshape(2, 2, _C, _C), params["stem2_b"], 2)
    f1 = conv(h, f32(params["layer1_w"]).reshape(1, 1, _C, _C), params["layer1_b"], 1)
    f2 = conv(f1, f32(params["layer2_w"]).reshape(2, 2, _C, _C), params["layer2_b"], 2)
    f3 = conv(f2, f32(params["layer3_w"]).reshape(2, 2, _C, _C), params["layer3_b"], 2)
    f4 = conv(f3, f32(params["layer4_w"]).reshape(2, 2, _C, _C4), params["layer4_b"], 2)
    return {"layer1": f1, "layer2": f2, "layer3": f3, "layer4": f4}


# ----------------------------------------------------------------------------
# Demo / smoke test
# ----------------------------------------------------------------------------
if __name__ == "__main__":
    key = jax.random.PRNGKey(0)
    k_img, k_params = jax.random.split(key, 2)

    N, C, H, W = 2, 3, 64, 64
    images = jax.random.normal(k_img, (N, C, H, W), jnp.float32)

    # NestedTensor-style mask: True == padded pixel (deterministic padding pattern)
    hh = jnp.arange(H)[None, :, None]
    ww = jnp.arange(W)[None, None, :]
    valid_h = jnp.array([64, 48])[:, None, None]
    valid_w = jnp.array([64, 40])[:, None, None]
    mask = (hh >= valid_h) | (ww >= valid_w)               # (N, H, W) bool

    params = init_params(k_params)

    out = backbone_base_forward(images, mask, params, return_interm_layers=True)
    jax.block_until_ready(out)

    # stride-4/8/16/32 pyramid: shapes / dtypes
    expected = {"0": (128, 16, jnp.bfloat16), "1": (128, 8, jnp.bfloat16),
                "2": (128, 4, jnp.bfloat16), "3": (256, 2, jnp.float32)}
    for name, (cexp, sexp, dt) in expected.items():
        feat, m = out[name]
        assert feat.shape == (N, sexp, sexp, cexp), feat.shape
        assert feat.dtype == dt, feat.dtype
        assert m.shape == (N, sexp, sexp) and m.dtype == jnp.bool_, (m.shape, m.dtype)

    # Numeric check against a pure-JAX f32 reference (tolerance covers bf16 drift).
    ref = reference_features(jnp.transpose(images, (0, 2, 3, 1)), params)
    for oname, lname in [("0", "layer1"), ("1", "layer2"),
                         ("2", "layer3"), ("3", "layer4")]:
        got = out[oname][0].astype(jnp.float32)
        exp = ref[lname]
        denom = float(jnp.max(jnp.abs(exp))) + 1e-6
        err = float(jnp.max(jnp.abs(got - exp))) / denom
        assert err < 0.1, (lname, err)

    print("KERNEL_OK")
</pallas_src>

<mosaic_0001>
module attributes {stable_mosaic.version = 11 : i64} {
  func.func @_stem_fused_kernel(%arg0: i32, %arg1: i32, %arg2: memref<1x16x2x2x16x12xbf16, #tpu.memory_space<vmem>>, %arg3: memref<12x128xbf16, #tpu.memory_space<vmem>>, %arg4: memref<1x128xf32, #tpu.memory_space<vmem>>, %arg5: memref<4x128x128xbf16, #tpu.memory_space<vmem>>, %arg6: memref<1x128xf32, #tpu.memory_space<vmem>>, %arg7: memref<128x128xbf16, #tpu.memory_space<vmem>>, %arg8: memref<1x128xf32, #tpu.memory_space<vmem>>, %arg9: memref<1x16x16x128xbf16, #tpu.memory_space<vmem>>) attributes {dimension_semantics = [#tpu.dimension_semantics<parallel>, #tpu.dimension_semantics<parallel>], iteration_bounds = array<i64: 2, 1>, scalar_prefetch = 0 : i64, scratch_operands = 0 : i64, tpu.core_type = #tpu.core_type<tc>, window_params = [{transform_indices = @transform_0, window_bounds = array<i64: 1, 16, 2, 2, 16, 12>}, {pipeline_mode = #tpu.pipeline_mode<synchronous>, transform_indices = @transform_1, window_bounds = array<i64: 12, 128>}, {pipeline_mode = #tpu.pipeline_mode<synchronous>, transform_indices = @transform_2, window_bounds = array<i64: 1, 128>}, {pipeline_mode = #tpu.pipeline_mode<synchronous>, transform_indices = @transform_3, window_bounds = array<i64: 4, 128, 128>}, {pipeline_mode = #tpu.pipeline_mode<synchronous>, transform_indices = @transform_4, window_bounds = array<i64: 1, 128>}, {pipeline_mode = #tpu.pipeline_mode<synchronous>, transform_indices = @transform_5, window_bounds = array<i64: 128, 128>}, {pipeline_mode = #tpu.pipeline_mode<synchronous>, transform_indices = @transform_6, window_bounds = array<i64: 1, 128>}, {transform_indices = @transform_7, window_bounds = array<i64: 1, 16, 16, 128>}]} {
    %c0 = arith.constant 0 : index
    %c0_0 = arith.constant 0 : index
    %c0_1 = arith.constant 0 : index
    %c0_2 = arith.constant 0 : index
    %c0_3 = arith.constant 0 : index
    %c0_4 = arith.constant 0 : index
    %0 = vector.load %arg2[%c0, %c0_0, %c0_1, %c0_2, %c0_3, %c0_4] : memref<1x16x2x2x16x12xbf16, #tpu.memory_space<vmem>>, vector<1x16x1x1x16x12xbf16>
    %1 = vector.shape_cast %0 : vector<1x16x1x1x16x12xbf16> to vector<16x16x12xbf16>
    %2 = vector.shape_cast %1 : vector<16x16x12xbf16> to vector<256x12xbf16>
    %c0_5 = arith.constant 0 : index
    %c0_6 = arith.constant 0 : index
    %3 = vector.load %arg3[%c0_5, %c0_6] : memref<12x128xbf16, #tpu.memory_space<vmem>>, vector<12x128xbf16>
    %cst = arith.constant dense<0.000000e+00> : vector<256x128xf32>
    %4 = tpu.matmul %2, %3, %cst {dimension_numbers = #tpu.dot_dimension_numbers<[1], [0], [0], [1], [0, 0, 1, 1], [], []>} : vector<256x12xbf16>, vector<12x128xbf16>, vector<256x128xf32> -> vector<256x128xf32>
    %c0_7 = arith.constant 0 : index
    %c0_8 = arith.constant 0 : index
    %5 = vector.load %arg4[%c0_7, %c0_8] : memref<1x128xf32, #tpu.memory_space<vmem>>, vector<1x128xf32>
    %6 = vector.broadcast %5 : vector<1x128xf32> to vector<256x128xf32>
    %7 = arith.addf %4, %6 : vector<256x128xf32>
    %cst_9 = arith.constant 0.000000e+00 : f32
    %8 = vector.broadcast %cst_9 : f32 to vector<256x128xf32>
    %9 = arith.maximumf %7, %8 : vector<256x128xf32>
    %10 = arith.truncf %9 : vector<256x128xf32> to vector<256x128xbf16>
    %c0_10 = arith.constant 0 : index
    %c0_11 = arith.constant 0 : index
    %c0_12 = arith.constant 0 : index
    %11 = vector.load %arg5[%c0_10, %c0_11, %c0_12] : memref<4x128x128xbf16, #tpu.memory_space<vmem>>, vector<1x128x128xbf16>
    %12 = vector.shape_cast %11 : vector<1x128x128xbf16> to vector<128x128xbf16>
    %cst_13 = arith.constant dense<0.000000e+00> : vector<256x128xf32>
    %13 = tpu.matmul %10, %12, %cst_13 {dimension_numbers = #tpu.dot_dimension_numbers<[1], [0], [0], [1], [0, 0, 1, 1], [], []>} : vector<256x128xbf16>, vector<128x128xbf16>, vector<256x128xf32> -> vector<256x128xf32>
    %c0_14 = arith.constant 0 : index
    %c0_15 = arith.constant 0 : index
    %c0_16 = arith.constant 0 : index
    %c1 = arith.constant 1 : index
    %c0_17 = arith.constant 0 : index
    %c0_18 = arith.constant 0 : index
    %14 = vector.load %arg2[%c0_14, %c0_15, %c0_16, %c1, %c0_17, %c0_18] : memref<1x16x2x2x16x12xbf16, #tpu.memory_space<vmem>>, vector<1x16x1x1x16x12xbf16>
    %15 = vector.shape_cast %14 : vector<1x16x1x1x16x12xbf16> to vector<16x16x12xbf16>
    %16 = vector.shape_cast %15 : vector<16x16x12xbf16> to vector<256x12xbf16>
    %c0_19 = arith.constant 0 : index
    %c0_20 = arith.constant 0 : index
    %17 = vector.load %arg3[%c0_19, %c0_20] : memref<12x128xbf16, #tpu.memory_space<vmem>>, vector<12x128xbf16>
    %cst_21 = arith.constant dense<0.000000e+00> : vector<256x128xf32>
    %18 = tpu.matmul %16, %17, %cst_21 {dimension_numbers = #tpu.dot_dimension_numbers<[1], [0], [0], [1], [0, 0, 1, 1], [], []>} : vector<256x12xbf16>, vector<12x128xbf16>, vector<256x128xf32> -> vector<256x128xf32>
    %c0_22 = arith.constant 0 : index
    %c0_23 = arith.constant 0 : index
    %19 = vector.load %arg4[%c0_22, %c0_23] : memref<1x128xf32, #tpu.memory_space<vmem>>, vector<1x128xf32>
    %20 = vector.broadcast %19 : vector<1x128xf32> to vector<256x128xf32>
    %21 = arith.addf %18, %20 : vector<256x128xf32>
    %cst_24 = arith.constant 0.000000e+00 : f32
    %22 = vector.broadcast %cst_24 : f32 to vector<256x128xf32>
    %23 = arith.maximumf %21, %22 : vector<256x128xf32>
    %24 = arith.truncf %23 : vector<256x128xf32> to vector<256x128xbf16>
    %c1_25 = arith.constant 1 : index
    %c0_26 = arith.constant 0 : index
    %c0_27 = arith.constant 0 : index
    %25 = vector.load %arg5[%c1_25, %c0_26, %c0_27] : memref<4x128x128xbf16, #tpu.memory_space<vmem>>, vector<1x128x128xbf16>
    %26 = vector.shape_cast %25 : vector<1x128x128xbf16> to vector<128x128xbf16>
    %cst_28 = arith.constant dense<0.000000e+00> : vector<256x128xf32>
    %27 = tpu.matmul %24, %26, %cst_28 {dimension_numbers = #tpu.dot_dimension_numbers<[1], [0], [0], [1], [0, 0, 1, 1], [], []>} : vector<256x128xbf16>, vector<128x128xbf16>, vector<256x128xf32> -> vector<256x128xf32>
    %28 = arith.addf %13, %27 : vector<256x128xf32>
    %c0_29 = arith.constant 0 : index
    %c0_30 = arith.constant 0 : index
    %c1_31 = arith.constant 1 : index
    %c0_32 = arith.constant 0 : index
    %c0_33 = arith.constant 0 : index
    %c0_34 = arith.constant 0 : index
    %29 = vector.load %arg2[%c0_29, %c0_30, %c1_31, %c0_32, %c0_33, %c0_34] : memref<1x16x2x2x16x12xbf16, #tpu.memory_space<vmem>>, vector<1x16x1x1x16x12xbf16>
    %30 = vector.shape_cast %29 : vector<1x16x1x1x16x12xbf16> to vector<16x16x12xbf16>
    %31 = vector.shape_cast %30 : vector<16x16x12xbf16> to vector<256x12xbf16>
    %c0_35 = arith.constant 0 : index
    %c0_36 = arith.constant 0 : index
    %32 = vector.load %arg3[%c0_35, %c0_36] : memref<12x128xbf16, #tpu.memory_space<vmem>>, vector<12x128xbf16>
    %cst_37 = arith.constant dense<0.000000e+00> : vector<256x128xf32>
    %33 = tpu.matmul %31, %32, %cst_37 {dimension_numbers = #tpu.dot_dimension_numbers<[1], [0], [0], [1], [0, 0, 1, 1], [], []>} : vector<256x12xbf16>, vector<12x128xbf16>, vector<256x128xf32> -> vector<256x128xf32>
    %c0_38 = arith.constant 0 : index
    %c0_39 = arith.constant 0 : index
    %34 = vector.load %arg4[%c0_38, %c0_39] : memref<1x128xf32, #tpu.memory_space<vmem>>, vector<1x128xf32>
    %35 = vector.broadcast %34 : vector<1x128xf32> to vector<256x128xf32>
    %36 = arith.addf %33, %35 : vector<256x128xf32>
    %cst_40 = arith.constant 0.000000e+00 : f32
    %37 = vector.broadcast %cst_40 : f32 to vector<256x128xf32>
    %38 = arith.maximumf %36, %37 : vector<256x128xf32>
    %39 = arith.truncf %38 : vector<256x128xf32> to vector<256x128xbf16>
    %c2 = arith.constant 2 : index
    %c0_41 = arith.constant 0 : index
    %c0_42 = arith.constant 0 : index
    %40 = vector.load %arg5[%c2, %c0_41, %c0_42] : memref<4x128x128xbf16, #tpu.memory_space<vmem>>, vector<1x128x128xbf16>
    %41 = vector.shape_cast %40 : vector<1x128x128xbf16> to vector<128x128xbf16>
    %cst_43 = arith.constant dense<0.000000e+00> : vector<256x128xf32>
    %42 = tpu.matmul %39, %41, %cst_43 {dimension_numbers = #tpu.dot_dimension_numbers<[1], [0], [0], [1], [0, 0, 1, 1], [], []>} : vector<256x128xbf16>, vector<128x128xbf16>, vector<256x128xf32> -> vector<256x128xf32>
    %43 = arith.addf %28, %42 : vector<256x128xf32>
    %c0_44 = arith.constant 0 : index
    %c0_45 = arith.constant 0 : index
    %c1_46 = arith.constant 1 : index
    %c1_47 = arith.constant 1 : index
    %c0_48 = arith.constant 0 : index
    %c0_49 = arith.constant 0 : index
    %44 = vector.load %arg2[%c0_44, %c0_45, %c1_46, %c1_47, %c0_48, %c0_49] : memref<1x16x2x2x16x12xbf16, #tpu.memory_space<vmem>>, vector<1x16x1x1x16x12xbf16>
    %45 = vector.shape_cast %44 : vector<1x16x1x1x16x12xbf16> to vector<16x16x12xbf16>
    %46 = vector.shape_cast %45 : vector<16x16x12xbf16> to vector<256x12xbf16>
    %c0_50 = arith.constant 0 : index
    %c0_51 = arith.constant 0 : index
    %47 = vector.load %arg3[%c0_50, %c0_51] : memref<12x128xbf16, #tpu.memory_space<vmem>>, vector<12x128xbf16>
    %cst_52 = arith.constant dense<0.000000e+00> : vector<256x128xf32>
    %48 = tpu.matmul %46, %47, %cst_52 {dimension_numbers = #tpu.dot_dimension_numbers<[1], [0], [0], [1], [0, 0, 1, 1], [], []>} : vector<256x12xbf16>, vector<12x128xbf16>, vector<256x128xf32> -> vector<256x128xf32>
    %c0_53 = arith.constant 0 : index
    %c0_54 = arith.constant 0 : index
    %49 = vector.load %arg4[%c0_53, %c0_54] : memref<1x128xf32, #tpu.memory_space<vmem>>, vector<1x128xf32>
    %50 = vector.broadcast %49 : vector<1x128xf32> to vector<256x128xf32>
    %51 = arith.addf %48, %50 : vector<256x128xf32>
    %cst_55 = arith.constant 0.000000e+00 : f32
    %52 = vector.broadcast %cst_55 : f32 to vector<256x128xf32>
    %53 = arith.maximumf %51, %52 : vector<256x128xf32>
    %54 = arith.truncf %53 : vector<256x128xf32> to vector<256x128xbf16>
    %c3 = arith.constant 3 : index
    %c0_56 = arith.constant 0 : index
    %c0_57 = arith.constant 0 : index
    %55 = vector.load %arg5[%c3, %c0_56, %c0_57] : memref<4x128x128xbf16, #tpu.memory_space<vmem>>, vector<1x128x128xbf16>
    %56 = vector.shape_cast %55 : vector<1x128x128xbf16> to vector<128x128xbf16>
    %cst_58 = arith.constant dense<0.000000e+00> : vector<256x128xf32>
    %57 = tpu.matmul %54, %56, %cst_58 {dimension_numbers = #tpu.dot_dimension_numbers<[1], [0], [0], [1], [0, 0, 1, 1], [], []>} : vector<256x128xbf16>, vector<128x128xbf16>, vector<256x128xf32> -> vector<256x128xf32>
    %58 = arith.addf %43, %57 : vector<256x128xf32>
    %c0_59 = arith.constant 0 : index
    %c0_60 = arith.constant 0 : index
    %59 = vector.load %arg6[%c0_59, %c0_60] : memref<1x128xf32, #tpu.memory_space<vmem>>, vector<1x128xf32>
    %60 = vector.broadcast %59 : vector<1x128xf32> to vector<256x128xf32>
    %61 = arith.addf %58, %60 : vector<256x128xf32>
    %cst_61 = arith.constant 0.000000e+00 : f32
    %62 = vector.broadcast %cst_61 : f32 to vector<256x128xf32>
    %63 = arith.maximumf %61, %62 : vector<256x128xf32>
    %64 = arith.truncf %63 : vector<256x128xf32> to vector<256x128xbf16>
    %c0_62 = arith.constant 0 : index
    %c0_63 = arith.constant 0 : index
    %65 = vector.load %arg7[%c0_62, %c0_63] : memref<128x128xbf16, #tpu.memory_space<vmem>>, vector<128x128xbf16>
    %cst_64 = arith.constant dense<0.000000e+00> : vector<256x128xf32>
    %66 = tpu.matmul %64, %65, %cst_64 {dimension_numbers = #tpu.dot_dimension_numbers<[1], [0], [0], [1], [0, 0, 1, 1], [], []>} : vector<256x128xbf16>, vector<128x128xbf16>, vector<256x128xf32> -> vector<256x128xf32>
    %c0_65 = arith.constant 0 : index
    %c0_66 = arith.constant 0 : index
    %67 = vector.load %arg8[%c0_65, %c0_66] : memref<1x128xf32, #tpu.memory_space<vmem>>, vector<1x128xf32>
    %68 = vector.broadcast %67 : vector<1x128xf32> to vector<256x128xf32>
    %69 = arith.addf %66, %68 : vector<256x128xf32>
    %cst_67 = arith.constant 0.000000e+00 : f32
    %70 = vector.broadcast %cst_67 : f32 to vector<256x128xf32>
    %71 = arith.maximumf %69, %70 : vector<256x128xf32>
    %72 = vector.shape_cast %71 : vector<256x128xf32> to vector<16x16x128xf32>
    %73 = arith.truncf %72 : vector<16x16x128xf32> to vector<16x16x128xbf16>
    %c0_68 = arith.constant 0 : index
    %c0_69 = arith.constant 0 : index
    %c0_70 = arith.constant 0 : index
    %c0_71 = arith.constant 0 : index
    %74 = vector.load %arg9[%c0_68, %c0_69, %c0_70, %c0_71] : memref<1x16x16x128xbf16, #tpu.memory_space<vmem>>, vector<1x16x16x128xbf16>
    %75 = vector.shape_cast %74 : vector<1x16x16x128xbf16> to vector<16x16x128xbf16>
    %76 = vector.shape_cast %73 : vector<16x16x128xbf16> to vector<1x16x16x128xbf16>
    tpu.vector_store %arg9[%c0_68, %c0_69, %c0_70, %c0_71], %76 {strides = array<i32>} : memref<1x16x16x128xbf16, #tpu.memory_space<vmem>>, vector<1x16x16x128xbf16>,
    return
  }
  func.func @transform_0(%arg0: i32, %arg1: i32) -> (i32, i32, i32, i32, i32, i32) {
    %c0_i32 = arith.constant 0 : i32
    %c0_i32_0 = arith.constant 0 : i32
    %c0_i32_1 = arith.constant 0 : i32
    %c0_i32_2 = arith.constant 0 : i32
    %c0_i32_3 = arith.constant 0 : i32
    return %arg0, %arg1, %c0_i32, %c0_i32_0, %c0_i32_1, %c0_i32_2 : i32, i32, i32, i32, i32, i32
  }
  func.func @transform_1(%arg0: i32, %arg1: i32) -> (i32, i32) {
    %c0_i32 = arith.constant 0 : i32
    %c0_i32_0 = arith.constant 0 : i32
    %c0_i32_1 = arith.constant 0 : i32
    return %c0_i32, %c0_i32_0 : i32, i32
  }
  func.func @transform_2(%arg0: i32, %arg1: i32) -> (i32, i32) {
    %c0_i32 = arith.constant 0 : i32
    %c0_i32_0 = arith.constant 0 : i32
    %c0_i32_1 = arith.constant 0 : i32
    return %c0_i32, %c0_i32_0 : i32, i32
  }
  func.func @transform_3(%arg0: i32, %arg1: i32) -> (i32, i32, i32) {
    %c0_i32 = arith.constant 0 : i32
    %c0_i32_0 = arith.constant 0 : i32
    %c0_i32_1 = arith.constant 0 : i32
    %c0_i32_2 = arith.constant 0 : i32
    return %c0_i32, %c0_i32_0, %c0_i32_1 : i32, i32, i32
  }
  func.func @transform_4(%arg0: i32, %arg1: i32) -> (i32, i32) {
    %c0_i32 = arith.constant 0 : i32
    %c0_i32_0 = arith.constant 0 : i32
    %c0_i32_1 = arith.constant 0 : i32
    return %c0_i32, %c0_i32_0 : i32, i32
  }
  func.func @transform_5(%arg0: i32, %arg1: i32) -> (i32, i32) {
    %c0_i32 = arith.constant 0 : i32
    %c0_i32_0 = arith.constant 0 : i32
    %c0_i32_1 = arith.constant 0 : i32
    return %c0_i32, %c0_i32_0 : i32, i32
  }
  func.func @transform_6(%arg0: i32, %arg1: i32) -> (i32, i32) {
    %c0_i32 = arith.constant 0 : i32
    %c0_i32_0 = arith.constant 0 : i32
    %c0_i32_1 = arith.constant 0 : i32
    return %c0_i32, %c0_i32_0 : i32, i32
  }
  func.func @transform_7(%arg0: i32, %arg1: i32) -> (i32, i32, i32, i32) {
    %c0_i32 = arith.constant 0 : i32
    %c0_i32_0 = arith.constant 0 : i32
    %c0_i32_1 = arith.constant 0 : i32
    return %arg0, %arg1, %c0_i32, %c0_i32_0 : i32, i32, i32, i32
  }
}

module attributes {stable_mosaic.version = 11 : i64} {
  func.func @_conv_tap_kernel(%arg0: i32, %arg1: i32, %arg2: memref<1x8x2x8x256xbf16, #tpu.memory_space<vmem>>, %arg3: memref<2x256x128xbf16, #tpu.memory_space<vmem>>, %arg4: memref<1x128xf32, #tpu.memory_space<vmem>>, %arg5: memref<1x8x8x128xbf16, #tpu.memory_space<vmem>>) attributes {dimension_semantics = [#tpu.dimension_semantics<parallel>, #tpu.dimension_semantics<parallel>], iteration_bounds = array<i64: 2, 1>, scalar_prefetch = 0 : i64, scratch_operands = 0 : i64, tpu.core_type = #tpu.core_type<tc>, window_params = [{transform_indices = @transform_0, window_bounds = array<i64: 1, 8, 2, 8, 256>}, {pipeline_mode = #tpu.pipeline_mode<synchronous>, transform_indices = @transform_1, window_bounds = array<i64: 2, 256, 128>}, {pipeline_mode = #tpu.pipeline_mode<synchronous>, transform_indices = @transform_2, window_bounds = array<i64: 1, 128>}, {transform_indices = @transform_3, window_bounds = array<i64: 1, 8, 8, 128>}]} {
    %c0 = arith.constant 0 : index
    %c0_0 = arith.constant 0 : index
    %c0_1 = arith.constant 0 : index
    %c0_2 = arith.constant 0 : index
    %c0_3 = arith.constant 0 : index
    %0 = vector.load %arg2[%c0, %c0_0, %c0_1, %c0_2, %c0_3] : memref<1x8x2x8x256xbf16, #tpu.memory_space<vmem>>, vector<1x8x1x8x256xbf16>
    %1 = vector.shape_cast %0 : vector<1x8x1x8x256xbf16> to vector<8x8x256xbf16>
    %2 = vector.shape_cast %1 : vector<8x8x256xbf16> to vector<64x256xbf16>
    %c0_4 = arith.constant 0 : index
    %c0_5 = arith.constant 0 : index
    %c0_6 = arith.constant 0 : index
    %3 = vector.load %arg3[%c0_4, %c0_5, %c0_6] : memref<2x256x128xbf16, #tpu.memory_space<vmem>>, vector<1x256x128xbf16>
    %4 = vector.shape_cast %3 : vector<1x256x128xbf16> to vector<256x128xbf16>
    %cst = arith.constant dense<0.000000e+00> : vector<64x128xf32>
    %5 = tpu.matmul %2, %4, %cst {dimension_numbers = #tpu.dot_dimension_numbers<[1], [0], [0], [1], [0, 0, 1, 1], [], []>} : vector<64x256xbf16>, vector<256x128xbf16>, vector<64x128xf32> -> vector<64x128xf32>
    %c0_7 = arith.constant 0 : index
    %c0_8 = arith.constant 0 : index
    %c1 = arith.constant 1 : index
    %c0_9 = arith.constant 0 : index
    %c0_10 = arith.constant 0 : index
    %6 = vector.load %arg2[%c0_7, %c0_8, %c1, %c0_9, %c0_10] : memref<1x8x2x8x256xbf16, #tpu.memory_space<vmem>>, vector<1x8x1x8x256xbf16>
    %7 = vector.shape_cast %6 : vector<1x8x1x8x256xbf16> to vector<8x8x256xbf16>
    %8 = vector.shape_cast %7 : vector<8x8x256xbf16> to vector<64x256xbf16>
    %c1_11 = arith.constant 1 : index
    %c0_12 = arith.constant 0 : index
    %c0_13 = arith.constant 0 : index
    %9 = vector.load %arg3[%c1_11, %c0_12, %c0_13] : memref<2x256x128xbf16, #tpu.memory_space<vmem>>, vector<1x256x128xbf16>
    %10 = vector.shape_cast %9 : vector<1x256x128xbf16> to vector<256x128xbf16>
    %cst_14 = arith.constant dense<0.000000e+00> : vector<64x128xf32>
    %11 = tpu.matmul %8, %10, %cst_14 {dimension_numbers = #tpu.dot_dimension_numbers<[1], [0], [0], [1], [0, 0, 1, 1], [], []>} : vector<64x256xbf16>, vector<256x128xbf16>, vector<64x128xf32> -> vector<64x128xf32>
    %12 = arith.addf %5, %11 : vector<64x128xf32>
    %c0_15 = arith.constant 0 : index
    %c0_16 = arith.constant 0 : index
    %13 = vector.load %arg4[%c0_15, %c0_16] : memref<1x128xf32, #tpu.memory_space<vmem>>, vector<1x128xf32>
    %14 = vector.broadcast %13 : vector<1x128xf32> to vector<64x128xf32>
    %15 = arith.addf %12, %14 : vector<64x128xf32>
    %cst_17 = arith.constant 0.000000e+00 : f32
    %16 = vector.broadcast %cst_17 : f32 to vector<64x128xf32>
    %17 = arith.maximumf %15, %16 : vector<64x128xf32>
    %18 = vector.shape_cast %17 : vector<64x128xf32> to vector<8x8x128xf32>
    %19 = arith.truncf %18 : vector<8x8x128xf32> to vector<8x8x128xbf16>
    %c0_18 = arith.constant 0 : index
    %c0_19 = arith.constant 0 : index
    %c0_20 = arith.constant 0 : index
    %c0_21 = arith.constant 0 : index
    %20 = vector.load %arg5[%c0_18, %c0_19, %c0_20, %c0_21] : memref<1x8x8x128xbf16, #tpu.memory_space<vmem>>, vector<1x8x8x128xbf16>
    %21 = vector.shape_cast %20 : vector<1x8x8x128xbf16> to vector<8x8x128xbf16>
    %22 = vector.shape_cast %19 : vector<8x8x128xbf16> to vector<1x8x8x128xbf16>
    tpu.vector_store %arg5[%c0_18, %c0_19, %c0_20, %c0_21], %22 {strides = array<i32>} : memref<1x8x8x128xbf16, #tpu.memory_space<vmem>>, vector<1x8x8x128xbf16>,
    return
  }
  func.func @transform_0(%arg0: i32, %arg1: i32) -> (i32, i32, i32, i32, i32) {
    %c0_i32 = arith.constant 0 : i32
    %c0_i32_0 = arith.constant 0 : i32
    %c0_i32_1 = arith.constant 0 : i32
    %c0_i32_2 = arith.constant 0 : i32
    return %arg0, %arg1, %c0_i32, %c0_i32_0, %c0_i32_1 : i32, i32, i32, i32, i32
  }
  func.func @transform_1(%arg0: i32, %arg1: i32) -> (i32, i32, i32) {
    %c0_i32 = arith.constant 0 : i32
    %c0_i32_0 = arith.constant 0 : i32
    %c0_i32_1 = arith.constant 0 : i32
    %c0_i32_2 = arith.constant 0 : i32
    return %c0_i32, %c0_i32_0, %c0_i32_1 : i32, i32, i32
  }
  func.func @transform_2(%arg0: i32, %arg1: i32) -> (i32, i32) {
    %c0_i32 = arith.constant 0 : i32
    %c0_i32_0 = arith.constant 0 : i32
    %c0_i32_1 = arith.constant 0 : i32
    return %c0_i32, %c0_i32_0 : i32, i32
  }
  func.func @transform_3(%arg0: i32, %arg1: i32) -> (i32, i32, i32, i32) {
    %c0_i32 = arith.constant 0 : i32
    %c0_i32_0 = arith.constant 0 : i32
    %c0_i32_1 = arith.constant 0 : i32
    return %arg0, %arg1, %c0_i32, %c0_i32_0 : i32, i32, i32, i32
  }
}

module attributes {stable_mosaic.version = 11 : i64} {
  func.func @_conv_tap_kernel(%arg0: i32, %arg1: i32, %arg2: memref<1x4x2x8x256xbf16, #tpu.memory_space<vmem>>, %arg3: memref<2x256x128xbf16, #tpu.memory_space<vmem>>, %arg4: memref<1x128xf32, #tpu.memory_space<vmem>>, %arg5: memref<1x4x8x128xbf16, #tpu.memory_space<vmem>>) attributes {dimension_semantics = [#tpu.dimension_semantics<parallel>, #tpu.dimension_semantics<parallel>], iteration_bounds = array<i64: 2, 1>, scalar_prefetch = 0 : i64, scratch_operands = 0 : i64, tpu.core_type = #tpu.core_type<tc>, window_params = [{transform_indices = @transform_0, window_bounds = array<i64: 1, 4, 2, 8, 256>}, {pipeline_mode = #tpu.pipeline_mode<synchronous>, transform_indices = @transform_1, window_bounds = array<i64: 2, 256, 128>}, {pipeline_mode = #tpu.pipeline_mode<synchronous>, transform_indices = @transform_2, window_bounds = array<i64: 1, 128>}, {transform_indices = @transform_3, window_bounds = array<i64: 1, 4, 8, 128>}]} {
    %c0 = arith.constant 0 : index
    %c0_0 = arith.constant 0 : index
    %c0_1 = arith.constant 0 : index
    %c0_2 = arith.constant 0 : index
    %c0_3 = arith.constant 0 : index
    %0 = vector.load %arg2[%c0, %c0_0, %c0_1, %c0_2, %c0_3] : memref<1x4x2x8x256xbf16, #tpu.memory_space<vmem>>, vector<1x4x1x8x256xbf16>
    %1 = vector.shape_cast %0 : vector<1x4x1x8x256xbf16> to vector<4x8x256xbf16>
    %2 = vector.shape_cast %1 : vector<4x8x256xbf16> to vector<32x256xbf16>
    %c0_4 = arith.constant 0 : index
    %c0_5 = arith.constant 0 : index
    %c0_6 = arith.constant 0 : index
    %3 = vector.load %arg3[%c0_4, %c0_5, %c0_6] : memref<2x256x128xbf16, #tpu.memory_space<vmem>>, vector<1x256x128xbf16>
    %4 = vector.shape_cast %3 : vector<1x256x128xbf16> to vector<256x128xbf16>
    %cst = arith.constant dense<0.000000e+00> : vector<32x128xf32>
    %5 = tpu.matmul %2, %4, %cst {dimension_numbers = #tpu.dot_dimension_numbers<[1], [0], [0], [1], [0, 0, 1, 1], [], []>} : vector<32x256xbf16>, vector<256x128xbf16>, vector<32x128xf32> -> vector<32x128xf32>
    %c0_7 = arith.constant 0 : index
    %c0_8 = arith.constant 0 : index
    %c1 = arith.constant 1 : index
    %c0_9 = arith.constant 0 : index
    %c0_10 = arith.constant 0 : index
    %6 = vector.load %arg2[%c0_7, %c0_8, %c1, %c0_9, %c0_10] : memref<1x4x2x8x256xbf16, #tpu.memory_space<vmem>>, vector<1x4x1x8x256xbf16>
    %7 = vector.shape_cast %6 : vector<1x4x1x8x256xbf16> to vector<4x8x256xbf16>
    %8 = vector.shape_cast %7 : vector<4x8x256xbf16> to vector<32x256xbf16>
    %c1_11 = arith.constant 1 : index
    %c0_12 = arith.constant 0 : index
    %c0_13 = arith.constant 0 : index
    %9 = vector.load %arg3[%c1_11, %c0_12, %c0_13] : memref<2x256x128xbf16, #tpu.memory_space<vmem>>, vector<1x256x128xbf16>
    %10 = vector.shape_cast %9 : vector<1x256x128xbf16> to vector<256x128xbf16>
    %cst_14 = arith.constant dense<0.000000e+00> : vector<32x128xf32>
    %11 = tpu.matmul %8, %10, %cst_14 {dimension_numbers = #tpu.dot_dimension_numbers<[1], [0], [0], [1], [0, 0, 1, 1], [], []>} : vector<32x256xbf16>, vector<256x128xbf16>, vector<32x128xf32> -> vector<32x128xf32>
    %12 = arith.addf %5, %11 : vector<32x128xf32>
    %c0_15 = arith.constant 0 : index
    %c0_16 = arith.constant 0 : index
    %13 = vector.load %arg4[%c0_15, %c0_16] : memref<1x128xf32, #tpu.memory_space<vmem>>, vector<1x128xf32>
    %14 = vector.broadcast %13 : vector<1x128xf32> to vector<32x128xf32>
    %15 = arith.addf %12, %14 : vector<32x128xf32>
    %cst_17 = arith.constant 0.000000e+00 : f32
    %16 = vector.broadcast %cst_17 : f32 to vector<32x128xf32>
    %17 = arith.maximumf %15, %16 : vector<32x128xf32>
    %18 = vector.shape_cast %17 : vector<32x128xf32> to vector<4x8x128xf32>
    %19 = arith.truncf %18 : vector<4x8x128xf32> to vector<4x8x128xbf16>
    %c0_18 = arith.constant 0 : index
    %c0_19 = arith.constant 0 : index
    %c0_20 = arith.constant 0 : index
    %c0_21 = arith.constant 0 : index
    %20 = vector.load %arg5[%c0_18, %c0_19, %c0_20, %c0_21] : memref<1x4x8x128xbf16, #tpu.memory_space<vmem>>, vector<1x4x8x128xbf16>
    %21 = vector.shape_cast %20 : vector<1x4x8x128xbf16> to vector<4x8x128xbf16>
    %22 = vector.shape_cast %19 : vector<4x8x128xbf16> to vector<1x4x8x128xbf16>
    tpu.vector_store %arg5[%c0_18, %c0_19, %c0_20, %c0_21], %22 {strides = array<i32>} : memref<1x4x8x128xbf16, #tpu.memory_space<vmem>>, vector<1x4x8x128xbf16>,
    return
  }
  func.func @transform_0(%arg0: i32, %arg1: i32) -> (i32, i32, i32, i32, i32) {
    %c0_i32 = arith.constant 0 : i32
    %c0_i32_0 = arith.constant 0 : i32
    %c0_i32_1 = arith.constant 0 : i32
    %c0_i32_2 = arith.constant 0 : i32
    return %arg0, %arg1, %c0_i32, %c0_i32_0, %c0_i32_1 : i32, i32, i32, i32, i32
  }
  func.func @transform_1(%arg0: i32, %arg1: i32) -> (i32, i32, i32) {
    %c0_i32 = arith.constant 0 : i32
    %c0_i32_0 = arith.constant 0 : i32
    %c0_i32_1 = arith.constant 0 : i32
    %c0_i32_2 = arith.constant 0 : i32
    return %c0_i32, %c0_i32_0, %c0_i32_1 : i32, i32, i32
  }
  func.func @transform_2(%arg0: i32, %arg1: i32) -> (i32, i32) {
    %c0_i32 = arith.constant 0 : i32
    %c0_i32_0 = arith.constant 0 : i32
    %c0_i32_1 = arith.constant 0 : i32
    return %c0_i32, %c0_i32_0 : i32, i32
  }
  func.func @transform_3(%arg0: i32, %arg1: i32) -> (i32, i32, i32, i32) {
    %c0_i32 = arith.constant 0 : i32
    %c0_i32_0 = arith.constant 0 : i32
    %c0_i32_1 = arith.constant 0 : i32
    return %arg0, %arg1, %c0_i32, %c0_i32_0 : i32, i32, i32, i32
  }
}

module attributes {stable_mosaic.version = 11 : i64} {
  func.func @_conv_tap_kernel(%arg0: i32, %arg1: i32, %arg2: memref<1x2x2x8x256xbf16, #tpu.memory_space<vmem>>, %arg3: memref<2x256x256xbf16, #tpu.memory_space<vmem>>, %arg4: memref<1x256xf32, #tpu.memory_space<vmem>>, %arg5: memref<1x2x8x256xf32, #tpu.memory_space<vmem>>) attributes {dimension_semantics = [#tpu.dimension_semantics<parallel>, #tpu.dimension_semantics<parallel>], iteration_bounds = array<i64: 2, 1>, scalar_prefetch = 0 : i64, scratch_operands = 0 : i64, tpu.core_type = #tpu.core_type<tc>, window_params = [{transform_indices = @transform_0, window_bounds = array<i64: 1, 2, 2, 8, 256>}, {pipeline_mode = #tpu.pipeline_mode<synchronous>, transform_indices = @transform_1, window_bounds = array<i64: 2, 256, 256>}, {pipeline_mode = #tpu.pipeline_mode<synchronous>, transform_indices = @transform_2, window_bounds = array<i64: 1, 256>}, {transform_indices = @transform_3, window_bounds = array<i64: 1, 2, 8, 256>}]} {
    %c0 = arith.constant 0 : index
    %c0_0 = arith.constant 0 : index
    %c0_1 = arith.constant 0 : index
    %c0_2 = arith.constant 0 : index
    %c0_3 = arith.constant 0 : index
    %0 = vector.load %arg2[%c0, %c0_0, %c0_1, %c0_2, %c0_3] : memref<1x2x2x8x256xbf16, #tpu.memory_space<vmem>>, vector<1x2x1x8x256xbf16>
    %1 = vector.shape_cast %0 : vector<1x2x1x8x256xbf16> to vector<2x8x256xbf16>
    %2 = vector.shape_cast %1 : vector<2x8x256xbf16> to vector<16x256xbf16>
    %c0_4 = arith.constant 0 : index
    %c0_5 = arith.constant 0 : index
    %c0_6 = arith.constant 0 : index
    %3 = vector.load %arg3[%c0_4, %c0_5, %c0_6] : memref<2x256x256xbf16, #tpu.memory_space<vmem>>, vector<1x256x256xbf16>
    %4 = vector.shape_cast %3 : vector<1x256x256xbf16> to vector<256x256xbf16>
    %cst = arith.constant dense<0.000000e+00> : vector<16x256xf32>
    %5 = tpu.matmul %2, %4, %cst {dimension_numbers = #tpu.dot_dimension_numbers<[1], [0], [0], [1], [0, 0, 1, 1], [], []>} : vector<16x256xbf16>, vector<256x256xbf16>, vector<16x256xf32> -> vector<16x256xf32>
    %c0_7 = arith.constant 0 : index
    %c0_8 = arith.constant 0 : index
    %c1 = arith.constant 1 : index
    %c0_9 = arith.constant 0 : index
    %c0_10 = arith.constant 0 : index
    %6 = vector.load %arg2[%c0_7, %c0_8, %c1, %c0_9, %c0_10] : memref<1x2x2x8x256xbf16, #tpu.memory_space<vmem>>, vector<1x2x1x8x256xbf16>
    %7 = vector.shape_cast %6 : vector<1x2x1x8x256xbf16> to vector<2x8x256xbf16>
    %8 = vector.shape_cast %7 : vector<2x8x256xbf16> to vector<16x256xbf16>
    %c1_11 = arith.constant 1 : index
    %c0_12 = arith.constant 0 : index
    %c0_13 = arith.constant 0 : index
    %9 = vector.load %arg3[%c1_11, %c0_12, %c0_13] : memref<2x256x256xbf16, #tpu.memory_space<vmem>>, vector<1x256x256xbf16>
    %10 = vector.shape_cast %9 : vector<1x256x256xbf16> to vector<256x256xbf16>
    %cst_14 = arith.constant dense<0.000000e+00> : vector<16x256xf32>
    %11 = tpu.matmul %8, %10, %cst_14 {dimension_numbers = #tpu.dot_dimension_numbers<[1], [0], [0], [1], [0, 0, 1, 1], [], []>} : vector<16x256xbf16>, vector<256x256xbf16>, vector<16x256xf32> -> vector<16x256xf32>
    %12 = arith.addf %5, %11 : vector<16x256xf32>
    %c0_15 = arith.constant 0 : index
    %c0_16 = arith.constant 0 : index
    %13 = vector.load %arg4[%c0_15, %c0_16] : memref<1x256xf32, #tpu.memory_space<vmem>>, vector<1x256xf32>
    %14 = vector.broadcast %13 : vector<1x256xf32> to vector<16x256xf32>
    %15 = arith.addf %12, %14 : vector<16x256xf32>
    %cst_17 = arith.constant 0.000000e+00 : f32
    %16 = vector.broadcast %cst_17 : f32 to vector<16x256xf32>
    %17 = arith.maximumf %15, %16 : vector<16x256xf32>
    %18 = vector.shape_cast %17 : vector<16x256xf32> to vector<2x8x256xf32>
    %c0_18 = arith.constant 0 : index
    %c0_19 = arith.constant 0 : index
    %c0_20 = arith.constant 0 : index
    %c0_21 = arith.constant 0 : index
    %19 = vector.load %arg5[%c0_18, %c0_19, %c0_20, %c0_21] : memref<1x2x8x256xf32, #tpu.memory_space<vmem>>, vector<1x2x8x256xf32>
    %20 = vector.shape_cast %19 : vector<1x2x8x256xf32> to vector<2x8x256xf32>
    %21 = vector.shape_cast %18 : vector<2x8x256xf32> to vector<1x2x8x256xf32>
    tpu.vector_store %arg5[%c0_18, %c0_19, %c0_20, %c0_21], %21 {strides = array<i32>} : memref<1x2x8x256xf32, #tpu.memory_space<vmem>>, vector<1x2x8x256xf32>,
    return
  }
  func.func @transform_0(%arg0: i32, %arg1: i32) -> (i32, i32, i32, i32, i32) {
    %c0_i32 = arith.constant 0 : i32
    %c0_i32_0 = arith.constant 0 : i32
    %c0_i32_1 = arith.constant 0 : i32
    %c0_i32_2 = arith.constant 0 : i32
    return %arg0, %arg1, %c0_i32, %c0_i32_0, %c0_i32_1 : i32, i32, i32, i32, i32
  }
  func.func @transform_1(%arg0: i32, %arg1: i32) -> (i32, i32, i32) {
    %c0_i32 = arith.constant 0 : i32
    %c0_i32_0 = arith.constant 0 : i32
    %c0_i32_1 = arith.constant 0 : i32
    %c0_i32_2 = arith.constant 0 : i32
    return %c0_i32, %c0_i32_0, %c0_i32_1 : i32, i32, i32
  }
  func.func @transform_2(%arg0: i32, %arg1: i32) -> (i32, i32) {
    %c0_i32 = arith.constant 0 : i32
    %c0_i32_0 = arith.constant 0 : i32
    %c0_i32_1 = arith.constant 0 : i32
    return %c0_i32, %c0_i32_0 : i32, i32
  }
  func.func @transform_3(%arg0: i32, %arg1: i32) -> (i32, i32, i32, i32) {
    %c0_i32 = arith.constant 0 : i32
    %c0_i32_0 = arith.constant 0 : i32
    %c0_i32_1 = arith.constant 0 : i32
    return %arg0, %arg1, %c0_i32, %c0_i32_0 : i32, i32, i32, i32
  }
}

</mosaic_0001>

<llo_original>
// kernel: backbone_base_forward.4
$region0: #{backbone_base_forward.4}
  #allocation0 [shape = 'u32[]', space=smem, size = 0x4, offset = 0x4, fixed_abs, tag = 'smem constant byte address 0x4 - core index']
  #allocation1 [shape = 'u32[144,128]{1,0:T(1,128)}', space=vmem, size = 0x12000, scoped, tag = 'internal scratch']
  %s0 = inlined_call_operand.vmem [shape: bf16[2,16,2,2,16,12], index: 0, kind: input, shape index: {}]
  %s1 = inlined_call_operand.vmem [shape: bf16[12,128], index: 1, kind: input, shape index: {}]
  %s2 = inlined_call_operand.vmem [shape: f32[1,128], index: 2, kind: input, shape index: {}]
  %s3 = inlined_call_operand.vmem [shape: bf16[4,128,128], index: 3, kind: input, shape index: {}]
  %s4 = inlined_call_operand.vmem [shape: f32[1,128], index: 4, kind: input, shape index: {}]
  %s5 = inlined_call_operand.vmem [shape: bf16[128,128], index: 5, kind: input, shape index: {}]
  %s6 = inlined_call_operand.vmem [shape: f32[1,128], index: 6, kind: input, shape index: {}]
  %s7 = inlined_call_operand.vmem [shape: bf16[2,16,16,128], index: 7, kind: output, shape index: {}]
  %s8 = sld [smem:[#allocation0]]
  $region61: #{backbone_base_forward.4} parent=0
    _
  %s10 = ssub.s32 1, %s8
  %s11 = scalar_select 0, %s10, %s8
  loop: start=0, step=1, limit=4
  $region2: #{backbone_base_forward.4} parent=0 // loop_pre_header
    _
  $region3: #{backbone_base_forward.4} parent=0 // loop_header
    %s13 = sphi 0, %s17
    %p14 = scmp.ge.s32.totalorder %s13, 4
    %s20 = sphi 0, %s32
    %s21 = sphi 0, %s28
    %s22 = sphi 0, %s20
    %s23 = sphi 0, %s21
    %s24 = sphi 0, %s22
    %s25 = sphi 0, %s23
    %s37 = sphi 0, %s39
    %s40 = sphi 0, %s37
    %s41 = sphi 0, %s40
    %s57 = sphi 0, %s41
    %s61 = sphi 0, %s61
    %s63 = sphi 0, %s61
    %s64 = sphi 0, %s63
    %s78 = sphi 0, %s64
    %s82 = sphi 0, %s82
    %s84 = sphi 0, %s82
    %s85 = sphi 0, %s84
    %s99 = sphi 0, %s85
    %s103 = sphi 0, %s103
    %s105 = sphi 0, %s103
    %s106 = sphi 0, %s105
    %s120 = sphi 0, %s106
    %s124 = sphi 0, %s124
    %s126 = sphi 0, %s124
    %s127 = sphi 0, %s126
    %s141 = sphi 0, %s127
    %s145 = sphi 0, %s145
    %s147 = sphi 0, %s145
    %s148 = sphi 0, %s147
    %s162 = sphi 0, %s148
    %s166 = sphi 0, %s166
    %s168 = sphi 0, %s166
    %s169 = sphi 0, %s168
    %s183 = sphi 0, %s169
    %s191 = sphi 0, %s193
    %s194 = sphi 0, %s191
    %s195 = sphi 0, %s194
    %s211 = sphi 0, %s195
  $region4: #{backbone_base_forward.4} parent=0 // loop_header_branch
    %16 = sbr.rel (%p14) target = $region8
  $region5: #{backbone_base_forward.4} parent=0 // loop_body
    %s18 = ssub.s32 %s13, 1
    %s19 = ssub.s32 %s13, 2
    %s26 = sadd.s32 1, %s21
    %p27 = scmp.ge.s32.totalorder %s26, 1
    %s28 = scalar_select %p27, 0, %s26
    %s29 = sadd.s32 1, %s20
    %s30 = scalar_select %p27, %s29, %s20
    %p31 = scmp.ge.s32.totalorder %s30, 2
    %s32 = scalar_select %p31, 0, %s30
    %s33 = ssub.s32 %s20, %s32
    %s34 = ssub.s32 %s21, %s28
    %s35 = sor.u32 %s33, %s34
    %p36 = scmp.eq.s32.totalorder %s35, 0
    %s38 = sadd.s32 %s37, 1
    %s39 = scalar_select %p36, %s37, %s38
    %p42 = pneg %p36
    %p43 = scmp.eq.s32.totalorder %s13, 1
    %p44 = por %p42, %p43
    %p45 = scmp.ne.s32.totalorder %s37, %s40
    %p46 = scmp.eq.s32.totalorder %s13, 0
    %p47 = por %p45, %p46
    %p48 = scmp.ne.s32.totalorder %s37, %s40
    %p49 = scmp.eq.s32.totalorder %s18, 1
    %p50 = por %p48, %p49
    %p51 = scmp.ne.s32.totalorder %s40, %s41
    %p52 = scmp.eq.s32.totalorder %s18, 0
    %p53 = por %p51, %p52
    %p54 = scmp.ne.s32.totalorder %s40, %s41
    %p55 = scmp.eq.s32.totalorder %s19, 1
    %p56 = por %p54, %p55
    %p58 = scmp.ne.s32.totalorder %s41, %s57
    %p59 = scmp.eq.s32.totalorder %s19, 0
    %p60 = por %p58, %p59
    %s62 = sadd.s32 %s61, 1
    %p65 = scmp.eq.s32.totalorder %s13, 1
    %p66 = scmp.ne.s32.totalorder %s61, %s63
    %p67 = scmp.eq.s32.totalorder %s13, 0
    %p68 = por %p66, %p67
    %p69 = scmp.ne.s32.totalorder %s61, %s63
    %p70 = scmp.eq.s32.totalorder %s18, 1
    %p71 = por %p69, %p70
    %p72 = scmp.ne.s32.totalorder %s63, %s64
    %p73 = scmp.eq.s32.totalorder %s18, 0
    %p74 = por %p72, %p73
    %p75 = scmp.ne.s32.totalorder %s63, %s64
    %p76 = scmp.eq.s32.totalorder %s19, 1
    %p77 = por %p75, %p76
    %p79 = scmp.ne.s32.totalorder %s64, %s78
    %p80 = scmp.eq.s32.totalorder %s19, 0
    %p81 = por %p79, %p80
    %s83 = sadd.s32 %s82, 1
    %p86 = scmp.eq.s32.totalorder %s13, 1
    %p87 = scmp.ne.s32.totalorder %s82, %s84
    %p88 = scmp.eq.s32.totalorder %s13, 0
    %p89 = por %p87, %p88
    %p90 = scmp.ne.s32.totalorder %s82, %s84
    %p91 = scmp.eq.s32.totalorder %s18, 1
    %p92 = por %p90, %p91
    %p93 = scmp.ne.s32.totalorder %s84, %s85
    %p94 = scmp.eq.s32.totalorder %s18, 0
    %p95 = por %p93, %p94
    %p96 = scmp.ne.s32.totalorder %s84, %s85
    %p97 = scmp.eq.s32.totalorder %s19, 1
    %p98 = por %p96, %p97
    %p100 = scmp.ne.s32.totalorder %s85, %s99
    %p101 = scmp.eq.s32.totalorder %s19, 0
    %p102 = por %p100, %p101
    %s104 = sadd.s32 %s103, 1
    %p107 = scmp.eq.s32.totalorder %s13, 1
    %p108 = scmp.ne.s32.totalorder %s103, %s105
    %p109 = scmp.eq.s32.totalorder %s13, 0
    %p110 = por %p108, %p109
    %p111 = scmp.ne.s32.totalorder %s103, %s105
    %p112 = scmp.eq.s32.totalorder %s18, 1
    %p113 = por %p111, %p112
    %p114 = scmp.ne.s32.totalorder %s105, %s106
    %p115 = scmp.eq.s32.totalorder %s18, 0
    %p116 = por %p114, %p115
    %p117 = scmp.ne.s32.totalorder %s105, %s106
    %p118 = scmp.eq.s32.totalorder %s19, 1
    %p119 = por %p117, %p118
    %p121 = scmp.ne.s32.totalorder %s106, %s120
    %p122 = scmp.eq.s32.totalorder %s19, 0
    %p123 = por %p121, %p122
    %s125 = sadd.s32 %s124, 1
    %p128 = scmp.eq.s32.totalorder %s13, 1
    %p129 = scmp.ne.s32.totalorder %s124, %s126
    %p130 = scmp.eq.s32.totalorder %s13, 0
    %p131 = por %p129, %p130
    %p132 = scmp.ne.s32.totalorder %s124, %s126
    %p133 = scmp.eq.s32.totalorder %s18, 1
    %p134 = por %p132, %p133
    %p135 = scmp.ne.s32.totalorder %s126, %s127
    %p136 = scmp.eq.s32.totalorder %s18, 0
    %p137 = por %p135, %p136
    %p138 = scmp.ne.s32.totalorder %s126, %s127
    %p139 = scmp.eq.s32.totalorder %s19, 1
    %p140 = por %p138, %p139
    %p142 = scmp.ne.s32.totalorder %s127, %s141
    %p143 = scmp.eq.s32.totalorder %s19, 0
    %p144 = por %p142, %p143
    %s146 = sadd.s32 %s145, 1
    %p149 = scmp.eq.s32.totalorder %s13, 1
    %p150 = scmp.ne.s32.totalorder %s145, %s147
    %p151 = scmp.eq.s32.totalorder %s13, 0
    %p152 = por %p150, %p151
    %p153 = scmp.ne.s32.totalorder %s145, %s147
    %p154 = scmp.eq.s32.totalorder %s18, 1
    %p155 = por %p153, %p154
    %p156 = scmp.ne.s32.totalorder %s147, %s148
    %p157 = scmp.eq.s32.totalorder %s18, 0
    %p158 = por %p156, %p157
    %p159 = scmp.ne.s32.totalorder %s147, %s148
    %p160 = scmp.eq.s32.totalorder %s19, 1
    %p161 = por %p159, %p160
    %p163 = scmp.ne.s32.totalorder %s148, %s162
    %p164 = scmp.eq.s32.totalorder %s19, 0
    %p165 = por %p163, %p164
    %s167 = sadd.s32 %s166, 1
    %p170 = scmp.eq.s32.totalorder %s13, 1
    %p171 = scmp.ne.s32.totalorder %s166, %s168
    %p172 = scmp.eq.s32.totalorder %s13, 0
    %p173 = por %p171, %p172
    %p174 = scmp.ne.s32.totalorder %s166, %s168
    %p175 = scmp.eq.s32.totalorder %s18, 1
    %p176 = por %p174, %p175
    %p177 = scmp.ne.s32.totalorder %s168, %s169
    %p178 = scmp.eq.s32.totalorder %s18, 0
    %p179 = por %p177, %p178
    %p180 = scmp.ne.s32.totalorder %s168, %s169
    %p181 = scmp.eq.s32.totalorder %s19, 1
    %p182 = por %p180, %p181
    %p184 = scmp.ne.s32.totalorder %s169, %s183
    %p185 = scmp.eq.s32.totalorder %s19, 0
    %p186 = por %p184, %p185
    %s187 = ssub.s32 %s20, %s32
    %s188 = ssub.s32 %s21, %s28
    %s189 = sor.u32 %s187, %s188
    %p190 = scmp.eq.s32.totalorder %s189, 0
    %s192 = sadd.s32 %s191, 1
    %s193 = scalar_select %p190, %s191, %s192
    %p196 = pneg %p190
    %p197 = scmp.eq.s32.totalorder %s13, 1
    %p198 = por %p196, %p197
    %p199 = scmp.ne.s32.totalorder %s191, %s194
    %p200 = scmp.eq.s32.totalorder %s13, 0
    %p201 = por %p199, %p200
    %p202 = scmp.ne.s32.totalorder %s191, %s194
    %p203 = scmp.eq.s32.totalorder %s18, 1
    %p204 = por %p202, %p203
    %p205 = scmp.ne.s32.totalorder %s194, %s195
    %p206 = scmp.eq.s32.totalorder %s18, 0
    %p207 = por %p205, %p206
    %p208 = scmp.ne.s32.totalorder %s194, %s195
    %p209 = scmp.eq.s32.totalorder %s19, 1
    %p210 = por %p208, %p209
    %p212 = scmp.ne.s32.totalorder %s195, %s211
    %p213 = scmp.eq.s32.totalorder %s19, 0
    %p214 = por %p212, %p213
    %p215 = scmp.le.s32.totalorder 1, %s13
    %p216 = scmp.lt.s32.totalorder %s13, 3
    %p217 = pnand %p215, %p216
    %p218 = pneg %p217
    // Predicated region
    $region9: #{backbone_base_forward.4} parent=5 // pred_check
      _
    $region10: #{backbone_base_forward.4} parent=5 // pred_check_branch
      %220 = sbr.rel (%p217) target = $region12
    $region11: #{backbone_base_forward.4} parent=5 // pred_region
      %s221 = ssub.s32 %s13, 1
      // Predicated region
      $region13: #{backbone_base_forward.4} parent=11 // pred_check
        %p222 = pneg %p74
      $region14: #{backbone_base_forward.4} parent=11 // pred_check_branch
        %224 = sbr.rel (%p222) target = $region16
      $region15: #{backbone_base_forward.4} parent=11 // pred_region
        _
      $region16: #{backbone_base_forward.4} parent=11 // pred_fallthru
        _
      // Predicated region
      $region17: #{backbone_base_forward.4} parent=11 // pred_check
        %p225 = pneg %p95
      $region18: #{backbone_base_forward.4} parent=11 // pred_check_branch
        %227 = sbr.rel (%p225) target = $region20
      $region19: #{backbone_base_forward.4} parent=11 // pred_region
        _
      $region20: #{backbone_base_forward.4} parent=11 // pred_fallthru
        _
      // Predicated region
      $region21: #{backbone_base_forward.4} parent=11 // pred_check
        %p228 = pneg %p116
      $region22: #{backbone_base_forward.4} parent=11 // pred_check_branch
        %230 = sbr.rel (%p228) target = $region24
      $region23: #{backbone_base_forward.4} parent=11 // pred_region
        _
      $region24: #{backbone_base_forward.4} parent=11 // pred_fallthru
        _
      // Predicated region
      $region25: #{backbone_base_forward.4} parent=11 // pred_check
        %p231 = pneg %p137
      $region26: #{backbone_base_forward.4} parent=11 // pred_check_branch
        %233 = sbr.rel (%p231) target = $region28
      $region27: #{backbone_base_forward.4} parent=11 // pred_region
        _
      $region28: #{backbone_base_forward.4} parent=11 // pred_fallthru
        _
      // Predicated region
      $region29: #{backbone_base_forward.4} parent=11 // pred_check
        %p234 = pneg %p158
      $region30: #{backbone_base_forward.4} parent=11 // pred_check_branch
        %236 = sbr.rel (%p234) target = $region32
      $region31: #{backbone_base_forward.4} parent=11 // pred_region
        _
      $region32: #{backbone_base_forward.4} parent=11 // pred_fallthru
        _
      // Predicated region
      $region33: #{backbone_base_forward.4} parent=11 // pred_check
        %p237 = pneg %p179
      $region34: #{backbone_base_forward.4} parent=11 // pred_check_branch
        %239 = sbr.rel (%p237) target = $region36
      $region35: #{backbone_base_forward.4} parent=11 // pred_region
        _
      $region36: #{backbone_base_forward.4} parent=11 // pred_fallthru
        _
    $region12: #{backbone_base_forward.4} parent=5 // pred_fallthru
      _
    %p240 = scmp.lt.s32.totalorder %s13, 2
    // Predicated region
    $region37: #{backbone_base_forward.4} parent=5 // pred_check
      %p241 = pneg %p240
    $region38: #{backbone_base_forward.4} parent=5 // pred_check_branch
      %243 = sbr.rel (%p241) target = $region40
    $region39: #{backbone_base_forward.4} parent=5 // pred_region
      // Predicated region
      $region41: #{backbone_base_forward.4} parent=39 // pred_check
        %p244 = pneg %p47
      $region42: #{backbone_base_forward.4} parent=39 // pred_check_branch
        %246 = sbr.rel (%p244) target = $region44
      $region43: #{backbone_base_forward.4} parent=39 // pred_region
        %s247 = smul.u32 16, %s21
        %p248 = scmp.lt.s32.totalorder %s20, 1
        %s249 = scalar_select %p248, %s20, 1
        %p250 = scmp.lt.s32.totalorder %s247, 15
        %s251 = scalar_select %p250, %s247, 15
        %s252 = smul.addr %s251, 8
        %s253 = smul.addr %s249, 128
        %s254 = sadd.s32 %s252, %s253
        %s255 = smul.addr %s254, 4
        %s256 = scalar_lea.vmem %s0, %s255
        %s257 = smul.u32 16, %s21
      $region44: #{backbone_base_forward.4} parent=39 // pred_fallthru
        _
    $region40: #{backbone_base_forward.4} parent=5 // pred_fallthru
      _
    %p258 = scmp.le.s32.totalorder 1, %s13
    %p259 = scmp.lt.s32.totalorder %s13, 3
    %p260 = pnand %p258, %p259
    %p261 = pneg %p260
    // Predicated region
    $region45: #{backbone_base_forward.4} parent=5 // pred_check
      _
    $region46: #{backbone_base_forward.4} parent=5 // pred_check_branch
      %263 = sbr.rel (%p260) target = $region48
    $region47: #{backbone_base_forward.4} parent=5 // pred_region
      %s264 = ssub.s32 %s13, 1
      %s265 = smul.u32 16, %s23
      %p266 = scmp.lt.s32.totalorder %s22, 1
      %s267 = scalar_select %p266, %s22, 1
      %p268 = scmp.lt.s32.totalorder %s265, 15
      %s269 = scalar_select %p268, %s265, 15
      %s270 = smul.addr %s269, 8
      %s271 = smul.addr %s267, 128
      %s272 = sadd.s32 %s270, %s271
      %s273 = smul.addr %s272, 4
      %s274 = scalar_lea.vmem %s0, %s273
      %p275 = pneg %p53
      %p276 = pneg %p50
      %p277 = pneg %p74
      %p278 = pneg %p71
      %p279 = pneg %p95
      %p280 = pneg %p92
      %p281 = pneg %p116
      %p282 = pneg %p113
      %p283 = pneg %p137
      %p284 = pneg %p134
      %p285 = pneg %p158
      %p286 = pneg %p155
      %p287 = pneg %p179
      %p288 = pneg %p176
      %p289 = pneg %p207
      %p290 = pneg %p204
      %s291 = smul.u32 16, %s23
      %p292 = scmp.lt.s32.totalorder %s22, 1
      %s293 = scalar_select %p292, %s22, 1
      %p294 = scmp.lt.s32.totalorder %s291, 15
      %s295 = scalar_select %p294, %s291, 15
      %s296 = smul.addr %s295, 2
      %s297 = smul.addr %s293, 32
      %s298 = sadd.s32 %s296, %s297
      %s299 = smul.addr %s298, 4
      %s300 = scalar_lea.vmem %s7, %s299
      %s301 = smul.u32 16, %s23
      %p302 = scmp.lt.s32.totalorder %s22, 1
      %s303 = scalar_select %p302, %s22, 1
      %p304 = scmp.lt.s32.totalorder %s301, 15
      %s305 = scalar_select %p304, %s301, 15
      %s306 = smul.addr %s305, 8
      %s307 = smul.addr %s303, 128
      %s308 = sadd.s32 %s306, %s307
      %s309 = smul.addr %s308, 4
      %s310 = scalar_lea.vmem %s0, %s309
      %s311 = smul.u32 16, %s23
      %s312 = smul.u32 16, %s23
      %p313 = scmp.lt.s32.totalorder %s22, 1
      %s314 = scalar_select %p313, %s22, 1
      %p315 = scmp.lt.s32.totalorder %s312, 15
      %s316 = scalar_select %p315, %s312, 15
      %s317 = smul.addr %s316, 2
      %s318 = smul.addr %s314, 32
      %s319 = sadd.s32 %s317, %s318
      %s320 = smul.addr %s319, 4
      %s321 = scalar_lea.vmem %s7, %s320
      %s322 = smul.u32 16, %s23
      %v324 = vld [vmem:[%s310] sm:$0xf]
      %v325 = vld [vmem:[%s310 + $0x4] sm:$0xf]
      %v326 = vld [vmem:[%s310 + $0x20] sm:$0xf]
      %v327 = vld [vmem:[%s310 + $0x24] sm:$0xf]
      %v328 = vld [vmem:[%s310 + $0x40] sm:$0xf]
      %v329 = vld [vmem:[%s310 + $0x44] sm:$0xf]
      %v330 = vld [vmem:[%s310 + $0x60] sm:$0xf]
      %v331 = vld [vmem:[%s310 + $0x64] sm:$0xf]
      %v332 = vld [vmem:[%s310 + $0x80] sm:$0xf]
      %v333 = vld [vmem:[%s310 + $0x84] sm:$0xf]
      %v334 = vld [vmem:[%s310 + $0xa0] sm:$0xf]
      %v335 = vld [vmem:[%s310 + $0xa4] sm:$0xf]
      %v336 = vld [vmem:[%s310 + $0xc0] sm:$0xf]
      %v337 = vld [vmem:[%s310 + $0xc4] sm:$0xf]
      %v338 = vld [vmem:[%s310 + $0xe0] sm:$0xf]
      %v339 = vld [vmem:[%s310 + $0xe4] sm:$0xf]
      %v340 = vld [vmem:[%s310 + $0x100] sm:$0xf]
      %v341 = vld [vmem:[%s310 + $0x104] sm:$0xf]
      %v342 = vld [vmem:[%s310 + $0x120] sm:$0xf]
      %v343 = vld [vmem:[%s310 + $0x124] sm:$0xf]
      %v344 = vld [vmem:[%s310 + $0x140] sm:$0xf]
      %v345 = vld [vmem:[%s310 + $0x144] sm:$0xf]
      %v346 = vld [vmem:[%s310 + $0x160] sm:$0xf]
      %v347 = vld [vmem:[%s310 + $0x164] sm:$0xf]
      %v348 = vld [vmem:[%s310 + $0x180] sm:$0xf]
      %v349 = vld [vmem:[%s310 + $0x184] sm:$0xf]
      %v350 = vld [vmem:[%s310 + $0x1a0] sm:$0xf]
      %v351 = vld [vmem:[%s310 + $0x1a4] sm:$0xf]
      %v352 = vld [vmem:[%s310 + $0x1c0] sm:$0xf]
      %v353 = vld [vmem:[%s310 + $0x1c4] sm:$0xf]
      %v354 = vld [vmem:[%s310 + $0x1e0] sm:$0xf]
      %v355 = vld [vmem:[%s310 + $0x1e4] sm:$0xf]
      %v356 = vld [vmem:[%s1] sm:$0xf]
      %v357 = vld [vmem:[%s1 + $0x4] sm:$0x3]
      %v358 = vld [vmem:[%s2] sm:$0x1]
      %v360 = vlaneseq
      %v361 = vshrl.u32 %v360, 7
      %v362 = vsub.s32 0, %v361
      %v363 = vrot.slane %v358, %v362
      %v397 = vunpack.c.l.b16 %v324
      %v398 = vunpack.c.l.b16 %v325
      %v399 = vunpack.c.l.b16 %v326
      %v400 = vunpack.c.l.b16 %v327
      %v401 = vunpack.c.l.b16 %v328
      %v402 = vunpack.c.l.b16 %v329
      %v403 = vunpack.c.l.b16 %v330
      %v404 = vunpack.c.l.b16 %v331
      %v405 = vunpack.c.l.b16 %v332
      %v406 = vunpack.c.l.b16 %v333
      %v407 = vunpack.c.l.b16 %v334
      %v408 = vunpack.c.l.b16 %v335
      %v409 = vunpack.c.l.b16 %v336
      %v410 = vunpack.c.l.b16 %v337
      %v411 = vunpack.c.l.b16 %v338
      %v412 = vunpack.c.l.b16 %v339
      %v413 = vunpack.c.l.b16 %v340
      %v414 = vunpack.c.l.b16 %v341
      %v415 = vunpack.c.l.b16 %v342
      %v416 = vunpack.c.l.b16 %v343
      %v417 = vunpack.c.l.b16 %v344
      %v418 = vunpack.c.l.b16 %v345
      %v419 = vunpack.c.l.b16 %v346
      %v420 = vunpack.c.l.b16 %v347
      %v421 = vunpack.c.l.b16 %v348
      %v422 = vunpack.c.l.b16 %v349
      %v423 = vunpack.c.l.b16 %v350
      %v424 = vunpack.c.l.b16 %v351
      %v425 = vunpack.c.l.b16 %v352
      %v426 = vunpack.c.l.b16 %v353
      %v427 = vunpack.c.l.b16 %v354
      %v428 = vunpack.c.l.b16 %v355
      %v429 = vpack.c.b16 %v398, %v397
      %v430 = vpack.c.b16 %v400, %v399
      %v431 = vpack.c.b16 %v402, %v401
      %v432 = vpack.c.b16 %v404, %v403
      %v433 = vpack.c.b16 %v406, %v405
      %v434 = vpack.c.b16 %v408, %v407
      %v435 = vpack.c.b16 %v410, %v409
      %v436 = vpack.c.b16 %v412, %v411
      %v437 = vpack.c.b16 %v414, %v413
      %v438 = vpack.c.b16 %v416, %v415
      %v439 = vpack.c.b16 %v418, %v417
      %v440 = vpack.c.b16 %v420, %v419
      %v441 = vpack.c.b16 %v422, %v421
      %v442 = vpack.c.b16 %v424, %v423
      %v443 = vpack.c.b16 %v426, %v425
      %v444 = vpack.c.b16 %v428, %v427
      %v447 = vunpack.c.l.b16 %v356
      %v448 = vunpack.c.l.b16 %v357
      %v449 = vpack.c.b16 %v448, %v447
      %vm450 = vcmask 97280
      %v452 = vsel %vm450, %v429, 0
      %v455 = vsel %vm450, %v430, 0
      %v458 = vsel %vm450, %v431, 0
      %v461 = vsel %vm450, %v432, 0
      %v464 = vsel %vm450, %v433, 0
      %v467 = vsel %vm450, %v434, 0
      %v470 = vsel %vm450, %v435, 0
      %v473 = vsel %vm450, %v436, 0
      %v476 = vsel %vm450, %v437, 0
      %v479 = vsel %vm450, %v438, 0
      %v482 = vsel %vm450, %v439, 0
      %v485 = vsel %vm450, %v440, 0
      %v488 = vsel %vm450, %v441, 0
      %v491 = vsel %vm450, %v442, 0
      %v494 = vsel %vm450, %v443, 0
      %v497 = vsel %vm450, %v444, 0
      %vm499 = vcmask 1045504
      %v501 = vsel %vm499, %v449, 0
      %503 = vmatprep.subr.bf16.mxu0 0
      %504 = vmatpush1.bf16.msra.mxu0 %v501
      %505 = vmatprep.subr.bf16.mxu0 0
      %506 = vmatpush1.bf16.msra.mxu0 0
      %507 = vmatprep.subr.bf16.mxu0 0
      %508 = vmatpush1.bf16.msra.mxu0 0
      %509 = vmatprep.subr.bf16.mxu0 0
      %510 = vmatpush1.bf16.msra.mxu0 0
      %511 = vmatprep.subr.bf16.mxu0 0
      %512 = vmatpush1.bf16.msra.mxu0 0
      %513 = vmatprep.subr.bf16.mxu0 0
      %514 = vmatpush1.bf16.msra.mxu0 0
      %515 = vmatprep.subr.bf16.mxu0 0
      %516 = vmatpush1.bf16.msra.mxu0 0
      %517 = vmatprep.subr.bf16.mxu0 0
      %518 = vmatpush1.bf16.msra.mxu0 0
      %519 = vmatprep.subr.bf16.mxu0 0
      %520 = vmatpush1.bf16.msra.mxu0 0
      %521 = vmatprep.subr.bf16.mxu0 0
      %522 = vmatpush1.bf16.msra.mxu0 0
      %523 = vmatprep.subr.bf16.mxu0 0
      %524 = vmatpush1.bf16.msra.mxu0 0
      %525 = vmatprep.subr.bf16.mxu0 0
      %526 = vmatpush1.bf16.msra.mxu0 0
      %527 = vmatprep.subr.bf16.mxu0 0
      %528 = vmatpush1.bf16.msra.mxu0 0
      %529 = vmatprep.subr.bf16.mxu0 0
      %530 = vmatpush1.bf16.msra.mxu0 0
      %531 = vmatprep.subr.bf16.mxu0 0
      %532 = vmatpush1.bf16.msra.mxu0 0
      %533 = vmatprep.subr.bf16.mxu0 0
      %534 = vmatpush1.bf16.msra.mxu0 0
      %535 = vmatprep.mubr.bf16.mxu0 0
      %536 = vmatmul.mubr.bf16.gmra.mrb[0].mxu0 %v452
      %v537 = vpop.f32.mrb[0].mxu0
      %v538 = vadd.f32 %v363, %v537
      %v539 = vpop.f32.mrb[0].mxu0
      %v540 = vpop.f32.mrb[0].mxu0
      %v541 = vadd.f32 %v363, %v540
      %v542 = vpop.f32.mrb[0].mxu0
      %543 = vmatprep.mubr.bf16.mxu0 0
      %544 = vmatmul.mubr.bf16.gmra.mrb[0].mxu0 %v455
      %v545 = vpop.f32.mrb[0].mxu0
      %v546 = vadd.f32 %v363, %v545
      %v547 = vpop.f32.mrb[0].mxu0
      %v548 = vpop.f32.mrb[0].mxu0
      %v549 = vadd.f32 %v363, %v548
      %v550 = vpop.f32.mrb[0].mxu0
      %551 = vmatprep.mubr.bf16.mxu0 0
      %552 = vmatmul.mubr.bf16.gmra.mrb[0].mxu0 %v458
      %v553 = vpop.f32.mrb[0].mxu0
      %v554 = vadd.f32 %v363, %v553
      %v555 = vpop.f32.mrb[0].mxu0
      %v556 = vpop.f32.mrb[0].mxu0
      %v557 = vadd.f32 %v363, %v556
      %v558 = vpop.f32.mrb[0].mxu0
      %559 = vmatprep.mubr.bf16.mxu0 0
      %560 = vmatmul.mubr.bf16.gmra.mrb[0].mxu0 %v461
      %v561 = vpop.f32.mrb[0].mxu0
      %v562 = vadd.f32 %v363, %v561
      %v563 = vpop.f32.mrb[0].mxu0
      %v564 = vpop.f32.mrb[0].mxu0
      %v565 = vadd.f32 %v363, %v564
      %v566 = vpop.f32.mrb[0].mxu0
      %567 = vmatprep.mubr.bf16.mxu0 0
      %568 = vmatmul.mubr.bf16.gmra.mrb[0].mxu0 %v464
      %v569 = vpop.f32.mrb[0].mxu0
      %v570 = vadd.f32 %v363, %v569
      %v571 = vpop.f32.mrb[0].mxu0
      %v572 = vpop.f32.mrb[0].mxu0
      %v573 = vadd.f32 %v363, %v572
      %v574 = vpop.f32.mrb[0].mxu0
      %575 = vmatprep.mubr.bf16.mxu0 0
      %576 = vmatmul.mubr.bf16.gmra.mrb[0].mxu0 %v467
      %v577 = vpop.f32.mrb[0].mxu0
      %v578 = vadd.f32 %v363, %v577
      %v579 = vpop.f32.mrb[0].mxu0
      %v580 = vpop.f32.mrb[0].mxu0
      %v581 = vadd.f32 %v363, %v580
      %v582 = vpop.f32.mrb[0].mxu0
      %583 = vmatprep.mubr.bf16.mxu0 0
      %584 = vmatmul.mubr.bf16.gmra.mrb[0].mxu0 %v470
      %v585 = vpop.f32.mrb[0].mxu0
      %v586 = vadd.f32 %v363, %v585
      %v587 = vpop.f32.mrb[0].mxu0
      %v588 = vpop.f32.mrb[0].mxu0
      %v589 = vadd.f32 %v363, %v588
      %v590 = vpop.f32.mrb[0].mxu0
      %591 = vmatprep.mubr.bf16.mxu0 0
      %592 = vmatmul.mubr.bf16.gmra.mrb[0].mxu0 %v473
      %v593 = vpop.f32.mrb[0].mxu0
      %v594 = vadd.f32 %v363, %v593
      %v595 = vpop.f32.mrb[0].mxu0
      %v596 = vpop.f32.mrb[0].mxu0
      %v597 = vadd.f32 %v363, %v596
      %v598 = vpop.f32.mrb[0].mxu0
      %599 = vmatprep.mubr.bf16.mxu0 0
      %600 = vmatmul.mubr.bf16.gmra.mrb[0].mxu0 %v476
      %v601 = vpop.f32.mrb[0].mxu0
      %v602 = vadd.f32 %v363, %v601
      %v603 = vpop.f32.mrb[0].mxu0
      %v604 = vpop.f32.mrb[0].mxu0
      %v605 = vadd.f32 %v363, %v604
      %v606 = vpop.f32.mrb[0].mxu0
      %607 = vmatprep.mubr.bf16.mxu0 0
      %608 = vmatmul.mubr.bf16.gmra.mrb[0].mxu0 %v479
      %v609 = vpop.f32.mrb[0].mxu0
      %v610 = vadd.f32 %v363, %v609
      %v611 = vpop.f32.mrb[0].mxu0
      %v612 = vpop.f32.mrb[0].mxu0
      %v613 = vadd.f32 %v363, %v612
      %v614 = vpop.f32.mrb[0].mxu0
      %615 = vmatprep.mubr.bf16.mxu0 0
      %616 = vmatmul.mubr.bf16.gmra.mrb[0].mxu0 %v482
      %v617 = vpop.f32.mrb[0].mxu0
      %v618 = vadd.f32 %v363, %v617
      %v619 = vpop.f32.mrb[0].mxu0
      %v620 = vpop.f32.mrb[0].mxu0
      %v621 = vadd.f32 %v363, %v620
      %v622 = vpop.f32.mrb[0].mxu0
      %623 = vmatprep.mubr.bf16.mxu0 0
      %624 = vmatmul.mubr.bf16.gmra.mrb[0].mxu0 %v485
      %v625 = vpop.f32.mrb[0].mxu0
      %v626 = vadd.f32 %v363, %v625
      %v627 = vpop.f32.mrb[0].mxu0
      %v628 = vpop.f32.mrb[0].mxu0
      %v629 = vadd.f32 %v363, %v628
      %v630 = vpop.f32.mrb[0].mxu0
      %631 = vmatprep.mubr.bf16.mxu0 0
      %632 = vmatmul.mubr.bf16.gmra.mrb[0].mxu0 %v488
      %v633 = vpop.f32.mrb[0].mxu0
      %v634 = vadd.f32 %v363, %v633
      %v635 = vpop.f32.mrb[0].mxu0
      %v636 = vpop.f32.mrb[0].mxu0
      %v637 = vadd.f32 %v363, %v636
      %v638 = vpop.f32.mrb[0].mxu0
      %639 = vmatprep.mubr.bf16.mxu0 0
      %640 = vmatmul.mubr.bf16.gmra.mrb[0].mxu0 %v491
      %v641 = vpop.f32.mrb[0].mxu0
      %v642 = vadd.f32 %v363, %v641
      %v643 = vpop.f32.mrb[0].mxu0
      %v644 = vpop.f32.mrb[0].mxu0
      %v645 = vadd.f32 %v363, %v644
      %v646 = vpop.f32.mrb[0].mxu0
      %647 = vmatprep.mubr.bf16.mxu0 0
      %648 = vmatmul.mubr.bf16.gmra.mrb[0].mxu0 %v494
      %v649 = vpop.f32.mrb[0].mxu0
      %v650 = vadd.f32 %v363, %v649
      %v651 = vpop.f32.mrb[0].mxu0
      %v652 = vpop.f32.mrb[0].mxu0
      %v653 = vadd.f32 %v363, %v652
      %v654 = vpop.f32.mrb[0].mxu0
      %655 = vmatprep.mubr.bf16.mxu0 0
      %656 = vmatmul.mubr.bf16.gmra.mrb[0].mxu0 %v497
      %v657 = vpop.f32.mrb[0].mxu0
      %v658 = vadd.f32 %v363, %v657
      %v659 = vpop.f32.mrb[0].mxu0
      %v660 = vpop.f32.mrb[0].mxu0
      %v661 = vadd.f32 %v363, %v660
      %v662 = vpop.f32.mrb[0].mxu0
      %663 = vdwg.mxu0
      %v664 = vmax.f32 %v538, 0.0
      %v665 = vmax.f32 %v541, 0.0
      %v666 = vmax.f32 %v546, 0.0
      %v667 = vmax.f32 %v549, 0.0
      %v668 = vmax.f32 %v554, 0.0
      %v669 = vmax.f32 %v557, 0.0
      %v670 = vmax.f32 %v562, 0.0
      %v671 = vmax.f32 %v565, 0.0
      %v672 = vmax.f32 %v570, 0.0
      %v673 = vmax.f32 %v573, 0.0
      %v674 = vmax.f32 %v578, 0.0
      %v675 = vmax.f32 %v581, 0.0
      %v676 = vmax.f32 %v586, 0.0
      %v677 = vmax.f32 %v589, 0.0
      %v678 = vmax.f32 %v594, 0.0
      %v679 = vmax.f32 %v597, 0.0
      %v680 = vmax.f32 %v602, 0.0
      %v681 = vmax.f32 %v605, 0.0
      %v682 = vmax.f32 %v610, 0.0
      %v683 = vmax.f32 %v613, 0.0
      %v684 = vmax.f32 %v618, 0.0
      %v685 = vmax.f32 %v621, 0.0
      %v686 = vmax.f32 %v626, 0.0
      %v687 = vmax.f32 %v629, 0.0
      %v688 = vmax.f32 %v634, 0.0
      %v689 = vmax.f32 %v637, 0.0
      %v690 = vmax.f32 %v642, 0.0
      %v691 = vmax.f32 %v645, 0.0
      %v692 = vmax.f32 %v650, 0.0
      %v693 = vmax.f32 %v653, 0.0
      %v694 = vmax.f32 %v658, 0.0
      %v695 = vmax.f32 %v661, 0.0
      %v696 = vpack.c.bf16 %v665, %v664
      %v697 = vpack.c.bf16 %v667, %v666
      %v698 = vpack.c.bf16 %v669, %v668
      %v699 = vpack.c.bf16 %v671, %v670
      %v700 = vpack.c.bf16 %v673, %v672
      %v701 = vpack.c.bf16 %v675, %v674
      %v702 = vpack.c.bf16 %v677, %v676
      %v703 = vpack.c.bf16 %v679, %v678
      %v704 = vpack.c.bf16 %v681, %v680
      %v705 = vpack.c.bf16 %v683, %v682
      %v706 = vpack.c.bf16 %v685, %v684
      %v707 = vpack.c.bf16 %v687, %v686
      %v708 = vpack.c.bf16 %v689, %v688
      %v709 = vpack.c.bf16 %v691, %v690
      %v710 = vpack.c.bf16 %v693, %v692
      %v711 = vpack.c.bf16 %v695, %v694
      %v712 = vld [vmem:[%s3] sm:$0xf]
      %v713 = vld [vmem:[%s3 + $0x4] sm:$0xf]
      %v714 = vld [vmem:[%s3 + $0x8] sm:$0xf]
      %v715 = vld [vmem:[%s3 + $0xc] sm:$0xf]
      %v716 = vld [vmem:[%s3 + $0x10] sm:$0xf]
      %v717 = vld [vmem:[%s3 + $0x14] sm:$0xf]
      %v718 = vld [vmem:[%s3 + $0x18] sm:$0xf]
      %v719 = vld [vmem:[%s3 + $0x1c] sm:$0xf]
      %v720 = vld [vmem:[%s3 + $0x20] sm:$0xf]
      %v721 = vld [vmem:[%s3 + $0x24] sm:$0xf]
      %v722 = vld [vmem:[%s3 + $0x28] sm:$0xf]
      %v723 = vld [vmem:[%s3 + $0x2c] sm:$0xf]
      %v724 = vld [vmem:[%s3 + $0x30] sm:$0xf]
      %v725 = vld [vmem:[%s3 + $0x34] sm:$0xf]
      %v726 = vld [vmem:[%s3 + $0x38] sm:$0xf]
      %v727 = vld [vmem:[%s3 + $0x3c] sm:$0xf]
      %s728 = scalar_lea.vmem %s310, 8
      %v729 = vld [vmem:[%s728] sm:$0xf]
      %v730 = vld [vmem:[%s728 + $0x4] sm:$0xf]
      %v731 = vld [vmem:[%s728 + $0x20] sm:$0xf]
      %v732 = vld [vmem:[%s728 + $0x24] sm:$0xf]
      %v733 = vld [vmem:[%s728 + $0x40] sm:$0xf]
      %v734 = vld [vmem:[%s728 + $0x44] sm:$0xf]
      %v735 = vld [vmem:[%s728 + $0x60] sm:$0xf]
      %v736 = vld [vmem:[%s728 + $0x64] sm:$0xf]
      %v737 = vld [vmem:[%s728 + $0x80] sm:$0xf]
      %v738 = vld [vmem:[%s728 + $0x84] sm:$0xf]
      %v739 = vld [vmem:[%s728 + $0xa0] sm:$0xf]
      %v740 = vld [vmem:[%s728 + $0xa4] sm:$0xf]
      %v741 = vld [vmem:[%s728 + $0xc0] sm:$0xf]
      %v742 = vld [vmem:[%s728 + $0xc4] sm:$0xf]
      %v743 = vld [vmem:[%s728 + $0xe0] sm:$0xf]
      %v744 = vld [vmem:[%s728 + $0xe4] sm:$0xf]
      %v745 = vld [vmem:[%s728 + $0x100] sm:$0xf]
      %v746 = vld [vmem:[%s728 + $0x104] sm:$0xf]
      %v747 = vld [vmem:[%s728 + $0x120] sm:$0xf]
      %v748 = vld [vmem:[%s728 + $0x124] sm:$0xf]
      %v749 = vld [vmem:[%s728 + $0x140] sm:$0xf]
      %v750 = vld [vmem:[%s728 + $0x144] sm:$0xf]
      %v751 = vld [vmem:[%s728 + $0x160] sm:$0xf]
      %v752 = vld [vmem:[%s728 + $0x164] sm:$0xf]
      %v753 = vld [vmem:[%s728 + $0x180] sm:$0xf]
      %v754 = vld [vmem:[%s728 + $0x184] sm:$0xf]
      %v755 = vld [vmem:[%s728 + $0x1a0] sm:$0xf]
      %v756 = vld [vmem:[%s728 + $0x1a4] sm:$0xf]
      %v757 = vld [vmem:[%s728 + $0x1c0] sm:$0xf]
      %v758 = vld [vmem:[%s728 + $0x1c4] sm:$0xf]
      %v759 = vld [vmem:[%s728 + $0x1e0] sm:$0xf]
      %v760 = vld [vmem:[%s728 + $0x1e4] sm:$0xf]
      %v793 = vunpack.c.l.b16 %v729
      %v794 = vunpack.c.l.b16 %v730
      %v795 = vunpack.c.l.b16 %v731
      %v796 = vunpack.c.l.b16 %v732
      %v797 = vunpack.c.l.b16 %v733
      %v798 = vunpack.c.l.b16 %v734
      %v799 = vunpack.c.l.b16 %v735
      %v800 = vunpack.c.l.b16 %v736
      %v801 = vunpack.c.l.b16 %v737
      %v802 = vunpack.c.l.b16 %v738
      %v803 = vunpack.c.l.b16 %v739
      %v804 = vunpack.c.l.b16 %v740
      %v805 = vunpack.c.l.b16 %v741
      %v806 = vunpack.c.l.b16 %v742
      %v807 = vunpack.c.l.b16 %v743
      %v808 = vunpack.c.l.b16 %v744
      %v809 = vunpack.c.l.b16 %v745
      %v810 = vunpack.c.l.b16 %v746
      %v811 = vunpack.c.l.b16 %v747
      %v812 = vunpack.c.l.b16 %v748
      %v813 = vunpack.c.l.b16 %v749
      %v814 = vunpack.c.l.b16 %v750
      %v815 = vunpack.c.l.b16 %v751
      %v816 = vunpack.c.l.b16 %v752
      %v817 = vunpack.c.l.b16 %v753
      %v818 = vunpack.c.l.b16 %v754
      %v819 = vunpack.c.l.b16 %v755
      %v820 = vunpack.c.l.b16 %v756
      %v821 = vunpack.c.l.b16 %v757
      %v822 = vunpack.c.l.b16 %v758
      %v823 = vunpack.c.l.b16 %v759
      %v824 = vunpack.c.l.b16 %v760
      %v825 = vpack.c.b16 %v794, %v793
      %v826 = vpack.c.b16 %v796, %v795
      %v827 = vpack.c.b16 %v798, %v797
      %v828 = vpack.c.b16 %v800, %v799
      %v829 = vpack.c.b16 %v802, %v801
      %v830 = vpack.c.b16 %v804, %v803
      %v831 = vpack.c.b16 %v806, %v805
      %v832 = vpack.c.b16 %v808, %v807
      %v833 = vpack.c.b16 %v810, %v809
      %v834 = vpack.c.b16 %v812, %v811
      %v835 = vpack.c.b16 %v814, %v813
      %v836 = vpack.c.b16 %v816, %v815
      %v837 = vpack.c.b16 %v818, %v817
      %v838 = vpack.c.b16 %v820, %v819
      %v839 = vpack.c.b16 %v822, %v821
      %v840 = vpack.c.b16 %v824, %v823
      %v842 = vsel %vm450, %v825, 0
      %v845 = vsel %vm450, %v826, 0
      %v848 = vsel %vm450, %v827, 0
      %v851 = vsel %vm450, %v828, 0
      %v854 = vsel %vm450, %v829, 0
      %v857 = vsel %vm450, %v830, 0
      %v860 = vsel %vm450, %v831, 0
      %v863 = vsel %vm450, %v832, 0
      %v866 = vsel %vm450, %v833, 0
      %v869 = vsel %vm450, %v834, 0
      %v872 = vsel %vm450, %v835, 0
      %v875 = vsel %vm450, %v836, 0
      %v878 = vsel %vm450, %v837, 0
      %v881 = vsel %vm450, %v838, 0
      %v884 = vsel %vm450, %v839, 0
      %v887 = vsel %vm450, %v840, 0
      %889 = vmatprep.subr.bf16.mxu0 0
      %890 = vmatpush1.bf16.msra.mxu0 %v501
      %891 = vmatprep.subr.bf16.mxu0 0
      %892 = vmatpush1.bf16.msra.mxu0 0
      %893 = vmatprep.subr.bf16.mxu0 0
      %894 = vmatpush1.bf16.msra.mxu0 0
      %895 = vmatprep.subr.bf16.mxu0 0
      %896 = vmatpush1.bf16.msra.mxu0 0
      %897 = vmatprep.subr.bf16.mxu0 0
      %898 = vmatpush1.bf16.msra.mxu0 0
      %899 = vmatprep.subr.bf16.mxu0 0
      %900 = vmatpush1.bf16.msra.mxu0 0
      %901 = vmatprep.subr.bf16.mxu0 0
      %902 = vmatpush1.bf16.msra.mxu0 0
      %903 = vmatprep.subr.bf16.mxu0 0
      %904 = vmatpush1.bf16.msra.mxu0 0
      %905 = vmatprep.subr.bf16.mxu0 0
      %906 = vmatpush1.bf16.msra.mxu0 0
      %907 = vmatprep.subr.bf16.mxu0 0
      %908 = vmatpush1.bf16.msra.mxu0 0
      %909 = vmatprep.subr.bf16.mxu0 0
      %910 = vmatpush1.bf16.msra.mxu0 0
      %911 = vmatprep.subr.bf16.mxu0 0
      %912 = vmatpush1.bf16.msra.mxu0 0
      %913 = vmatprep.subr.bf16.mxu0 0
      %914 = vmatpush1.bf16.msra.mxu0 0
      %915 = vmatprep.subr.bf16.mxu0 0
      %916 = vmatpush1.bf16.msra.mxu0 0
      %917 = vmatprep.subr.bf16.mxu0 0
      %918 = vmatpush1.bf16.msra.mxu0 0
      %919 = vmatprep.subr.bf16.mxu0 0
      %920 = vmatpush1.bf16.msra.mxu0 0
      %921 = vmatprep.mubr.bf16.mxu0 0
      %922 = vmatmul.mubr.bf16.gmra.mrb[0].mxu0 %v842
      %v923 = vpop.f32.mrb[0].mxu0
      %v924 = vadd.f32 %v363, %v923
      %v925 = vpop.f32.mrb[0].mxu0
      %v926 = vpop.f32.mrb[0].mxu0
      %v927 = vadd.f32 %v363, %v926
      %v928 = vpop.f32.mrb[0].mxu0
      %929 = vmatprep.mubr.bf16.mxu0 0
      %930 = vmatmul.mubr.bf16.gmra.mrb[0].mxu0 %v845
      %v931 = vpop.f32.mrb[0].mxu0
      %v932 = vadd.f32 %v363, %v931
      %v933 = vpop.f32.mrb[0].mxu0
      %v934 = vpop.f32.mrb[0].mxu0
      %v935 = vadd.f32 %v363, %v934
      %v936 = vpop.f32.mrb[0].mxu0
      %937 = vmatprep.mubr.bf16.mxu0 0
      %938 = vmatmul.mubr.bf16.gmra.mrb[0].mxu0 %v848
      %v939 = vpop.f32.mrb[0].mxu0
      %v940 = vadd.f32 %v363, %v939
      %v941 = vpop.f32.mrb[0].mxu0
      %v942 = vpop.f32.mrb[0].mxu0
      %v943 = vadd.f32 %v363, %v942
      %v944 = vpop.f32.mrb[0].mxu0
      %945 = vmatprep.mubr.bf16.mxu0 0
      %946 = vmatmul.mubr.bf16.gmra.mrb[0].mxu0 %v851
      %v947 = vpop.f32.mrb[0].mxu0
      %v948 = vadd.f32 %v363, %v947
      %v949 = vpop.f32.mrb[0].mxu0
      %v950 = vpop.f32.mrb[0].mxu0
      %v951 = vadd.f32 %v363, %v950
      %v952 = vpop.f32.mrb[0].mxu0
      %953 = vmatprep.mubr.bf16.mxu0 0
      %954 = vmatmul.mubr.bf16.gmra.mrb[0].mxu0 %v854
      %v955 = vpop.f32.mrb[0].mxu0
      %v956 = vadd.f32 %v363, %v955
      %v957 = vpop.f32.mrb[0].mxu0
      %v958 = vpop.f32.mrb[0].mxu0
      %v959 = vadd.f32 %v363, %v958
      %v960 = vpop.f32.mrb[0].mxu0
      %961 = vmatprep.mubr.bf16.mxu0 0
      %962 = vmatmul.mubr.bf16.gmra.mrb[0].mxu0 %v857
      %v963 = vpop.f32.mrb[0].mxu0
      %v964 = vadd.f32 %v363, %v963
      %v965 = vpop.f32.mrb[0].mxu0
      %v966 = vpop.f32.mrb[0].mxu0
      %v967 = vadd.f32 %v363, %v966
      %v968 = vpop.f32.mrb[0].mxu0
      %969 = vmatprep.mubr.bf16.mxu0 0
      %970 = vmatmul.mubr.bf16.gmra.mrb[0].mxu0 %v860
      %v971 = vpop.f32.mrb[0].mxu0
      %v972 = vadd.f32 %v363, %v971
      %v973 = vpop.f32.mrb[0].mxu0
      %v974 = vpop.f32.mrb[0].mxu0
      %v975 = vadd.f32 %v363, %v974
      %v976 = vpop.f32.mrb[0].mxu0
      %977 = vmatprep.mubr.bf16.mxu0 0
      %978 = vmatmul.mubr.bf16.gmra.mrb[0].mxu0 %v863
      %v979 = vpop.f32.mrb[0].mxu0
      %v980 = vadd.f32 %v363, %v979
      %v981 = vpop.f32.mrb[0].mxu0
      %v982 = vpop.f32.mrb[0].mxu0
      %v983 = vadd.f32 %v363, %v982
      %v984 = vpop.f32.mrb[0].mxu0
      %985 = vmatprep.mubr.bf16.mxu0 0
      %986 = vmatmul.mubr.bf16.gmra.mrb[0].mxu0 %v866
      %v987 = vpop.f32.mrb[0].mxu0
      %v988 = vadd.f32 %v363, %v987
      %v989 = vpop.f32.mrb[0].mxu0
      %v990 = vpop.f32.mrb[0].mxu0
      %v991 = vadd.f32 %v363, %v990
      %v992 = vpop.f32.mrb[0].mxu0
      %993 = vmatprep.mubr.bf16.mxu0 0
      %994 = vmatmul.mubr.bf16.gmra.mrb[0].mxu0 %v869
      %v995 = vpop.f32.mrb[0].mxu0
      %v996 = vadd.f32 %v363, %v995
      %v997 = vpop.f32.mrb[0].mxu0
      %v998 = vpop.f32.mrb[0].mxu0
      %v999 = vadd.f32 %v363, %v998
      %v1000 = vpop.f32.mrb[0].mxu0
      %1001 = vmatprep.mubr.bf16.mxu0 0
      %1002 = vmatmul.mubr.bf16.gmra.mrb[0].mxu0 %v872
      %v1003 = vpop.f32.mrb[0].mxu0
      %v1004 = vadd.f32 %v363, %v1003
      %v1005 = vpop.f32.mrb[0].mxu0
      %v1006 = vpop.f32.mrb[0].mxu0
      %v1007 = vadd.f32 %v363, %v1006
      %v1008 = vpop.f32.mrb[0].mxu0
      %1009 = vmatprep.mubr.bf16.mxu0 0
      %1010 = vmatmul.mubr.bf16.gmra.mrb[0].mxu0 %v875
      %v1011 = vpop.f32.mrb[0].mxu0
      %v1012 = vadd.f32 %v363, %v1011
      %v1013 = vpop.f32.mrb[0].mxu0
      %v1014 = vpop.f32.mrb[0].mxu0
      %v1015 = vadd.f32 %v363, %v1014
      %v1016 = vpop.f32.mrb[0].mxu0
      %1017 = vmatprep.mubr.bf16.mxu0 0
      %1018 = vmatmul.mubr.bf16.gmra.mrb[0].mxu0 %v878
      %v1019 = vpop.f32.mrb[0].mxu0
      %v1020 = vadd.f32 %v363, %v1019
      %v1021 = vpop.f32.mrb[0].mxu0
      %v1022 = vpop.f32.mrb[0].mxu0
      %v1023 = vadd.f32 %v363, %v1022
      %v1024 = vpop.f32.mrb[0].mxu0
      %1025 = vmatprep.mubr.bf16.mxu0 0
      %1026 = vmatmul.mubr.bf16.gmra.mrb[0].mxu0 %v881
      %v1027 = vpop.f32.mrb[0].mxu0
      %v1028 = vadd.f32 %v363, %v1027
      %v1029 = vpop.f32.mrb[0].mxu0
      %v1030 = vpop.f32.mrb[0].mxu0
      %v1031 = vadd.f32 %v363, %v1030
      %v1032 = vpop.f32.mrb[0].mxu0
      %1033 = vmatprep.mubr.bf16.mxu0 0
      %1034 = vmatmul.mubr.bf16.gmra.mrb[0].mxu0 %v884
      %v1035 = vpop.f32.mrb[0].mxu0
      %v1036 = vadd.f32 %v363, %v1035
      %v1037 = vpop.f32.mrb[0].mxu0
      %v1038 = vpop.f32.mrb[0].mxu0
      %v1039 = vadd.f32 %v363, %v1038
      %v1040 = vpop.f32.mrb[0].mxu0
      %1041 = vmatprep.mubr.bf16.mxu0 0
      %1042 = vmatmul.mubr.bf16.gmra.mrb[0].mxu0 %v887
      %v1043 = vpop.f32.mrb[0].mxu0
      %v1044 = vadd.f32 %v363, %v1043
      %v1045 = vpop.f32.mrb[0].mxu0
      %v1046 = vpop.f32.mrb[0].mxu0
      %v1047 = vadd.f32 %v363, %v1046
      %v1048 = vpop.f32.mrb[0].mxu0
      %1049 = vdwg.mxu0
      %v1050 = vmax.f32 %v924, 0.0
      %v1051 = vmax.f32 %v927, 0.0
      %v1052 = vmax.f32 %v932, 0.0
      %v1053 = vmax.f32 %v935, 0.0
      %v1054 = vmax.f32 %v940, 0.0
      %v1055 = vmax.f32 %v943, 0.0
      %v1056 = vmax.f32 %v948, 0.0
      %v1057 = vmax.f32 %v951, 0.0
      %v1058 = vmax.f32 %v956, 0.0
      %v1059 = vmax.f32 %v959, 0.0
      %v1060 = vmax.f32 %v964, 0.0
      %v1061 = vmax.f32 %v967, 0.0
      %v1062 = vmax.f32 %v972, 0.0
      %v1063 = vmax.f32 %v975, 0.0
      %v1064 = vmax.f32 %v980, 0.0
      %v1065 = vmax.f32 %v983, 0.0
      %v1066 = vmax.f32 %v988, 0.0
      %v1067 = vmax.f32 %v991, 0.0
      %v1068 = vmax.f32 %v996, 0.0
      %v1069 = vmax.f32 %v999, 0.0
      %v1070 = vmax.f32 %v1004, 0.0
      %v1071 = vmax.f32 %v1007, 0.0
      %v1072 = vmax.f32 %v1012, 0.0
      %v1073 = vmax.f32 %v1015, 0.0
      %v1074 = vmax.f32 %v1020, 0.0
      %v1075 = vmax.f32 %v1023, 0.0
      %v1076 = vmax.f32 %v1028, 0.0
      %v1077 = vmax.f32 %v1031, 0.0
      %v1078 = vmax.f32 %v1036, 0.0
      %v1079 = vmax.f32 %v1039, 0.0
      %v1080 = vmax.f32 %v1044, 0.0
      %v1081 = vmax.f32 %v1047, 0.0
      %v1082 = vpack.c.bf16 %v1051, %v1050
      %v1083 = vpack.c.bf16 %v1053, %v1052
      %v1084 = vpack.c.bf16 %v1055, %v1054
      %v1085 = vpack.c.bf16 %v1057, %v1056
      %v1086 = vpack.c.bf16 %v1059, %v1058
      %v1087 = vpack.c.bf16 %v1061, %v1060
      %v1088 = vpack.c.bf16 %v1063, %v1062
      %v1089 = vpack.c.bf16 %v1065, %v1064
      %v1090 = vpack.c.bf16 %v1067, %v1066
      %v1091 = vpack.c.bf16 %v1069, %v1068
      %v1092 = vpack.c.bf16 %v1071, %v1070
      %v1093 = vpack.c.bf16 %v1073, %v1072
      %v1094 = vpack.c.bf16 %v1075, %v1074
      %v1095 = vpack.c.bf16 %v1077, %v1076
      %v1096 = vpack.c.bf16 %v1079, %v1078
      %v1097 = vpack.c.bf16 %v1081, %v1080
      %s1098 = scalar_lea.vmem %s3, 64
      %v1099 = vld [vmem:[%s1098] sm:$0xf]
      %v1100 = vld [vmem:[%s1098 + $0x4] sm:$0xf]
      %v1101 = vld [vmem:[%s1098 + $0x8] sm:$0xf]
      %v1102 = vld [vmem:[%s1098 + $0xc] sm:$0xf]
      %v1103 = vld [vmem:[%s1098 + $0x10] sm:$0xf]
      %v1104 = vld [vmem:[%s1098 + $0x14] sm:$0xf]
      %v1105 = vld [vmem:[%s1098 + $0x18] sm:$0xf]
      %v1106 = vld [vmem:[%s1098 + $0x1c] sm:$0xf]
      %v1107 = vld [vmem:[%s1098 + $0x20] sm:$0xf]
      %v1108 = vld [vmem:[%s1098 + $0x24] sm:$0xf]
      %v1109 = vld [vmem:[%s1098 + $0x28] sm:$0xf]
      %v1110 = vld [vmem:[%s1098 + $0x2c] sm:$0xf]
      %v1111 = vld [vmem:[%s1098 + $0x30] sm:$0xf]
      %v1112 = vld [vmem:[%s1098 + $0x34] sm:$0xf]
      %v1113 = vld [vmem:[%s1098 + $0x38] sm:$0xf]
      %v1114 = vld [vmem:[%s1098 + $0x3c] sm:$0xf]
      %v1131 = vunpack.c.l.b16 %v1099
      %v1132 = vunpack.c.l.b16 %v1100
      %v1133 = vunpack.c.l.b16 %v1101
      %v1134 = vunpack.c.l.b16 %v1102
      %v1135 = vunpack.c.l.b16 %v1103
      %v1136 = vunpack.c.l.b16 %v1104
      %v1137 = vunpack.c.l.b16 %v1105
      %v1138 = vunpack.c.l.b16 %v1106
      %v1139 = vunpack.c.l.b16 %v1107
      %v1140 = vunpack.c.l.b16 %v1108
      %v1141 = vunpack.c.l.b16 %v1109
      %v1142 = vunpack.c.l.b16 %v1110
      %v1143 = vunpack.c.l.b16 %v1111
      %v1144 = vunpack.c.l.b16 %v1112
      %v1145 = vunpack.c.l.b16 %v1113
      %v1146 = vunpack.c.l.b16 %v1114
      %v1147 = vpack.c.b16 %v1132, %v1131
      %v1148 = vpack.c.b16 %v1134, %v1133
      %v1149 = vpack.c.b16 %v1136, %v1135
      %v1150 = vpack.c.b16 %v1138, %v1137
      %v1151 = vpack.c.b16 %v1140, %v1139
      %v1152 = vpack.c.b16 %v1142, %v1141
      %v1153 = vpack.c.b16 %v1144, %v1143
      %v1154 = vpack.c.b16 %v1146, %v1145
      %1163 = vmatprep.subr.bf16.mxu0 0
      %1164 = vmatpush1.bf16.msra.mxu0 %v1147
      %1165 = vmatprep.subr.bf16.mxu0 0
      %1166 = vmatpush1.bf16.msra.mxu0 %v1148
      %1167 = vmatprep.subr.bf16.mxu0 0
      %1168 = vmatpush1.bf16.msra.mxu0 %v1149
      %1169 = vmatprep.subr.bf16.mxu0 0
      %1170 = vmatpush1.bf16.msra.mxu0 %v1150
      %1171 = vmatprep.subr.bf16.mxu0 0
      %1172 = vmatpush1.bf16.msra.mxu0 %v1151
      %1173 = vmatprep.subr.bf16.mxu0 0
      %1174 = vmatpush1.bf16.msra.mxu0 %v1152
      %1175 = vmatprep.subr.bf16.mxu0 0
      %1176 = vmatpush1.bf16.msra.mxu0 %v1153
      %1177 = vmatprep.subr.bf16.mxu0 0
      %1178 = vmatpush1.bf16.msra.mxu0 %v1154
      %1179 = vmatprep.subr.bf16.mxu0 0
      %1180 = vmatpush1.bf16.msra.mxu0 0
      %1181 = vmatprep.subr.bf16.mxu0 0
      %1182 = vmatpush1.bf16.msra.mxu0 0
      %1183 = vmatprep.subr.bf16.mxu0 0
      %1184 = vmatpush1.bf16.msra.mxu0 0
      %1185 = vmatprep.subr.bf16.mxu0 0
      %1186 = vmatpush1.bf16.msra.mxu0 0
      %1187 = vmatprep.subr.bf16.mxu0 0
      %1188 = vmatpush1.bf16.msra.mxu0 0
      %1189 = vmatprep.subr.bf16.mxu0 0
      %1190 = vmatpush1.bf16.msra.mxu0 0
      %1191 = vmatprep.subr.bf16.mxu0 0
      %1192 = vmatpush1.bf16.msra.mxu0 0
      %1193 = vmatprep.subr.bf16.mxu0 0
      %1194 = vmatpush1.bf16.msra.mxu0 0
      %1195 = vmatprep.mubr.bf16.mxu0 0
      %1196 = vmatmul.mubr.bf16.gmra.mrb[0].mxu0 %v1082
      %v1197 = vpop.f32.mrb[0].mxu0
      %v1198 = vadd.f32 0.0, %v1197
      %v1199 = vpop.f32.mrb[0].mxu0
      %v1200 = vpop.f32.mrb[0].mxu0
      %v1201 = vadd.f32 0.0, %v1200
      %v1202 = vpop.f32.mrb[0].mxu0
      %1203 = vmatprep.mubr.bf16.mxu0 0
      %1204 = vmatmul.mubr.bf16.gmra.mrb[0].mxu0 %v1083
      %v1205 = vpop.f32.mrb[0].mxu0
      %v1206 = vadd.f32 0.0, %v1205
      %v1207 = vpop.f32.mrb[0].mxu0
      %v1208 = vpop.f32.mrb[0].mxu0
      %v1209 = vadd.f32 0.0, %v1208
      %v1210 = vpop.f32.mrb[0].mxu0
      %1211 = vmatprep.mubr.bf16.mxu0 0
      %1212 = vmatmul.mubr.bf16.gmra.mrb[0].mxu0 %v1084
      %v1213 = vpop.f32.mrb[0].mxu0
      %v1214 = vadd.f32 0.0, %v1213
      %v1215 = vpop.f32.mrb[0].mxu0
      %v1216 = vpop.f32.mrb[0].mxu0
      %v1217 = vadd.f32 0.0, %v1216
      %v1218 = vpop.f32.mrb[0].mxu0
      %1219 = vmatprep.mubr.bf16.mxu0 0
      %1220 = vmatmul.mubr.bf16.gmra.mrb[0].mxu0 %v1085
      %v1221 = vpop.f32.mrb[0].mxu0
      %v1222 = vadd.f32 0.0, %v1221
      %v1223 = vpop.f32.mrb[0].mxu0
      %v1224 = vpop.f32.mrb[0].mxu0
      %v1225 = vadd.f32 0.0, %v1224
      %v1226 = vpop.f32.mrb[0].mxu0
      %1227 = vmatprep.mubr.bf16.mxu0 0
      %1228 = vmatmul.mubr.bf16.gmra.mrb[0].mxu0 %v1086
      %v1229 = vpop.f32.mrb[0].mxu0
      %v1230 = vadd.f32 0.0, %v1229
      %v1231 = vpop.f32.mrb[0].mxu0
      %v1232 = vpop.f32.mrb[0].mxu0
      %v1233 = vadd.f32 0.0, %v1232
      %v1234 = vpop.f32.mrb[0].mxu0
      %1235 = vmatprep.mubr.bf16.mxu0 0
      %1236 = vmatmul.mubr.bf16.gmra.mrb[0].mxu0 %v1087
      %v1237 = vpop.f32.mrb[0].mxu0
      %v1238 = vadd.f32 0.0, %v1237
      %v1239 = vpop.f32.mrb[0].mxu0
      %v1240 = vpop.f32.mrb[0].mxu0
      %v1241 = vadd.f32 0.0, %v1240
      %v1242 = vpop.f32.mrb[0].mxu0
      %1243 = vmatprep.mubr.bf16.mxu0 0
      %1244 = vmatmul.mubr.bf16.gmra.mrb[0].mxu0 %v1088
      %v1245 = vpop.f32.mrb[0].mxu0
      %v1246 = vadd.f32 0.0, %v1245
      %v1247 = vpop.f32.mrb[0].mxu0
      %v1248 = vpop.f32.mrb[0].mxu0
      %v1249 = vadd.f32 0.0, %v1248
      %v1250 = vpop.f32.mrb[0].mxu0
      %1251 = vmatprep.mubr.bf16.mxu0 0
      %1252 = vmatmul.mubr.bf16.gmra.mrb[0].mxu0 %v1089
      %v1253 = vpop.f32.mrb[0].mxu0
      %v1254 = vadd.f32 0.0, %v1253
      %v1255 = vpop.f32.mrb[0].mxu0
      %v1256 = vpop.f32.mrb[0].mxu0
      %v1257 = vadd.f32 0.0, %v1256
      %v1258 = vpop.f32.mrb[0].mxu0
      %1259 = vmatprep.mubr.bf16.mxu0 0
      %1260 = vmatmul.mubr.bf16.gmra.mrb[0].mxu0 %v1090
      %v1261 = vpop.f32.mrb[0].mxu0
      %v1262 = vadd.f32 0.0, %v1261
      %v1263 = vpop.f32.mrb[0].mxu0
      %v1264 = vpop.f32.mrb[0].mxu0
      %v1265 = vadd.f32 0.0, %v1264
      %v1266 = vpop.f32.mrb[0].mxu0
      %1267 = vmatprep.mubr.bf16.mxu0 0
      %1268 = vmatmul.mubr.bf16.gmra.mrb[0].mxu0 %v1091
      %v1269 = vpop.f32.mrb[0].mxu0
      %v1270 = vadd.f32 0.0, %v1269
      %v1271 = vpop.f32.mrb[0].mxu0
      %v1272 = vpop.f32.mrb[0].mxu0
      %v1273 = vadd.f32 0.0, %v1272
      %v1274 = vpop.f32.mrb[0].mxu0
      %1275 = vmatprep.mubr.bf16.mxu0 0
      %1276 = vmatmul.mubr.bf16.gmra.mrb[0].mxu0 %v1092
      %v1277 = vpop.f32.mrb[0].mxu0
      %v1278 = vadd.f32 0.0, %v1277
      %v1279 = vpop.f32.mrb[0].mxu0
      %v1280 = vpop.f32.mrb[0].mxu0
      %v1281 = vadd.f32 0.0, %v1280
      %v1282 = vpop.f32.mrb[0].mxu0
      %1283 = vmatprep.mubr.bf16.mxu0 0
      %1284 = vmatmul.mubr.bf16.gmra.mrb[0].mxu0 %v1093
      %v1285 = vpop.f32.mrb[0].mxu0
      %v1286 = vadd.f32 0.0, %v1285
      %v1287 = vpop.f32.mrb[0].mxu0
      %v1288 = vpop.f32.mrb[0].mxu0
      %v1289 = vadd.f32 0.0, %v1288
      %v1290 = vpop.f32.mrb[0].mxu0
      %1291 = vmatprep.mubr.bf16.mxu0 0
      %1292 = vmatmul.mubr.bf16.gmra.mrb[0].mxu0 %v1094
      %v1293 = vpop.f32.mrb[0].mxu0
      %v1294 = vadd.f32 0.0, %v1293
      %v1295 = vpop.f32.mrb[0].mxu0
      %v1296 = vpop.f32.mrb[0].mxu0
      %v1297 = vadd.f32 0.0, %v1296
      %v1298 = vpop.f32.mrb[0].mxu0
      %1299 = vmatprep.mubr.bf16.mxu0 0
      %1300 = vmatmul.mubr.bf16.gmra.mrb[0].mxu0 %v1095
      %v1301 = vpop.f32.mrb[0].mxu0
      %v1302 = vadd.f32 0.0, %v1301
      %v1303 = vpop.f32.mrb[0].mxu0
      %v1304 = vpop.f32.mrb[0].mxu0
      %v1305 = vadd.f32 0.0, %v1304
      %v1306 = vpop.f32.mrb[0].mxu0
      %1307 = vmatprep.mubr.bf16.mxu0 0
      %1308 = vmatmul.mubr.bf16.gmra.mrb[0].mxu0 %v1096
      %v1309 = vpop.f32.mrb[0].mxu0
      %v1310 = vadd.f32 0.0, %v1309
      %v1311 = vpop.f32.mrb[0].mxu0
      %v1312 = vpop.f32.mrb[0].mxu0
      %v1313 = vadd.f32 0.0, %v1312
      %v1314 = vpop.f32.mrb[0].mxu0
      %1315 = vmatprep.mubr.bf16.mxu0 0
      %1316 = vmatmul.mubr.bf16.gmra.mrb[0].mxu0 %v1097
      %v1317 = vpop.f32.mrb[0].mxu0
      %v1318 = vadd.f32 0.0, %v1317
      %v1319 = vpop.f32.mrb[0].mxu0
      %v1320 = vpop.f32.mrb[0].mxu0
      %v1321 = vadd.f32 0.0, %v1320
      %v1322 = vpop.f32.mrb[0].mxu0
      %1323 = vdwg.mxu0
      %v1340 = vunpack.c.l.b16 %v712
      %v1341 = vunpack.c.l.b16 %v713
      %v1342 = vunpack.c.l.b16 %v714
      %v1343 = vunpack.c.l.b16 %v715
      %v1344 = vunpack.c.l.b16 %v716
      %v1345 = vunpack.c.l.b16 %v717
      %v1346 = vunpack.c.l.b16 %v718
      %v1347 = vunpack.c.l.b16 %v719
      %v1348 = vunpack.c.l.b16 %v720
      %v1349 = vunpack.c.l.b16 %v721
      %v1350 = vunpack.c.l.b16 %v722
      %v1351 = vunpack.c.l.b16 %v723
      %v1352 = vunpack.c.l.b16 %v724
      %v1353 = vunpack.c.l.b16 %v725
      %v1354 = vunpack.c.l.b16 %v726
      %v1355 = vunpack.c.l.b16 %v727
      %v1356 = vpack.c.b16 %v1341, %v1340
      %v1357 = vpack.c.b16 %v1343, %v1342
      %v1358 = vpack.c.b16 %v1345, %v1344
      %v1359 = vpack.c.b16 %v1347, %v1346
      %v1360 = vpack.c.b16 %v1349, %v1348
      %v1361 = vpack.c.b16 %v1351, %v1350
      %v1362 = vpack.c.b16 %v1353, %v1352
      %v1363 = vpack.c.b16 %v1355, %v1354
      %1372 = vmatprep.subr.bf16.mxu0 0
      %1373 = vmatpush1.bf16.msra.mxu0 %v1356
      %1374 = vmatprep.subr.bf16.mxu0 0
      %1375 = vmatpush1.bf16.msra.mxu0 %v1357
      %1376 = vmatprep.subr.bf16.mxu0 0
      %1377 = vmatpush1.bf16.msra.mxu0 %v1358
      %1378 = vmatprep.subr.bf16.mxu0 0
      %1379 = vmatpush1.bf16.msra.mxu0 %v1359
      %1380 = vmatprep.subr.bf16.mxu0 0
      %1381 = vmatpush1.bf16.msra.mxu0 %v1360
      %1382 = vmatprep.subr.bf16.mxu0 0
      %1383 = vmatpush1.bf16.msra.mxu0 %v1361
      %1384 = vmatprep.subr.bf16.mxu0 0
      %1385 = vmatpush1.bf16.msra.mxu0 %v1362
      %1386 = vmatprep.subr.bf16.mxu0 0
      %1387 = vmatpush1.bf16.msra.mxu0 %v1363
      %1388 = vmatprep.subr.bf16.mxu0 0
      %1389 = vmatpush1.bf16.msra.mxu0 0
      %1390 = vmatprep.subr.bf16.mxu0 0
      %1391 = vmatpush1.bf16.msra.mxu0 0
      %1392 = vmatprep.subr.bf16.mxu0 0
      %1393 = vmatpush1.bf16.msra.mxu0 0
      %1394 = vmatprep.subr.bf16.mxu0 0
      %1395 = vmatpush1.bf16.msra.mxu0 0
      %1396 = vmatprep.subr.bf16.mxu0 0
      %1397 = vmatpush1.bf16.msra.mxu0 0
      %1398 = vmatprep.subr.bf16.mxu0 0
      %1399 = vmatpush1.bf16.msra.mxu0 0
      %1400 = vmatprep.subr.bf16.mxu0 0
      %1401 = vmatpush1.bf16.msra.mxu0 0
      %1402 = vmatprep.subr.bf16.mxu0 0
      %1403 = vmatpush1.bf16.msra.mxu0 0
      %1404 = vmatprep.mubr.bf16.mxu0 0
      %1405 = vmatmul.mubr.bf16.gmra.mrb[0].mxu0 %v696
      %v1406 = vpop.f32.mrb[0].mxu0
      %v1407 = vadd.f32 %v1198, %v1406
      %v1408 = vpop.f32.mrb[0].mxu0
      %v1409 = vpop.f32.mrb[0].mxu0
      %v1410 = vadd.f32 %v1201, %v1409
      %v1411 = vpop.f32.mrb[0].mxu0
      %1412 = vmatprep.mubr.bf16.mxu0 0
      %1413 = vmatmul.mubr.bf16.gmra.mrb[0].mxu0 %v697
      %v1414 = vpop.f32.mrb[0].mxu0
      %v1415 = vadd.f32 %v1206, %v1414
      %v1416 = vpop.f32.mrb[0].mxu0
      %v1417 = vpop.f32.mrb[0].mxu0
      %v1418 = vadd.f32 %v1209, %v1417
      %v1419 = vpop.f32.mrb[0].mxu0
      %1420 = vmatprep.mubr.bf16.mxu0 0
      %1421 = vmatmul.mubr.bf16.gmra.mrb[0].mxu0 %v698
      %v1422 = vpop.f32.mrb[0].mxu0
      %v1423 = vadd.f32 %v1214, %v1422
      %v1424 = vpop.f32.mrb[0].mxu0
      %v1425 = vpop.f32.mrb[0].mxu0
      %v1426 = vadd.f32 %v1217, %v1425
      %v1427 = vpop.f32.mrb[0].mxu0
      %1428 = vmatprep.mubr.bf16.mxu0 0
      %1429 = vmatmul.mubr.bf16.gmra.mrb[0].mxu0 %v699
      %v1430 = vpop.f32.mrb[0].mxu0
      %v1431 = vadd.f32 %v1222, %v1430
      %v1432 = vpop.f32.mrb[0].mxu0
      %v1433 = vpop.f32.mrb[0].mxu0
      %v1434 = vadd.f32 %v1225, %v1433
      %v1435 = vpop.f32.mrb[0].mxu0
      %1436 = vmatprep.mubr.bf16.mxu0 0
      %1437 = vmatmul.mubr.bf16.gmra.mrb[0].mxu0 %v700
      %v1438 = vpop.f32.mrb[0].mxu0
      %v1439 = vadd.f32 %v1230, %v1438
      %v1440 = vpop.f32.mrb[0].mxu0
      %v1441 = vpop.f32.mrb[0].mxu0
      %v1442 = vadd.f32 %v1233, %v1441
      %v1443 = vpop.f32.mrb[0].mxu0
      %1444 = vmatprep.mubr.bf16.mxu0 0
      %1445 = vmatmul.mubr.bf16.gmra.mrb[0].mxu0 %v701
      %v1446 = vpop.f32.mrb[0].mxu0
      %v1447 = vadd.f32 %v1238, %v1446
      %v1448 = vpop.f32.mrb[0].mxu0
      %v1449 = vpop.f32.mrb[0].mxu0
      %v1450 = vadd.f32 %v1241, %v1449
      %v1451 = vpop.f32.mrb[0].mxu0
      %1452 = vmatprep.mubr.bf16.mxu0 0
      %1453 = vmatmul.mubr.bf16.gmra.mrb[0].mxu0 %v702
      %v1454 = vpop.f32.mrb[0].mxu0
      %v1455 = vadd.f32 %v1246, %v1454
      %v1456 = vpop.f32.mrb[0].mxu0
      %v1457 = vpop.f32.mrb[0].mxu0
      %v1458 = vadd.f32 %v1249, %v1457
      %v1459 = vpop.f32.mrb[0].mxu0
      %1460 = vmatprep.mubr.bf16.mxu0 0
      %1461 = vmatmul.mubr.bf16.gmra.mrb[0].mxu0 %v703
      %v1462 = vpop.f32.mrb[0].mxu0
      %v1463 = vadd.f32 %v1254, %v1462
      %v1464 = vpop.f32.mrb[0].mxu0
      %v1465 = vpop.f32.mrb[0].mxu0
      %v1466 = vadd.f32 %v1257, %v1465
      %v1467 = vpop.f32.mrb[0].mxu0
      %1468 = vmatprep.mubr.bf16.mxu0 0
      %1469 = vmatmul.mubr.bf16.gmra.mrb[0].mxu0 %v704
      %v1470 = vpop.f32.mrb[0].mxu0
      %v1471 = vadd.f32 %v1262, %v1470
      %v1472 = vpop.f32.mrb[0].mxu0
      %v1473 = vpop.f32.mrb[0].mxu0
      %v1474 = vadd.f32 %v1265, %v1473
      %v1475 = vpop.f32.mrb[0].mxu0
      %1476 = vmatprep.mubr.bf16.mxu0 0
      %1477 = vmatmul.mubr.bf16.gmra.mrb[0].mxu0 %v705
      %v1478 = vpop.f32.mrb[0].mxu0
      %v1479 = vadd.f32 %v1270, %v1478
      %v1480 = vpop.f32.mrb[0].mxu0
      %v1481 = vpop.f32.mrb[0].mxu0
      %v1482 = vadd.f32 %v1273, %v1481
      %v1483 = vpop.f32.mrb[0].mxu0
      %1484 = vmatprep.mubr.bf16.mxu0 0
      %1485 = vmatmul.mubr.bf16.gmra.mrb[0].mxu0 %v706
      %v1486 = vpop.f32.mrb[0].mxu0
      %v1487 = vadd.f32 %v1278, %v1486
      %v1488 = vpop.f32.mrb[0].mxu0
      %v1489 = vpop.f32.mrb[0].mxu0
      %v1490 = vadd.f32 %v1281, %v1489
      %v1491 = vpop.f32.mrb[0].mxu0
      %1492 = vmatprep.mubr.bf16.mxu0 0
      %1493 = vmatmul.mubr.bf16.gmra.mrb[0].mxu0 %v707
      %v1494 = vpop.f32.mrb[0].mxu0
      %v1495 = vadd.f32 %v1286, %v1494
      %v1496 = vpop.f32.mrb[0].mxu0
      %v1497 = vpop.f32.mrb[0].mxu0
      %v1498 = vadd.f32 %v1289, %v1497
      %v1499 = vpop.f32.mrb[0].mxu0
      %1500 = vmatprep.mubr.bf16.mxu0 0
      %1501 = vmatmul.mubr.bf16.gmra.mrb[0].mxu0 %v708
      %v1502 = vpop.f32.mrb[0].mxu0
      %v1503 = vadd.f32 %v1294, %v1502
      %v1504 = vpop.f32.mrb[0].mxu0
      %v1505 = vpop.f32.mrb[0].mxu0
      %v1506 = vadd.f32 %v1297, %v1505
      %v1507 = vpop.f32.mrb[0].mxu0
      %1508 = vmatprep.mubr.bf16.mxu0 0
      %1509 = vmatmul.mubr.bf16.gmra.mrb[0].mxu0 %v709
      %v1510 = vpop.f32.mrb[0].mxu0
      %v1511 = vadd.f32 %v1302, %v1510
      %v1512 = vpop.f32.mrb[0].mxu0
      %v1513 = vpop.f32.mrb[0].mxu0
      %v1514 = vadd.f32 %v1305, %v1513
      %v1515 = vpop.f32.mrb[0].mxu0
      %1516 = vmatprep.mubr.bf16.mxu0 0
      %1517 = vmatmul.mubr.bf16.gmra.mrb[0].mxu0 %v710
      %v1518 = vpop.f32.mrb[0].mxu0
      %v1519 = vadd.f32 %v1310, %v1518
      %v1520 = vpop.f32.mrb[0].mxu0
      %v1521 = vpop.f32.mrb[0].mxu0
      %v1522 = vadd.f32 %v1313, %v1521
      %v1523 = vpop.f32.mrb[0].mxu0
      %1524 = vmatprep.mubr.bf16.mxu0 0
      %1525 = vmatmul.mubr.bf16.gmra.mrb[0].mxu0 %v711
      %v1526 = vpop.f32.mrb[0].mxu0
      %v1527 = vadd.f32 %v1318, %v1526
      %v1528 = vpop.f32.mrb[0].mxu0
      %v1529 = vpop.f32.mrb[0].mxu0
      %v1530 = vadd.f32 %v1321, %v1529
      %v1531 = vpop.f32.mrb[0].mxu0
      %1532 = vdwg.mxu0
      %s1533 = scalar_lea.vmem %s310, 16
      %v1534 = vld [vmem:[%s1533] sm:$0xf]
      %v1535 = vld [vmem:[%s1533 + $0x4] sm:$0xf]
      %v1536 = vld [vmem:[%s1533 + $0x20] sm:$0xf]
      %v1537 = vld [vmem:[%s1533 + $0x24] sm:$0xf]
      %v1538 = vld [vmem:[%s1533 + $0x40] sm:$0xf]
      %v1539 = vld [vmem:[%s1533 + $0x44] sm:$0xf]
      %v1540 = vld [vmem:[%s1533 + $0x60] sm:$0xf]
      %v1541 = vld [vmem:[%s1533 + $0x64] sm:$0xf]
      %v1542 = vld [vmem:[%s1533 + $0x80] sm:$0xf]
      %v1543 = vld [vmem:[%s1533 + $0x84] sm:$0xf]
      %v1544 = vld [vmem:[%s1533 + $0xa0] sm:$0xf]
      %v1545 = vld [vmem:[%s1533 + $0xa4] sm:$0xf]
      %v1546 = vld [vmem:[%s1533 + $0xc0] sm:$0xf]
      %v1547 = vld [vmem:[%s1533 + $0xc4] sm:$0xf]
      %v1548 = vld [vmem:[%s1533 + $0xe0] sm:$0xf]
      %v1549 = vld [vmem:[%s1533 + $0xe4] sm:$0xf]
      %v1550 = vld [vmem:[%s1533 + $0x100] sm:$0xf]
      %v1551 = vld [vmem:[%s1533 + $0x104] sm:$0xf]
      %v1552 = vld [vmem:[%s1533 + $0x120] sm:$0xf]
      %v1553 = vld [vmem:[%s1533 + $0x124] sm:$0xf]
      %v1554 = vld [vmem:[%s1533 + $0x140] sm:$0xf]
      %v1555 = vld [vmem:[%s1533 + $0x144] sm:$0xf]
      %v1556 = vld [vmem:[%s1533 + $0x160] sm:$0xf]
      %v1557 = vld [vmem:[%s1533 + $0x164] sm:$0xf]
      %v1558 = vld [vmem:[%s1533 + $0x180] sm:$0xf]
      %v1559 = vld [vmem:[%s1533 + $0x184] sm:$0xf]
      %v1560 = vld [vmem:[%s1533 + $0x1a0] sm:$0xf]
      %v1561 = vld [vmem:[%s1533 + $0x1a4] sm:$0xf]
      %v1562 = vld [vmem:[%s1533 + $0x1c0] sm:$0xf]
      %v1563 = vld [vmem:[%s1533 + $0x1c4] sm:$0xf]
      %v1564 = vld [vmem:[%s1533 + $0x1e0] sm:$0xf]
      %v1565 = vld [vmem:[%s1533 + $0x1e4] sm:$0xf]
      %v1598 = vunpack.c.l.b16 %v1534
      %v1599 = vunpack.c.l.b16 %v1535
      %v1600 = vunpack.c.l.b16 %v1536
      %v1601 = vunpack.c.l.b16 %v1537
      %v1602 = vunpack.c.l.b16 %v1538
      %v1603 = vunpack.c.l.b16 %v1539
      %v1604 = vunpack.c.l.b16 %v1540
      %v1605 = vunpack.c.l.b16 %v1541
      %v1606 = vunpack.c.l.b16 %v1542
      %v1607 = vunpack.c.l.b16 %v1543
      %v1608 = vunpack.c.l.b16 %v1544
      %v1609 = vunpack.c.l.b16 %v1545
      %v1610 = vunpack.c.l.b16 %v1546
      %v1611 = vunpack.c.l.b16 %v1547
      %v1612 = vunpack.c.l.b16 %v1548
      %v1613 = vunpack.c.l.b16 %v1549
      %v1614 = vunpack.c.l.b16 %v1550
      %v1615 = vunpack.c.l.b16 %v1551
      %v1616 = vunpack.c.l.b16 %v1552
      %v1617 = vunpack.c.l.b16 %v1553
      %v1618 = vunpack.c.l.b16 %v1554
      %v1619 = vunpack.c.l.b16 %v1555
      %v1620 = vunpack.c.l.b16 %v1556
      %v1621 = vunpack.c.l.b16 %v1557
      %v1622 = vunpack.c.l.b16 %v1558
      %v1623 = vunpack.c.l.b16 %v1559
      %v1624 = vunpack.c.l.b16 %v1560
      %v1625 = vunpack.c.l.b16 %v1561
      %v1626 = vunpack.c.l.b16 %v1562
      %v1627 = vunpack.c.l.b16 %v1563
      %v1628 = vunpack.c.l.b16 %v1564
      %v1629 = vunpack.c.l.b16 %v1565
      %v1630 = vpack.c.b16 %v1599, %v1598
      %v1631 = vpack.c.b16 %v1601, %v1600
      %v1632 = vpack.c.b16 %v1603, %v1602
      %v1633 = vpack.c.b16 %v1605, %v1604
      %v1634 = vpack.c.b16 %v1607, %v1606
      %v1635 = vpack.c.b16 %v1609, %v1608
      %v1636 = vpack.c.b16 %v1611, %v1610
      %v1637 = vpack.c.b16 %v1613, %v1612
      %v1638 = vpack.c.b16 %v1615, %v1614
      %v1639 = vpack.c.b16 %v1617, %v1616
      %v1640 = vpack.c.b16 %v1619, %v1618
      %v1641 = vpack.c.b16 %v1621, %v1620
      %v1642 = vpack.c.b16 %v1623, %v1622
      %v1643 = vpack.c.b16 %v1625, %v1624
      %v1644 = vpack.c.b16 %v1627, %v1626
      %v1645 = vpack.c.b16 %v1629, %v1628
      %v1647 = vsel %vm450, %v1630, 0
      %v1650 = vsel %vm450, %v1631, 0
      %v1653 = vsel %vm450, %v1632, 0
      %v1656 = vsel %vm450, %v1633, 0
      %v1659 = vsel %vm450, %v1634, 0
      %v1662 = vsel %vm450, %v1635, 0
      %v1665 = vsel %vm450, %v1636, 0
      %v1668 = vsel %vm450, %v1637, 0
      %v1671 = vsel %vm450, %v1638, 0
      %v1674 = vsel %vm450, %v1639, 0
      %v1677 = vsel %vm450, %v1640, 0
      %v1680 = vsel %vm450, %v1641, 0
      %v1683 = vsel %vm450, %v1642, 0
      %v1686 = vsel %vm450, %v1643, 0
      %v1689 = vsel %vm450, %v1644, 0
      %v1692 = vsel %vm450, %v1645, 0
      %1694 = vmatprep.subr.bf16.mxu0 0
      %1695 = vmatpush1.bf16.msra.mxu0 %v501
      %1696 = vmatprep.subr.bf16.mxu0 0
      %1697 = vmatpush1.bf16.msra.mxu0 0
      %1698 = vmatprep.subr.bf16.mxu0 0
      %1699 = vmatpush1.bf16.msra.mxu0 0
      %1700 = vmatprep.subr.bf16.mxu0 0
      %1701 = vmatpush1.bf16.msra.mxu0 0
      %1702 = vmatprep.subr.bf16.mxu0 0
      %1703 = vmatpush1.bf16.msra.mxu0 0
      %1704 = vmatprep.subr.bf16.mxu0 0
      %1705 = vmatpush1.bf16.msra.mxu0 0
      %1706 = vmatprep.subr.bf16.mxu0 0
      %1707 = vmatpush1.bf16.msra.mxu0 0
      %1708 = vmatprep.subr.bf16.mxu0 0
      %1709 = vmatpush1.bf16.msra.mxu0 0
      %1710 = vmatprep.subr.bf16.mxu0 0
      %1711 = vmatpush1.bf16.msra.mxu0 0
      %1712 = vmatprep.subr.bf16.mxu0 0
      %1713 = vmatpush1.bf16.msra.mxu0 0
      %1714 = vmatprep.subr.bf16.mxu0 0
      %1715 = vmatpush1.bf16.msra.mxu0 0
      %1716 = vmatprep.subr.bf16.mxu0 0
      %1717 = vmatpush1.bf16.msra.mxu0 0
      %1718 = vmatprep.subr.bf16.mxu0 0
      %1719 = vmatpush1.bf16.msra.mxu0 0
      %1720 = vmatprep.subr.bf16.mxu0 0
      %1721 = vmatpush1.bf16.msra.mxu0 0
      %1722 = vmatprep.subr.bf16.mxu0 0
      %1723 = vmatpush1.bf16.msra.mxu0 0
      %1724 = vmatprep.subr.bf16.mxu0 0
      %1725 = vmatpush1.bf16.msra.mxu0 0
      %1726 = vmatprep.mubr.bf16.mxu0 0
      %1727 = vmatmul.mubr.bf16.gmra.mrb[0].mxu0 %v1647
      %v1728 = vpop.f32.mrb[0].mxu0
      %v1729 = vadd.f32 %v363, %v1728
      %v1730 = vpop.f32.mrb[0].mxu0
      %v1731 = vpop.f32.mrb[0].mxu0
      %v1732 = vadd.f32 %v363, %v1731
      %v1733 = vpop.f32.mrb[0].mxu0
      %1734 = vmatprep.mubr.bf16.mxu0 0
      %1735 = vmatmul.mubr.bf16.gmra.mrb[0].mxu0 %v1650
      %v1736 = vpop.f32.mrb[0].mxu0
      %v1737 = vadd.f32 %v363, %v1736
      %v1738 = vpop.f32.mrb[0].mxu0
      %v1739 = vpop.f32.mrb[0].mxu0
      %v1740 = vadd.f32 %v363, %v1739
      %v1741 = vpop.f32.mrb[0].mxu0
      %1742 = vmatprep.mubr.bf16.mxu0 0
      %1743 = vmatmul.mubr.bf16.gmra.mrb[0].mxu0 %v1653
      %v1744 = vpop.f32.mrb[0].mxu0
      %v1745 = vadd.f32 %v363, %v1744
      %v1746 = vpop.f32.mrb[0].mxu0
      %v1747 = vpop.f32.mrb[0].mxu0
      %v1748 = vadd.f32 %v363, %v1747
      %v1749 = vpop.f32.mrb[0].mxu0
      %1750 = vmatprep.mubr.bf16.mxu0 0
      %1751 = vmatmul.mubr.bf16.gmra.mrb[0].mxu0 %v1656
      %v1752 = vpop.f32.mrb[0].mxu0
      %v1753 = vadd.f32 %v363, %v1752
      %v1754 = vpop.f32.mrb[0].mxu0
      %v1755 = vpop.f32.mrb[0].mxu0
      %v1756 = vadd.f32 %v363, %v1755
      %v1757 = vpop.f32.mrb[0].mxu0
      %1758 = vmatprep.mubr.bf16.mxu0 0
      %1759 = vmatmul.mubr.bf16.gmra.mrb[0].mxu0 %v1659
      %v1760 = vpop.f32.mrb[0].mxu0
      %v1761 = vadd.f32 %v363, %v1760
      %v1762 = vpop.f32.mrb[0].mxu0
      %v1763 = vpop.f32.mrb[0].mxu0
      %v1764 = vadd.f32 %v363, %v1763
      %v1765 = vpop.f32.mrb[0].mxu0
      %1766 = vmatprep.mubr.bf16.mxu0 0
      %1767 = vmatmul.mubr.bf16.gmra.mrb[0].mxu0 %v1662
      %v1768 = vpop.f32.mrb[0].mxu0
      %v1769 = vadd.f32 %v363, %v1768
      %v1770 = vpop.f32.mrb[0].mxu0
      %v1771 = vpop.f32.mrb[0].mxu0
      %v1772 = vadd.f32 %v363, %v1771
      %v1773 = vpop.f32.mrb[0].mxu0
      %1774 = vmatprep.mubr.bf16.mxu0 0
      %1775 = vmatmul.mubr.bf16.gmra.mrb[0].mxu0 %v1665
      %v1776 = vpop.f32.mrb[0].mxu0
      %v1777 = vadd.f32 %v363, %v1776
      %v1778 = vpop.f32.mrb[0].mxu0
      %v1779 = vpop.f32.mrb[0].mxu0
      %v1780 = vadd.f32 %v363, %v1779
      %v1781 = vpop.f32.mrb[0].mxu0
      %1782 = vmatprep.mubr.bf16.mxu0 0
      %1783 = vmatmul.mubr.bf16.gmra.mrb[0].mxu0 %v1668
      %v1784 = vpop.f32.mrb[0].mxu0
      %v1785 = vadd.f32 %v363, %v1784
      %v1786 = vpop.f32.mrb[0].mxu0
      %v1787 = vpop.f32.mrb[0].mxu0
      %v1788 = vadd.f32 %v363, %v1787
      %v1789 = vpop.f32.mrb[0].mxu0
      %1790 = vmatprep.mubr.bf16.mxu0 0
      %1791 = vmatmul.mubr.bf16.gmra.mrb[0].mxu0 %v1671
      %v1792 = vpop.f32.mrb[0].mxu0
      %v1793 = vadd.f32 %v363, %v1792
      %v1794 = vpop.f32.mrb[0].mxu0
      %v1795 = vpop.f32.mrb[0].mxu0
      %v1796 = vadd.f32 %v363, %v1795
      %v1797 = vpop.f32.mrb[0].mxu0
      %1798 = vmatprep.mubr.bf16.mxu0 0
      %1799 = vmatmul.mubr.bf16.gmra.mrb[0].mxu0 %v1674
      %v1800 = vpop.f32.mrb[0].mxu0
      %v1801 = vadd.f32 %v363, %v1800
      %v1802 = vpop.f32.mrb[0].mxu0
      %v1803 = vpop.f32.mrb[0].mxu0
      %v1804 = vadd.f32 %v363, %v1803
      %v1805 = vpop.f32.mrb[0].mxu0
      %1806 = vmatprep.mubr.bf16.mxu0 0
      %1807 = vmatmul.mubr.bf16.gmra.mrb[0].mxu0 %v1677
      %v1808 = vpop.f32.mrb[0].mxu0
      %v1809 = vadd.f32 %v363, %v1808
      %v1810 = vpop.f32.mrb[0].mxu0
      %v1811 = vpop.f32.mrb[0].mxu0
      %v1812 = vadd.f32 %v363, %v1811
      %v1813 = vpop.f32.mrb[0].mxu0
      %1814 = vmatprep.mubr.bf16.mxu0 0
      %1815 = vmatmul.mubr.bf16.gmra.mrb[0].mxu0 %v1680
      %v1816 = vpop.f32.mrb[0].mxu0
      %v1817 = vadd.f32 %v363, %v1816
      %v1818 = vpop.f32.mrb[0].mxu0
      %v1819 = vpop.f32.mrb[0].mxu0
      %v1820 = vadd.f32 %v363, %v1819
      %v1821 = vpop.f32.mrb[0].mxu0
      %1822 = vmatprep.mubr.bf16.mxu0 0
      %1823 = vmatmul.mubr.bf16.gmra.mrb[0].mxu0 %v1683
      %v1824 = vpop.f32.mrb[0].mxu0
      %v1825 = vadd.f32 %v363, %v1824
      %v1826 = vpop.f32.mrb[0].mxu0
      %v1827 = vpop.f32.mrb[0].mxu0
      %v1828 = vadd.f32 %v363, %v1827
      %v1829 = vpop.f32.mrb[0].mxu0
      %1830 = vmatprep.mubr.bf16.mxu0 0
      %1831 = vmatmul.mubr.bf16.gmra.mrb[0].mxu0 %v1686
      %v1832 = vpop.f32.mrb[0].mxu0
      %v1833 = vadd.f32 %v363, %v1832
      %v1834 = vpop.f32.mrb[0].mxu0
      %v1835 = vpop.f32.mrb[0].mxu0
      %v1836 = vadd.f32 %v363, %v1835
      %v1837 = vpop.f32.mrb[0].mxu0
      %1838 = vmatprep.mubr.bf16.mxu0 0
      %1839 = vmatmul.mubr.bf16.gmra.mrb[0].mxu0 %v1689
      %v1840 = vpop.f32.mrb[0].mxu0
      %v1841 = vadd.f32 %v363, %v1840
      %v1842 = vpop.f32.mrb[0].mxu0
      %v1843 = vpop.f32.mrb[0].mxu0
      %v1844 = vadd.f32 %v363, %v1843
      %v1845 = vpop.f32.mrb[0].mxu0
      %1846 = vmatprep.mubr.bf16.mxu0 0
      %1847 = vmatmul.mubr.bf16.gmra.mrb[0].mxu0 %v1692
      %v1848 = vpop.f32.mrb[0].mxu0
      %v1849 = vadd.f32 %v363, %v1848
      %v1850 = vpop.f32.mrb[0].mxu0
      %v1851 = vpop.f32.mrb[0].mxu0
      %v1852 = vadd.f32 %v363, %v1851
      %v1853 = vpop.f32.mrb[0].mxu0
      %1854 = vdwg.mxu0
      %v1855 = vmax.f32 %v1729, 0.0
      %v1856 = vmax.f32 %v1732, 0.0
      %v1857 = vmax.f32 %v1737, 0.0
      %v1858 = vmax.f32 %v1740, 0.0
      %v1859 = vmax.f32 %v1745, 0.0
      %v1860 = vmax.f32 %v1748, 0.0
      %v1861 = vmax.f32 %v1753, 0.0
      %v1862 = vmax.f32 %v1756, 0.0
      %v1863 = vmax.f32 %v1761, 0.0
      %v1864 = vmax.f32 %v1764, 0.0
      %v1865 = vmax.f32 %v1769, 0.0
      %v1866 = vmax.f32 %v1772, 0.0
      %v1867 = vmax.f32 %v1777, 0.0
      %v1868 = vmax.f32 %v1780, 0.0
      %v1869 = vmax.f32 %v1785, 0.0
      %v1870 = vmax.f32 %v1788, 0.0
      %v1871 = vmax.f32 %v1793, 0.0
      %v1872 = vmax.f32 %v1796, 0.0
      %v1873 = vmax.f32 %v1801, 0.0
      %v1874 = vmax.f32 %v1804, 0.0
      %v1875 = vmax.f32 %v1809, 0.0
      %v1876 = vmax.f32 %v1812, 0.0
      %v1877 = vmax.f32 %v1817, 0.0
      %v1878 = vmax.f32 %v1820, 0.0
      %v1879 = vmax.f32 %v1825, 0.0
      %v1880 = vmax.f32 %v1828, 0.0
      %v1881 = vmax.f32 %v1833, 0.0
      %v1882 = vmax.f32 %v1836, 0.0
      %v1883 = vmax.f32 %v1841, 0.0
      %v1884 = vmax.f32 %v1844, 0.0
      %v1885 = vmax.f32 %v1849, 0.0
      %v1886 = vmax.f32 %v1852, 0.0
      %v1887 = vpack.c.bf16 %v1856, %v1855
      %v1888 = vpack.c.bf16 %v1858, %v1857
      %v1889 = vpack.c.bf16 %v1860, %v1859
      %v1890 = vpack.c.bf16 %v1862, %v1861
      %v1891 = vpack.c.bf16 %v1864, %v1863
      %v1892 = vpack.c.bf16 %v1866, %v1865
      %v1893 = vpack.c.bf16 %v1868, %v1867
      %v1894 = vpack.c.bf16 %v1870, %v1869
      %v1895 = vpack.c.bf16 %v1872, %v1871
      %v1896 = vpack.c.bf16 %v1874, %v1873
      %v1897 = vpack.c.bf16 %v1876, %v1875
      %v1898 = vpack.c.bf16 %v1878, %v1877
      %v1899 = vpack.c.bf16 %v1880, %v1879
      %v1900 = vpack.c.bf16 %v1882, %v1881
      %v1901 = vpack.c.bf16 %v1884, %v1883
      %v1902 = vpack.c.bf16 %v1886, %v1885
      %s1903 = scalar_lea.vmem %s3, 128
      %v1904 = vld [vmem:[%s1903] sm:$0xf]
      %v1905 = vld [vmem:[%s1903 + $0x4] sm:$0xf]
      %v1906 = vld [vmem:[%s1903 + $0x8] sm:$0xf]
      %v1907 = vld [vmem:[%s1903 + $0xc] sm:$0xf]
      %v1908 = vld [vmem:[%s1903 + $0x10] sm:$0xf]
      %v1909 = vld [vmem:[%s1903 + $0x14] sm:$0xf]
      %v1910 = vld [vmem:[%s1903 + $0x18] sm:$0xf]
      %v1911 = vld [vmem:[%s1903 + $0x1c] sm:$0xf]
      %v1912 = vld [vmem:[%s1903 + $0x20] sm:$0xf]
      %v1913 = vld [vmem:[%s1903 + $0x24] sm:$0xf]
      %v1914 = vld [vmem:[%s1903 + $0x28] sm:$0xf]
      %v1915 = vld [vmem:[%s1903 + $0x2c] sm:$0xf]
      %v1916 = vld [vmem:[%s1903 + $0x30] sm:$0xf]
      %v1917 = vld [vmem:[%s1903 + $0x34] sm:$0xf]
      %v1918 = vld [vmem:[%s1903 + $0x38] sm:$0xf]
      %v1919 = vld [vmem:[%s1903 + $0x3c] sm:$0xf]
      %v1936 = vunpack.c.l.b16 %v1904
      %v1937 = vunpack.c.l.b16 %v1905
      %v1938 = vunpack.c.l.b16 %v1906
      %v1939 = vunpack.c.l.b16 %v1907
      %v1940 = vunpack.c.l.b16 %v1908
      %v1941 = vunpack.c.l.b16 %v1909
      %v1942 = vunpack.c.l.b16 %v1910
      %v1943 = vunpack.c.l.b16 %v1911
      %v1944 = vunpack.c.l.b16 %v1912
      %v1945 = vunpack.c.l.b16 %v1913
      %v1946 = vunpack.c.l.b16 %v1914
      %v1947 = vunpack.c.l.b16 %v1915
      %v1948 = vunpack.c.l.b16 %v1916
      %v1949 = vunpack.c.l.b16 %v1917
      %v1950 = vunpack.c.l.b16 %v1918
      %v1951 = vunpack.c.l.b16 %v1919
      %v1952 = vpack.c.b16 %v1937, %v1936
      %v1953 = vpack.c.b16 %v1939, %v1938
      %v1954 = vpack.c.b16 %v1941, %v1940
      %v1955 = vpack.c.b16 %v1943, %v1942
      %v1956 = vpack.c.b16 %v1945, %v1944
      %v1957 = vpack.c.b16 %v1947, %v1946
      %v1958 = vpack.c.b16 %v1949, %v1948
      %v1959 = vpack.c.b16 %v1951, %v1950
      %1968 = vmatprep.subr.bf16.mxu0 0
      %1969 = vmatpush1.bf16.msra.mxu0 %v1952
      %1970 = vmatprep.subr.bf16.mxu0 0
      %1971 = vmatpush1.bf16.msra.mxu0 %v1953
      %1972 = vmatprep.subr.bf16.mxu0 0
      %1973 = vmatpush1.bf16.msra.mxu0 %v1954
      %1974 = vmatprep.subr.bf16.mxu0 0
      %1975 = vmatpush1.bf16.msra.mxu0 %v1955
      %1976 = vmatprep.subr.bf16.mxu0 0
      %1977 = vmatpush1.bf16.msra.mxu0 %v1956
      %1978 = vmatprep.subr.bf16.mxu0 0
      %1979 = vmatpush1.bf16.msra.mxu0 %v1957
      %1980 = vmatprep.subr.bf16.mxu0 0
      %1981 = vmatpush1.bf16.msra.mxu0 %v1958
      %1982 = vmatprep.subr.bf16.mxu0 0
      %1983 = vmatpush1.bf16.msra.mxu0 %v1959
      %1984 = vmatprep.subr.bf16.mxu0 0
      %1985 = vmatpush1.bf16.msra.mxu0 0
      %1986 = vmatprep.subr.bf16.mxu0 0
      %1987 = vmatpush1.bf16.msra.mxu0 0
      %1988 = vmatprep.subr.bf16.mxu0 0
      %1989 = vmatpush1.bf16.msra.mxu0 0
      %1990 = vmatprep.subr.bf16.mxu0 0
      %1991 = vmatpush1.bf16.msra.mxu0 0
      %1992 = vmatprep.subr.bf16.mxu0 0
      %1993 = vmatpush1.bf16.msra.mxu0 0
      %1994 = vmatprep.subr.bf16.mxu0 0
      %1995 = vmatpush1.bf16.msra.mxu0 0
      %1996 = vmatprep.subr.bf16.mxu0 0
      %1997 = vmatpush1.bf16.msra.mxu0 0
      %1998 = vmatprep.subr.bf16.mxu0 0
      %1999 = vmatpush1.bf16.msra.mxu0 0
      %2000 = vmatprep.mubr.bf16.mxu0 0
      %2001 = vmatmul.mubr.bf16.gmra.mrb[0].mxu0 %v1887
      %v2002 = vpop.f32.mrb[0].mxu0
      %v2003 = vadd.f32 0.0, %v2002
      %v2004 = vpop.f32.mrb[0].mxu0
      %v2005 = vpop.f32.mrb[0].mxu0
      %v2006 = vadd.f32 0.0, %v2005
      %v2007 = vpop.f32.mrb[0].mxu0
      %2008 = vmatprep.mubr.bf16.mxu0 0
      %2009 = vmatmul.mubr.bf16.gmra.mrb[0].mxu0 %v1888
      %v2010 = vpop.f32.mrb[0].mxu0
      %v2011 = vadd.f32 0.0, %v2010
      %v2012 = vpop.f32.mrb[0].mxu0
      %v2013 = vpop.f32.mrb[0].mxu0
      %v2014 = vadd.f32 0.0, %v2013
      %v2015 = vpop.f32.mrb[0].mxu0
      %2016 = vmatprep.mubr.bf16.mxu0 0
      %2017 = vmatmul.mubr.bf16.gmra.mrb[0].mxu0 %v1889
      %v2018 = vpop.f32.mrb[0].mxu0
      %v2019 = vadd.f32 0.0, %v2018
      %v2020 = vpop.f32.mrb[0].mxu0
      %v2021 = vpop.f32.mrb[0].mxu0
      %v2022 = vadd.f32 0.0, %v2021
      %v2023 = vpop.f32.mrb[0].mxu0
      %2024 = vmatprep.mubr.bf16.mxu0 0
      %2025 = vmatmul.mubr.bf16.gmra.mrb[0].mxu0 %v1890
      %v2026 = vpop.f32.mrb[0].mxu0
      %v2027 = vadd.f32 0.0, %v2026
      %v2028 = vpop.f32.mrb[0].mxu0
      %v2029 = vpop.f32.mrb[0].mxu0
      %v2030 = vadd.f32 0.0, %v2029
      %v2031 = vpop.f32.mrb[0].mxu0
      %2032 = vmatprep.mubr.bf16.mxu0 0
      %2033 = vmatmul.mubr.bf16.gmra.mrb[0].mxu0 %v1891
      %v2034 = vpop.f32.mrb[0].mxu0
      %v2035 = vadd.f32 0.0, %v2034
      %v2036 = vpop.f32.mrb[0].mxu0
      %v2037 = vpop.f32.mrb[0].mxu0
      %v2038 = vadd.f32 0.0, %v2037
      %v2039 = vpop.f32.mrb[0].mxu0
      %2040 = vmatprep.mubr.bf16.mxu0 0
      %2041 = vmatmul.mubr.bf16.gmra.mrb[0].mxu0 %v1892
      %v2042 = vpop.f32.mrb[0].mxu0
      %v2043 = vadd.f32 0.0, %v2042
      %v2044 = vpop.f32.mrb[0].mxu0
      %v2045 = vpop.f32.mrb[0].mxu0
      %v2046 = vadd.f32 0.0, %v2045
      %v2047 = vpop.f32.mrb[0].mxu0
      %2048 = vmatprep.mubr.bf16.mxu0 0
      %2049 = vmatmul.mubr.bf16.gmra.mrb[0].mxu0 %v1893
      %v2050 = vpop.f32.mrb[0].mxu0
      %v2051 = vadd.f32 0.0, %v2050
      %v2052 = vpop.f32.mrb[0].mxu0
      %v2053 = vpop.f32.mrb[0].mxu0
      %v2054 = vadd.f32 0.0, %v2053
      %v2055 = vpop.f32.mrb[0].mxu0
      %2056 = vmatprep.mubr.bf16.mxu0 0
      %2057 = vmatmul.mubr.bf16.gmra.mrb[0].mxu0 %v1894
      %v2058 = vpop.f32.mrb[0].mxu0
      %v2059 = vadd.f32 0.0, %v2058
      %v2060 = vpop.f32.mrb[0].mxu0
      %v2061 = vpop.f32.mrb[0].mxu0
      %v2062 = vadd.f32 0.0, %v2061
      %v2063 = vpop.f32.mrb[0].mxu0
      %2064 = vmatprep.mubr.bf16.mxu0 0
      %2065 = vmatmul.mubr.bf16.gmra.mrb[0].mxu0 %v1895
      %v2066 = vpop.f32.mrb[0].mxu0
      %v2067 = vadd.f32 0.0, %v2066
      %v2068 = vpop.f32.mrb[0].mxu0
      %v2069 = vpop.f32.mrb[0].mxu0
      %v2070 = vadd.f32 0.0, %v2069
      %v2071 = vpop.f32.mrb[0].mxu0
      %2072 = vmatprep.mubr.bf16.mxu0 0
      %2073 = vmatmul.mubr.bf16.gmra.mrb[0].mxu0 %v1896
      %v2074 = vpop.f32.mrb[0].mxu0
      %v2075 = vadd.f32 0.0, %v2074
      %v2076 = vpop.f32.mrb[0].mxu0
      %v2077 = vpop.f32.mrb[0].mxu0
      %v2078 = vadd.f32 0.0, %v2077
      %v2079 = vpop.f32.mrb[0].mxu0
      %2080 = vmatprep.mubr.bf16.mxu0 0
      %2081 = vmatmul.mubr.bf16.gmra.mrb[0].mxu0 %v1897
      %v2082 = vpop.f32.mrb[0].mxu0
      %v2083 = vadd.f32 0.0, %v2082
      %v2084 = vpop.f32.mrb[0].mxu0
      %v2085 = vpop.f32.mrb[0].mxu0
      %v2086 = vadd.f32 0.0, %v2085
      %v2087 = vpop.f32.mrb[0].mxu0
      %2088 = vmatprep.mubr.bf16.mxu0 0
      %2089 = vmatmul.mubr.bf16.gmra.mrb[0].mxu0 %v1898
      %v2090 = vpop.f32.mrb[0].mxu0
      %v2091 = vadd.f32 0.0, %v2090
      %v2092 = vpop.f32.mrb[0].mxu0
      %v2093 = vpop.f32.mrb[0].mxu0
      %v2094 = vadd.f32 0.0, %v2093
      %v2095 = vpop.f32.mrb[0].mxu0
      %2096 = vmatprep.mubr.bf16.mxu0 0
      %2097 = vmatmul.mubr.bf16.gmra.mrb[0].mxu0 %v1899
      %v2098 = vpop.f32.mrb[0].mxu0
      %v2099 = vadd.f32 0.0, %v2098
      %v2100 = vpop.f32.mrb[0].mxu0
      %v2101 = vpop.f32.mrb[0].mxu0
      %v2102 = vadd.f32 0.0, %v2101
      %v2103 = vpop.f32.mrb[0].mxu0
      %2104 = vmatprep.mubr.bf16.mxu0 0
      %2105 = vmatmul.mubr.bf16.gmra.mrb[0].mxu0 %v1900
      %v2106 = vpop.f32.mrb[0].mxu0
      %v2107 = vadd.f32 0.0, %v2106
      %v2108 = vpop.f32.mrb[0].mxu0
      %v2109 = vpop.f32.mrb[0].mxu0
      %v2110 = vadd.f32 0.0, %v2109
      %v2111 = vpop.f32.mrb[0].mxu0
      %2112 = vmatprep.mubr.bf16.mxu0 0
      %2113 = vmatmul.mubr.bf16.gmra.mrb[0].mxu0 %v1901
      %v2114 = vpop.f32.mrb[0].mxu0
      %v2115 = vadd.f32 0.0, %v2114
      %v2116 = vpop.f32.mrb[0].mxu0
      %v2117 = vpop.f32.mrb[0].mxu0
      %v2118 = vadd.f32 0.0, %v2117
      %v2119 = vpop.f32.mrb[0].mxu0
      %2120 = vmatprep.mubr.bf16.mxu0 0
      %2121 = vmatmul.mubr.bf16.gmra.mrb[0].mxu0 %v1902
      %v2122 = vpop.f32.mrb[0].mxu0
      %v2123 = vadd.f32 0.0, %v2122
      %v2124 = vpop.f32.mrb[0].mxu0
      %v2125 = vpop.f32.mrb[0].mxu0
      %v2126 = vadd.f32 0.0, %v2125
      %v2127 = vpop.f32.mrb[0].mxu0
      %2128 = vdwg.mxu0
      %v2129 = vadd.f32 %v1407, %v2003
      %v2130 = vadd.f32 %v1410, %v2006
      %v2131 = vadd.f32 %v1415, %v2011
      %v2132 = vadd.f32 %v1418, %v2014
      %v2133 = vadd.f32 %v1423, %v2019
      %v2134 = vadd.f32 %v1426, %v2022
      %v2135 = vadd.f32 %v1431, %v2027
      %v2136 = vadd.f32 %v1434, %v2030
      %v2137 = vadd.f32 %v1439, %v2035
      %v2138 = vadd.f32 %v1442, %v2038
      %v2139 = vadd.f32 %v1447, %v2043
      %v2140 = vadd.f32 %v1450, %v2046
      %v2141 = vadd.f32 %v1455, %v2051
      %v2142 = vadd.f32 %v1458, %v2054
      %v2143 = vadd.f32 %v1463, %v2059
      %v2144 = vadd.f32 %v1466, %v2062
      %v2145 = vadd.f32 %v1471, %v2067
      %v2146 = vadd.f32 %v1474, %v2070
      %v2147 = vadd.f32 %v1479, %v2075
      %v2148 = vadd.f32 %v1482, %v2078
      %v2149 = vadd.f32 %v1487, %v2083
      %v2150 = vadd.f32 %v1490, %v2086
      %v2151 = vadd.f32 %v1495, %v2091
      %v2152 = vadd.f32 %v1498, %v2094
      %v2153 = vadd.f32 %v1503, %v2099
      %v2154 = vadd.f32 %v1506, %v2102
      %v2155 = vadd.f32 %v1511, %v2107
      %v2156 = vadd.f32 %v1514, %v2110
      %v2157 = vadd.f32 %v1519, %v2115
      %v2158 = vadd.f32 %v1522, %v2118
      %v2159 = vadd.f32 %v1527, %v2123
      %v2160 = vadd.f32 %v1530, %v2126
      %s2161 = scalar_lea.vmem %s310, 24
      %v2162 = vld [vmem:[%s2161] sm:$0xf]
      %v2163 = vld [vmem:[%s2161 + $0x4] sm:$0xf]
      %v2164 = vld [vmem:[%s2161 + $0x20] sm:$0xf]
      %v2165 = vld [vmem:[%s2161 + $0x24] sm:$0xf]
      %v2166 = vld [vmem:[%s2161 + $0x40] sm:$0xf]
      %v2167 = vld [vmem:[%s2161 + $0x44] sm:$0xf]
      %v2168 = vld [vmem:[%s2161 + $0x60] sm:$0xf]
      %v2169 = vld [vmem:[%s2161 + $0x64] sm:$0xf]
      %v2170 = vld [vmem:[%s2161 + $0x80] sm:$0xf]
      %v2171 = vld [vmem:[%s2161 + $0x84] sm:$0xf]
      %v2172 = vld [vmem:[%s2161 + $0xa0] sm:$0xf]
      %v2173 = vld [vmem:[%s2161 + $0xa4] sm:$0xf]
      %v2174 = vld [vmem:[%s2161 + $0xc0] sm:$0xf]
      %v2175 = vld [vmem:[%s2161 + $0xc4] sm:$0xf]
      %v2176 = vld [vmem:[%s2161 + $0xe0] sm:$0xf]
      %v2177 = vld [vmem:[%s2161 + $0xe4] sm:$0xf]
      %v2178 = vld [vmem:[%s2161 + $0x100] sm:$0xf]
      %v2179 = vld [vmem:[%s2161 + $0x104] sm:$0xf]
      %v2180 = vld [vmem:[%s2161 + $0x120] sm:$0xf]
      %v2181 = vld [vmem:[%s2161 + $0x124] sm:$0xf]
      %v2182 = vld [vmem:[%s2161 + $0x140] sm:$0xf]
      %v2183 = vld [vmem:[%s2161 + $0x144] sm:$0xf]
      %v2184 = vld [vmem:[%s2161 + $0x160] sm:$0xf]
      %v2185 = vld [vmem:[%s2161 + $0x164] sm:$0xf]
      %v2186 = vld [vmem:[%s2161 + $0x180] sm:$0xf]
      %v2187 = vld [vmem:[%s2161 + $0x184] sm:$0xf]
      %v2188 = vld [vmem:[%s2161 + $0x1a0] sm:$0xf]
      %v2189 = vld [vmem:[%s2161 + $0x1a4] sm:$0xf]
      %v2190 = vld [vmem:[%s2161 + $0x1c0] sm:$0xf]
      %v2191 = vld [vmem:[%s2161 + $0x1c4] sm:$0xf]
      %v2192 = vld [vmem:[%s2161 + $0x1e0] sm:$0xf]
      %v2193 = vld [vmem:[%s2161 + $0x1e4] sm:$0xf]
      %v2226 = vunpack.c.l.b16 %v2162
      %v2227 = vunpack.c.l.b16 %v2163
      %v2228 = vunpack.c.l.b16 %v2164
      %v2229 = vunpack.c.l.b16 %v2165
      %v2230 = vunpack.c.l.b16 %v2166
      %v2231 = vunpack.c.l.b16 %v2167
      %v2232 = vunpack.c.l.b16 %v2168
      %v2233 = vunpack.c.l.b16 %v2169
      %v2234 = vunpack.c.l.b16 %v2170
      %v2235 = vunpack.c.l.b16 %v2171
      %v2236 = vunpack.c.l.b16 %v2172
      %v2237 = vunpack.c.l.b16 %v2173
      %v2238 = vunpack.c.l.b16 %v2174
      %v2239 = vunpack.c.l.b16 %v2175
      %v2240 = vunpack.c.l.b16 %v2176
      %v2241 = vunpack.c.l.b16 %v2177
      %v2242 = vunpack.c.l.b16 %v2178
      %v2243 = vunpack.c.l.b16 %v2179
      %v2244 = vunpack.c.l.b16 %v2180
      %v2245 = vunpack.c.l.b16 %v2181
      %v2246 = vunpack.c.l.b16 %v2182
      %v2247 = vunpack.c.l.b16 %v2183
      %v2248 = vunpack.c.l.b16 %v2184
      %v2249 = vunpack.c.l.b16 %v2185
      %v2250 = vunpack.c.l.b16 %v2186
      %v2251 = vunpack.c.l.b16 %v2187
      %v2252 = vunpack.c.l.b16 %v2188
      %v2253 = vunpack.c.l.b16 %v2189
      %v2254 = vunpack.c.l.b16 %v2190
      %v2255 = vunpack.c.l.b16 %v2191
      %v2256 = vunpack.c.l.b16 %v2192
      %v2257 = vunpack.c.l.b16 %v2193
      %v2258 = vpack.c.b16 %v2227, %v2226
      %v2259 = vpack.c.b16 %v2229, %v2228
      %v2260 = vpack.c.b16 %v2231, %v2230
      %v2261 = vpack.c.b16 %v2233, %v2232
      %v2262 = vpack.c.b16 %v2235, %v2234
      %v2263 = vpack.c.b16 %v2237, %v2236
      %v2264 = vpack.c.b16 %v2239, %v2238
      %v2265 = vpack.c.b16 %v2241, %v2240
      %v2266 = vpack.c.b16 %v2243, %v2242
      %v2267 = vpack.c.b16 %v2245, %v2244
      %v2268 = vpack.c.b16 %v2247, %v2246
      %v2269 = vpack.c.b16 %v2249, %v2248
      %v2270 = vpack.c.b16 %v2251, %v2250
      %v2271 = vpack.c.b16 %v2253, %v2252
      %v2272 = vpack.c.b16 %v2255, %v2254
      %v2273 = vpack.c.b16 %v2257, %v2256
      %v2275 = vsel %vm450, %v2258, 0
      %v2278 = vsel %vm450, %v2259, 0
      %v2281 = vsel %vm450, %v2260, 0
      %v2284 = vsel %vm450, %v2261, 0
      %v2287 = vsel %vm450, %v2262, 0
      %v2290 = vsel %vm450, %v2263, 0
      %v2293 = vsel %vm450, %v2264, 0
      %v2296 = vsel %vm450, %v2265, 0
      %v2299 = vsel %vm450, %v2266, 0
      %v2302 = vsel %vm450, %v2267, 0
      %v2305 = vsel %vm450, %v2268, 0
      %v2308 = vsel %vm450, %v2269, 0
      %v2311 = vsel %vm450, %v2270, 0
      %v2314 = vsel %vm450, %v2271, 0
      %v2317 = vsel %vm450, %v2272, 0
      %v2320 = vsel %vm450, %v2273, 0
      %2322 = vmatprep.subr.bf16.mxu0 0
      %2323 = vmatpush1.bf16.msra.mxu0 %v501
      %2324 = vmatprep.subr.bf16.mxu0 0
      %2325 = vmatpush1.bf16.msra.mxu0 0
      %2326 = vmatprep.subr.bf16.mxu0 0
      %2327 = vmatpush1.bf16.msra.mxu0 0
      %2328 = vmatprep.subr.bf16.mxu0 0
      %2329 = vmatpush1.bf16.msra.mxu0 0
      %2330 = vmatprep.subr.bf16.mxu0 0
      %2331 = vmatpush1.bf16.msra.mxu0 0
      %2332 = vmatprep.subr.bf16.mxu0 0
      %2333 = vmatpush1.bf16.msra.mxu0 0
      %2334 = vmatprep.subr.bf16.mxu0 0
      %2335 = vmatpush1.bf16.msra.mxu0 0
      %2336 = vmatprep.subr.bf16.mxu0 0
      %2337 = vmatpush1.bf16.msra.mxu0 0
      %2338 = vmatprep.subr.bf16.mxu0 0
      %2339 = vmatpush1.bf16.msra.mxu0 0
      %2340 = vmatprep.subr.bf16.mxu0 0
      %2341 = vmatpush1.bf16.msra.mxu0 0
      %2342 = vmatprep.subr.bf16.mxu0 0
      %2343 = vmatpush1.bf16.msra.mxu0 0
      %2344 = vmatprep.subr.bf16.mxu0 0
      %2345 = vmatpush1.bf16.msra.mxu0 0
      %2346 = vmatprep.subr.bf16.mxu0 0
      %2347 = vmatpush1.bf16.msra.mxu0 0
      %2348 = vmatprep.subr.bf16.mxu0 0
      %2349 = vmatpush1.bf16.msra.mxu0 0
      %2350 = vmatprep.subr.bf16.mxu0 0
      %2351 = vmatpush1.bf16.msra.mxu0 0
      %2352 = vmatprep.subr.bf16.mxu0 0
      %2353 = vmatpush1.bf16.msra.mxu0 0
      %2354 = vmatprep.mubr.bf16.mxu0 0
      %2355 = vmatmul.mubr.bf16.gmra.mrb[0].mxu0 %v2275
      %v2356 = vpop.f32.mrb[0].mxu0
      %v2357 = vadd.f32 %v363, %v2356
      %v2358 = vpop.f32.mrb[0].mxu0
      %v2359 = vpop.f32.mrb[0].mxu0
      %v2360 = vadd.f32 %v363, %v2359
      %v2361 = vpop.f32.mrb[0].mxu0
      %2362 = vmatprep.mubr.bf16.mxu0 0
      %2363 = vmatmul.mubr.bf16.gmra.mrb[0].mxu0 %v2278
      %v2364 = vpop.f32.mrb[0].mxu0
      %v2365 = vadd.f32 %v363, %v2364
      %v2366 = vpop.f32.mrb[0].mxu0
      %v2367 = vpop.f32.mrb[0].mxu0
      %v2368 = vadd.f32 %v363, %v2367
      %v2369 = vpop.f32.mrb[0].mxu0
      %2370 = vmatprep.mubr.bf16.mxu0 0
      %2371 = vmatmul.mubr.bf16.gmra.mrb[0].mxu0 %v2281
      %v2372 = vpop.f32.mrb[0].mxu0
      %v2373 = vadd.f32 %v363, %v2372
      %v2374 = vpop.f32.mrb[0].mxu0
      %v2375 = vpop.f32.mrb[0].mxu0
      %v2376 = vadd.f32 %v363, %v2375
      %v2377 = vpop.f32.mrb[0].mxu0
      %2378 = vmatprep.mubr.bf16.mxu0 0
      %2379 = vmatmul.mubr.bf16.gmra.mrb[0].mxu0 %v2284
      %v2380 = vpop.f32.mrb[0].mxu0
      %v2381 = vadd.f32 %v363, %v2380
      %v2382 = vpop.f32.mrb[0].mxu0
      %v2383 = vpop.f32.mrb[0].mxu0
      %v2384 = vadd.f32 %v363, %v2383
      %v2385 = vpop.f32.mrb[0].mxu0
      %2386 = vmatprep.mubr.bf16.mxu0 0
      %2387 = vmatmul.mubr.bf16.gmra.mrb[0].mxu0 %v2287
      %v2388 = vpop.f32.mrb[0].mxu0
      %v2389 = vadd.f32 %v363, %v2388
      %v2390 = vpop.f32.mrb[0].mxu0
      %v2391 = vpop.f32.mrb[0].mxu0
      %v2392 = vadd.f32 %v363, %v2391
      %v2393 = vpop.f32.mrb[0].mxu0
      %2394 = vmatprep.mubr.bf16.mxu0 0
      %2395 = vmatmul.mubr.bf16.gmra.mrb[0].mxu0 %v2290
      %v2396 = vpop.f32.mrb[0].mxu0
      %v2397 = vadd.f32 %v363, %v2396
      %v2398 = vpop.f32.mrb[0].mxu0
      %v2399 = vpop.f32.mrb[0].mxu0
      %v2400 = vadd.f32 %v363, %v2399
      %v2401 = vpop.f32.mrb[0].mxu0
      %2402 = vmatprep.mubr.bf16.mxu0 0
      %2403 = vmatmul.mubr.bf16.gmra.mrb[0].mxu0 %v2293
      %v2404 = vpop.f32.mrb[0].mxu0
      %v2405 = vadd.f32 %v363, %v2404
      %v2406 = vpop.f32.mrb[0].mxu0
      %v2407 = vpop.f32.mrb[0].mxu0
      %v2408 = vadd.f32 %v363, %v2407
      %v2409 = vpop.f32.mrb[0].mxu0
      %2410 = vmatprep.mubr.bf16.mxu0 0
      %2411 = vmatmul.mubr.bf16.gmra.mrb[0].mxu0 %v2296
      %v2412 = vpop.f32.mrb[0].mxu0
      %v2413 = vadd.f32 %v363, %v2412
      %v2414 = vpop.f32.mrb[0].mxu0
      %v2415 = vpop.f32.mrb[0].mxu0
      %v2416 = vadd.f32 %v363, %v2415
      %v2417 = vpop.f32.mrb[0].mxu0
      %2418 = vmatprep.mubr.bf16.mxu0 0
      %2419 = vmatmul.mubr.bf16.gmra.mrb[0].mxu0 %v2299
      %v2420 = vpop.f32.mrb[0].mxu0
      %v2421 = vadd.f32 %v363, %v2420
      %v2422 = vpop.f32.mrb[0].mxu0
      %v2423 = vpop.f32.mrb[0].mxu0
      %v2424 = vadd.f32 %v363, %v2423
      %v2425 = vpop.f32.mrb[0].mxu0
      %2426 = vmatprep.mubr.bf16.mxu0 0
      %2427 = vmatmul.mubr.bf16.gmra.mrb[0].mxu0 %v2302
      %v2428 = vpop.f32.mrb[0].mxu0
      %v2429 = vadd.f32 %v363, %v2428
      %v2430 = vpop.f32.mrb[0].mxu0
      %v2431 = vpop.f32.mrb[0].mxu0
      %v2432 = vadd.f32 %v363, %v2431
      %v2433 = vpop.f32.mrb[0].mxu0
      %2434 = vmatprep.mubr.bf16.mxu0 0
      %2435 = vmatmul.mubr.bf16.gmra.mrb[0].mxu0 %v2305
      %v2436 = vpop.f32.mrb[0].mxu0
      %v2437 = vadd.f32 %v363, %v2436
      %v2438 = vpop.f32.mrb[0].mxu0
      %v2439 = vpop.f32.mrb[0].mxu0
      %v2440 = vadd.f32 %v363, %v2439
      %v2441 = vpop.f32.mrb[0].mxu0
      %2442 = vmatprep.mubr.bf16.mxu0 0
      %2443 = vmatmul.mubr.bf16.gmra.mrb[0].mxu0 %v2308
      %v2444 = vpop.f32.mrb[0].mxu0
      %v2445 = vadd.f32 %v363, %v2444
      %v2446 = vpop.f32.mrb[0].mxu0
      %v2447 = vpop.f32.mrb[0].mxu0
      %v2448 = vadd.f32 %v363, %v2447
      %v2449 = vpop.f32.mrb[0].mxu0
      %2450 = vmatprep.mubr.bf16.mxu0 0
      %2451 = vmatmul.mubr.bf16.gmra.mrb[0].mxu0 %v2311
      %v2452 = vpop.f32.mrb[0].mxu0
      %v2453 = vadd.f32 %v363, %v2452
      %v2454 = vpop.f32.mrb[0].mxu0
      %v2455 = vpop.f32.mrb[0].mxu0
      %v2456 = vadd.f32 %v363, %v2455
      %v2457 = vpop.f32.mrb[0].mxu0
      %2458 = vmatprep.mubr.bf16.mxu0 0
      %2459 = vmatmul.mubr.bf16.gmra.mrb[0].mxu0 %v2314
      %v2460 = vpop.f32.mrb[0].mxu0
      %v2461 = vadd.f32 %v363, %v2460
      %v2462 = vpop.f32.mrb[0].mxu0
      %v2463 = vpop.f32.mrb[0].mxu0
      %v2464 = vadd.f32 %v363, %v2463
      %v2465 = vpop.f32.mrb[0].mxu0
      %2466 = vmatprep.mubr.bf16.mxu0 0
      %2467 = vmatmul.mubr.bf16.gmra.mrb[0].mxu0 %v2317
      %v2468 = vpop.f32.mrb[0].mxu0
      %v2469 = vadd.f32 %v363, %v2468
      %v2470 = vpop.f32.mrb[0].mxu0
      %v2471 = vpop.f32.mrb[0].mxu0
      %v2472 = vadd.f32 %v363, %v2471
      %v2473 = vpop.f32.mrb[0].mxu0
      %2474 = vmatprep.mubr.bf16.mxu0 0
      %2475 = vmatmul.mubr.bf16.gmra.mrb[0].mxu0 %v2320
      %v2476 = vpop.f32.mrb[0].mxu0
      %v2477 = vadd.f32 %v363, %v2476
      %v2478 = vpop.f32.mrb[0].mxu0
      %v2479 = vpop.f32.mrb[0].mxu0
      %v2480 = vadd.f32 %v363, %v2479
      %v2481 = vpop.f32.mrb[0].mxu0
      %2482 = vdwg.mxu0
      %v2483 = vmax.f32 %v2357, 0.0
      %v2484 = vmax.f32 %v2360, 0.0
      %v2485 = vmax.f32 %v2365, 0.0
      %v2486 = vmax.f32 %v2368, 0.0
      %v2487 = vmax.f32 %v2373, 0.0
      %v2488 = vmax.f32 %v2376, 0.0
      %v2489 = vmax.f32 %v2381, 0.0
      %v2490 = vmax.f32 %v2384, 0.0
      %v2491 = vmax.f32 %v2389, 0.0
      %v2492 = vmax.f32 %v2392, 0.0
      %v2493 = vmax.f32 %v2397, 0.0
      %v2494 = vmax.f32 %v2400, 0.0
      %v2495 = vmax.f32 %v2405, 0.0
      %v2496 = vmax.f32 %v2408, 0.0
      %v2497 = vmax.f32 %v2413, 0.0
      %v2498 = vmax.f32 %v2416, 0.0
      %v2499 = vmax.f32 %v2421, 0.0
      %v2500 = vmax.f32 %v2424, 0.0
      %v2501 = vmax.f32 %v2429, 0.0
      %v2502 = vmax.f32 %v2432, 0.0
      %v2503 = vmax.f32 %v2437, 0.0
      %v2504 = vmax.f32 %v2440, 0.0
      %v2505 = vmax.f32 %v2445, 0.0
      %v2506 = vmax.f32 %v2448, 0.0
      %v2507 = vmax.f32 %v2453, 0.0
      %v2508 = vmax.f32 %v2456, 0.0
      %v2509 = vmax.f32 %v2461, 0.0
      %v2510 = vmax.f32 %v2464, 0.0
      %v2511 = vmax.f32 %v2469, 0.0
      %v2512 = vmax.f32 %v2472, 0.0
      %v2513 = vmax.f32 %v2477, 0.0
      %v2514 = vmax.f32 %v2480, 0.0
      %v2515 = vpack.c.bf16 %v2484, %v2483
      %v2516 = vpack.c.bf16 %v2486, %v2485
      %v2517 = vpack.c.bf16 %v2488, %v2487
      %v2518 = vpack.c.bf16 %v2490, %v2489
      %v2519 = vpack.c.bf16 %v2492, %v2491
      %v2520 = vpack.c.bf16 %v2494, %v2493
      %v2521 = vpack.c.bf16 %v2496, %v2495
      %v2522 = vpack.c.bf16 %v2498, %v2497
      %v2523 = vpack.c.bf16 %v2500, %v2499
      %v2524 = vpack.c.bf16 %v2502, %v2501
      %v2525 = vpack.c.bf16 %v2504, %v2503
      %v2526 = vpack.c.bf16 %v2506, %v2505
      %v2527 = vpack.c.bf16 %v2508, %v2507
      %v2528 = vpack.c.bf16 %v2510, %v2509
      %v2529 = vpack.c.bf16 %v2512, %v2511
      %v2530 = vpack.c.bf16 %v2514, %v2513
      %s2531 = scalar_lea.vmem %s3, 192
      %v2532 = vld [vmem:[%s2531] sm:$0xf]
      %v2533 = vld [vmem:[%s2531 + $0x4] sm:$0xf]
      %v2534 = vld [vmem:[%s2531 + $0x8] sm:$0xf]
      %v2535 = vld [vmem:[%s2531 + $0xc] sm:$0xf]
      %v2536 = vld [vmem:[%s2531 + $0x10] sm:$0xf]
      %v2537 = vld [vmem:[%s2531 + $0x14] sm:$0xf]
      %v2538 = vld [vmem:[%s2531 + $0x18] sm:$0xf]
      %v2539 = vld [vmem:[%s2531 + $0x1c] sm:$0xf]
      %v2540 = vld [vmem:[%s2531 + $0x20] sm:$0xf]
      %v2541 = vld [vmem:[%s2531 + $0x24] sm:$0xf]
      %v2542 = vld [vmem:[%s2531 + $0x28] sm:$0xf]
      %v2543 = vld [vmem:[%s2531 + $0x2c] sm:$0xf]
      %v2544 = vld [vmem:[%s2531 + $0x30] sm:$0xf]
      %v2545 = vld [vmem:[%s2531 + $0x34] sm:$0xf]
      %v2546 = vld [vmem:[%s2531 + $0x38] sm:$0xf]
      %v2547 = vld [vmem:[%s2531 + $0x3c] sm:$0xf]
      %v2564 = vunpack.c.l.b16 %v2532
      %v2565 = vunpack.c.l.b16 %v2533
      %v2566 = vunpack.c.l.b16 %v2534
      %v2567 = vunpack.c.l.b16 %v2535
      %v2568 = vunpack.c.l.b16 %v2536
      %v2569 = vunpack.c.l.b16 %v2537
      %v2570 = vunpack.c.l.b16 %v2538
      %v2571 = vunpack.c.l.b16 %v2539
      %v2572 = vunpack.c.l.b16 %v2540
      %v2573 = vunpack.c.l.b16 %v2541
      %v2574 = vunpack.c.l.b16 %v2542
      %v2575 = vunpack.c.l.b16 %v2543
      %v2576 = vunpack.c.l.b16 %v2544
      %v2577 = vunpack.c.l.b16 %v2545
      %v2578 = vunpack.c.l.b16 %v2546
      %v2579 = vunpack.c.l.b16 %v2547
      %v2580 = vpack.c.b16 %v2565, %v2564
      %v2581 = vpack.c.b16 %v2567, %v2566
      %v2582 = vpack.c.b16 %v2569, %v2568
      %v2583 = vpack.c.b16 %v2571, %v2570
      %v2584 = vpack.c.b16 %v2573, %v2572
      %v2585 = vpack.c.b16 %v2575, %v2574
      %v2586 = vpack.c.b16 %v2577, %v2576
      %v2587 = vpack.c.b16 %v2579, %v2578
      %2596 = vmatprep.subr.bf16.mxu0 0
      %2597 = vmatpush1.bf16.msra.mxu0 %v2580
      %2598 = vmatprep.subr.bf16.mxu0 0
      %2599 = vmatpush1.bf16.msra.mxu0 %v2581
      %2600 = vmatprep.subr.bf16.mxu0 0
      %2601 = vmatpush1.bf16.msra.mxu0 %v2582
      %2602 = vmatprep.subr.bf16.mxu0 0
      %2603 = vmatpush1.bf16.msra.mxu0 %v2583
      %2604 = vmatprep.subr.bf16.mxu0 0
      %2605 = vmatpush1.bf16.msra.mxu0 %v2584
      %2606 = vmatprep.subr.bf16.mxu0 0
      %2607 = vmatpush1.bf16.msra.mxu0 %v2585
      %2608 = vmatprep.subr.bf16.mxu0 0
      %2609 = vmatpush1.bf16.msra.mxu0 %v2586
      %2610 = vmatprep.subr.bf16.mxu0 0
      %2611 = vmatpush1.bf16.msra.mxu0 %v2587
      %2612 = vmatprep.subr.bf16.mxu0 0
      %2613 = vmatpush1.bf16.msra.mxu0 0
      %2614 = vmatprep.subr.bf16.mxu0 0
      %2615 = vmatpush1.bf16.msra.mxu0 0
      %2616 = vmatprep.subr.bf16.mxu0 0
      %2617 = vmatpush1.bf16.msra.mxu0 0
      %2618 = vmatprep.subr.bf16.mxu0 0
      %2619 = vmatpush1.bf16.msra.mxu0 0
      %2620 = vmatprep.subr.bf16.mxu0 0
      %2621 = vmatpush1.bf16.msra.mxu0 0
      %2622 = vmatprep.subr.bf16.mxu0 0
      %2623 = vmatpush1.bf16.msra.mxu0 0
      %2624 = vmatprep.subr.bf16.mxu0 0
      %2625 = vmatpush1.bf16.msra.mxu0 0
      %2626 = vmatprep.subr.bf16.mxu0 0
      %2627 = vmatpush1.bf16.msra.mxu0 0
      %2628 = vmatprep.mubr.bf16.mxu0 0
      %2629 = vmatmul.mubr.bf16.gmra.mrb[0].mxu0 %v2515
      %v2630 = vpop.f32.mrb[0].mxu0
      %v2631 = vadd.f32 0.0, %v2630
      %v2632 = vpop.f32.mrb[0].mxu0
      %v2633 = vpop.f32.mrb[0].mxu0
      %v2634 = vadd.f32 0.0, %v2633
      %v2635 = vpop.f32.mrb[0].mxu0
      %2636 = vmatprep.mubr.bf16.mxu0 0
      %2637 = vmatmul.mubr.bf16.gmra.mrb[0].mxu0 %v2516
      %v2638 = vpop.f32.mrb[0].mxu0
      %v2639 = vadd.f32 0.0, %v2638
      %v2640 = vpop.f32.mrb[0].mxu0
      %v2641 = vpop.f32.mrb[0].mxu0
      %v2642 = vadd.f32 0.0, %v2641
      %v2643 = vpop.f32.mrb[0].mxu0
      %2644 = vmatprep.mubr.bf16.mxu0 0
      %2645 = vmatmul.mubr.bf16.gmra.mrb[0].mxu0 %v2517
      %v2646 = vpop.f32.mrb[0].mxu0
      %v2647 = vadd.f32 0.0, %v2646
      %v2648 = vpop.f32.mrb[0].mxu0
      %v2649 = vpop.f32.mrb[0].mxu0
      %v2650 = vadd.f32 0.0, %v2649
      %v2651 = vpop.f32.mrb[0].mxu0
      %2652 = vmatprep.mubr.bf16.mxu0 0
      %2653 = vmatmul.mubr.bf16.gmra.mrb[0].mxu0 %v2518
      %v2654 = vpop.f32.mrb[0].mxu0
      %v2655 = vadd.f32 0.0, %v2654
      %v2656 = vpop.f32.mrb[0].mxu0
      %v2657 = vpop.f32.mrb[0].mxu0
      %v2658 = vadd.f32 0.0, %v2657
      %v2659 = vpop.f32.mrb[0].mxu0
      %2660 = vmatprep.mubr.bf16.mxu0 0
      %2661 = vmatmul.mubr.bf16.gmra.mrb[0].mxu0 %v2519
      %v2662 = vpop.f32.mrb[0].mxu0
      %v2663 = vadd.f32 0.0, %v2662
      %v2664 = vpop.f32.mrb[0].mxu0
      %v2665 = vpop.f32.mrb[0].mxu0
      %v2666 = vadd.f32 0.0, %v2665
      %v2667 = vpop.f32.mrb[0].mxu0
      %2668 = vmatprep.mubr.bf16.mxu0 0
      %2669 = vmatmul.mubr.bf16.gmra.mrb[0].mxu0 %v2520
      %v2670 = vpop.f32.mrb[0].mxu0
      %v2671 = vadd.f32 0.0, %v2670
      %v2672 = vpop.f32.mrb[0].mxu0
      %v2673 = vpop.f32.mrb[0].mxu0
      %v2674 = vadd.f32 0.0, %v2673
      %v2675 = vpop.f32.mrb[0].mxu0
      %2676 = vmatprep.mubr.bf16.mxu0 0
      %2677 = vmatmul.mubr.bf16.gmra.mrb[0].mxu0 %v2521
      %v2678 = vpop.f32.mrb[0].mxu0
      %v2679 = vadd.f32 0.0, %v2678
      %v2680 = vpop.f32.mrb[0].mxu0
      %v2681 = vpop.f32.mrb[0].mxu0
      %v2682 = vadd.f32 0.0, %v2681
      %v2683 = vpop.f32.mrb[0].mxu0
      %2684 = vmatprep.mubr.bf16.mxu0 0
      %2685 = vmatmul.mubr.bf16.gmra.mrb[0].mxu0 %v2522
      %v2686 = vpop.f32.mrb[0].mxu0
      %v2687 = vadd.f32 0.0, %v2686
      %v2688 = vpop.f32.mrb[0].mxu0
      %v2689 = vpop.f32.mrb[0].mxu0
      %v2690 = vadd.f32 0.0, %v2689
      %v2691 = vpop.f32.mrb[0].mxu0
      %2692 = vmatprep.mubr.bf16.mxu0 0
      %2693 = vmatmul.mubr.bf16.gmra.mrb[0].mxu0 %v2523
      %v2694 = vpop.f32.mrb[0].mxu0
      %v2695 = vadd.f32 0.0, %v2694
      %v2696 = vpop.f32.mrb[0].mxu0
      %v2697 = vpop.f32.mrb[0].mxu0
      %v2698 = vadd.f32 0.0, %v2697
      %v2699 = vpop.f32.mrb[0].mxu0
      %2700 = vmatprep.mubr.bf16.mxu0 0
      %2701 = vmatmul.mubr.bf16.gmra.mrb[0].mxu0 %v2524
      %v2702 = vpop.f32.mrb[0].mxu0
      %v2703 = vadd.f32 0.0, %v2702
      %v2704 = vpop.f32.mrb[0].mxu0
      %v2705 = vpop.f32.mrb[0].mxu0
      %v2706 = vadd.f32 0.0, %v2705
      %v2707 = vpop.f32.mrb[0].mxu0
      %2708 = vmatprep.mubr.bf16.mxu0 0
      %2709 = vmatmul.mubr.bf16.gmra.mrb[0].mxu0 %v2525
      %v2710 = vpop.f32.mrb[0].mxu0
      %v2711 = vadd.f32 0.0, %v2710
      %v2712 = vpop.f32.mrb[0].mxu0
      %v2713 = vpop.f32.mrb[0].mxu0
      %v2714 = vadd.f32 0.0, %v2713
      %v2715 = vpop.f32.mrb[0].mxu0
      %2716 = vmatprep.mubr.bf16.mxu0 0
      %2717 = vmatmul.mubr.bf16.gmra.mrb[0].mxu0 %v2526
      %v2718 = vpop.f32.mrb[0].mxu0
      %v2719 = vadd.f32 0.0, %v2718
      %v2720 = vpop.f32.mrb[0].mxu0
      %v2721 = vpop.f32.mrb[0].mxu0
      %v2722 = vadd.f32 0.0, %v2721
      %v2723 = vpop.f32.mrb[0].mxu0
      %2724 = vmatprep.mubr.bf16.mxu0 0
      %2725 = vmatmul.mubr.bf16.gmra.mrb[0].mxu0 %v2527
      %v2726 = vpop.f32.mrb[0].mxu0
      %v2727 = vadd.f32 0.0, %v2726
      %v2728 = vpop.f32.mrb[0].mxu0
      %v2729 = vpop.f32.mrb[0].mxu0
      %v2730 = vadd.f32 0.0, %v2729
      %v2731 = vpop.f32.mrb[0].mxu0
      %2732 = vmatprep.mubr.bf16.mxu0 0
      %2733 = vmatmul.mubr.bf16.gmra.mrb[0].mxu0 %v2528
      %v2734 = vpop.f32.mrb[0].mxu0
      %v2735 = vadd.f32 0.0, %v2734
      %v2736 = vpop.f32.mrb[0].mxu0
      %v2737 = vpop.f32.mrb[0].mxu0
      %v2738 = vadd.f32 0.0, %v2737
      %v2739 = vpop.f32.mrb[0].mxu0
      %2740 = vmatprep.mubr.bf16.mxu0 0
      %2741 = vmatmul.mubr.bf16.gmra.mrb[0].mxu0 %v2529
      %v2742 = vpop.f32.mrb[0].mxu0
      %v2743 = vadd.f32 0.0, %v2742
      %v2744 = vpop.f32.mrb[0].mxu0
      %v2745 = vpop.f32.mrb[0].mxu0
      %v2746 = vadd.f32 0.0, %v2745
      %v2747 = vpop.f32.mrb[0].mxu0
      %2748 = vmatprep.mubr.bf16.mxu0 0
      %2749 = vmatmul.mubr.bf16.gmra.mrb[0].mxu0 %v2530
      %v2750 = vpop.f32.mrb[0].mxu0
      %v2751 = vadd.f32 0.0, %v2750
      %v2752 = vpop.f32.mrb[0].mxu0
      %v2753 = vpop.f32.mrb[0].mxu0
      %v2754 = vadd.f32 0.0, %v2753
      %v2755 = vpop.f32.mrb[0].mxu0
      %2756 = vdwg.mxu0
      %v2757 = vadd.f32 %v2129, %v2631
      %v2758 = vadd.f32 %v2130, %v2634
      %v2759 = vadd.f32 %v2131, %v2639
      %v2760 = vadd.f32 %v2132, %v2642
      %v2761 = vadd.f32 %v2133, %v2647
      %v2762 = vadd.f32 %v2134, %v2650
      %v2763 = vadd.f32 %v2135, %v2655
      %v2764 = vadd.f32 %v2136, %v2658
      %v2765 = vadd.f32 %v2137, %v2663
      %v2766 = vadd.f32 %v2138, %v2666
      %v2767 = vadd.f32 %v2139, %v2671
      %v2768 = vadd.f32 %v2140, %v2674
      %v2769 = vadd.f32 %v2141, %v2679
      %v2770 = vadd.f32 %v2142, %v2682
      %v2771 = vadd.f32 %v2143, %v2687
      %v2772 = vadd.f32 %v2144, %v2690
      %v2773 = vadd.f32 %v2145, %v2695
      %v2774 = vadd.f32 %v2146, %v2698
      %v2775 = vadd.f32 %v2147, %v2703
      %v2776 = vadd.f32 %v2148, %v2706
      %v2777 = vadd.f32 %v2149, %v2711
      %v2778 = vadd.f32 %v2150, %v2714
      %v2779 = vadd.f32 %v2151, %v2719
      %v2780 = vadd.f32 %v2152, %v2722
      %v2781 = vadd.f32 %v2153, %v2727
      %v2782 = vadd.f32 %v2154, %v2730
      %v2783 = vadd.f32 %v2155, %v2735
      %v2784 = vadd.f32 %v2156, %v2738
      %v2785 = vadd.f32 %v2157, %v2743
      %v2786 = vadd.f32 %v2158, %v2746
      %v2787 = vadd.f32 %v2159, %v2751
      %v2788 = vadd.f32 %v2160, %v2754
      %v2789 = vld [vmem:[%s4] sm:$0x1]
      %v2791 = vlaneseq
      %v2792 = vshrl.u32 %v2791, 7
      %v2793 = vsub.s32 0, %v2792
      %v2794 = vrot.slane %v2789, %v2793
      %v2796 = vadd.f32 %v2757, %v2794
      %v2797 = vadd.f32 %v2758, %v2794
      %v2798 = vadd.f32 %v2759, %v2794
      %v2799 = vadd.f32 %v2760, %v2794
      %v2800 = vadd.f32 %v2761, %v2794
      %v2801 = vadd.f32 %v2762, %v2794
      %v2802 = vadd.f32 %v2763, %v2794
      %v2803 = vadd.f32 %v2764, %v2794
      %v2804 = vadd.f32 %v2765, %v2794
      %v2805 = vadd.f32 %v2766, %v2794
      %v2806 = vadd.f32 %v2767, %v2794
      %v2807 = vadd.f32 %v2768, %v2794
      %v2808 = vadd.f32 %v2769, %v2794
      %v2809 = vadd.f32 %v2770, %v2794
      %v2810 = vadd.f32 %v2771, %v2794
      %v2811 = vadd.f32 %v2772, %v2794
      %v2812 = vadd.f32 %v2773, %v2794
      %v2813 = vadd.f32 %v2774, %v2794
      %v2814 = vadd.f32 %v2775, %v2794
      %v2815 = vadd.f32 %v2776, %v2794
      %v2816 = vadd.f32 %v2777, %v2794
      %v2817 = vadd.f32 %v2778, %v2794
      %v2818 = vadd.f32 %v2779, %v2794
      %v2819 = vadd.f32 %v2780, %v2794
      %v2820 = vadd.f32 %v2781, %v2794
      %v2821 = vadd.f32 %v2782, %v2794
      %v2822 = vadd.f32 %v2783, %v2794
      %v2823 = vadd.f32 %v2784, %v2794
      %v2824 = vadd.f32 %v2785, %v2794
      %v2825 = vadd.f32 %v2786, %v2794
      %v2826 = vadd.f32 %v2787, %v2794
      %v2827 = vadd.f32 %v2788, %v2794
      %v2828 = vmax.f32 %v2796, 0.0
      %v2829 = vmax.f32 %v2797, 0.0
      %v2830 = vmax.f32 %v2798, 0.0
      %v2831 = vmax.f32 %v2799, 0.0
      %v2832 = vmax.f32 %v2800, 0.0
      %v2833 = vmax.f32 %v2801, 0.0
      %v2834 = vmax.f32 %v2802, 0.0
      %v2835 = vmax.f32 %v2803, 0.0
      %v2836 = vmax.f32 %v2804, 0.0
      %v2837 = vmax.f32 %v2805, 0.0
      %v2838 = vmax.f32 %v2806, 0.0
      %v2839 = vmax.f32 %v2807, 0.0
      %v2840 = vmax.f32 %v2808, 0.0
      %v2841 = vmax.f32 %v2809, 0.0
      %v2842 = vmax.f32 %v2810, 0.0
      %v2843 = vmax.f32 %v2811, 0.0
      %v2844 = vmax.f32 %v2812, 0.0
      %v2845 = vmax.f32 %v2813, 0.0
      %v2846 = vmax.f32 %v2814, 0.0
      %v2847 = vmax.f32 %v2815, 0.0
      %v2848 = vmax.f32 %v2816, 0.0
      %v2849 = vmax.f32 %v2817, 0.0
      %v2850 = vmax.f32 %v2818, 0.0
      %v2851 = vmax.f32 %v2819, 0.0
      %v2852 = vmax.f32 %v2820, 0.0
      %v2853 = vmax.f32 %v2821, 0.0
      %v2854 = vmax.f32 %v2822, 0.0
      %v2855 = vmax.f32 %v2823, 0.0
      %v2856 = vmax.f32 %v2824, 0.0
      %v2857 = vmax.f32 %v2825, 0.0
      %v2858 = vmax.f32 %v2826, 0.0
      %v2859 = vmax.f32 %v2827, 0.0
      %v2860 = vpack.c.bf16 %v2829, %v2828
      %v2861 = vpack.c.bf16 %v2831, %v2830
      %v2862 = vpack.c.bf16 %v2833, %v2832
      %v2863 = vpack.c.bf16 %v2835, %v2834
      %v2864 = vpack.c.bf16 %v2837, %v2836
      %v2865 = vpack.c.bf16 %v2839, %v2838
      %v2866 = vpack.c.bf16 %v2841, %v2840
      %v2867 = vpack.c.bf16 %v2843, %v2842
      %v2868 = vpack.c.bf16 %v2845, %v2844
      %v2869 = vpack.c.bf16 %v2847, %v2846
      %v2870 = vpack.c.bf16 %v2849, %v2848
      %v2871 = vpack.c.bf16 %v2851, %v2850
      %v2872 = vpack.c.bf16 %v2853, %v2852
      %v2873 = vpack.c.bf16 %v2855, %v2854
      %v2874 = vpack.c.bf16 %v2857, %v2856
      %v2875 = vpack.c.bf16 %v2859, %v2858
      %v2876 = vld [vmem:[%s5] sm:$0xf]
      %v2877 = vld [vmem:[%s5 + $0x4] sm:$0xf]
      %v2878 = vld [vmem:[%s5 + $0x8] sm:$0xf]
      %v2879 = vld [vmem:[%s5 + $0xc] sm:$0xf]
      %v2880 = vld [vmem:[%s5 + $0x10] sm:$0xf]
      %v2881 = vld [vmem:[%s5 + $0x14] sm:$0xf]
      %v2882 = vld [vmem:[%s5 + $0x18] sm:$0xf]
      %v2883 = vld [vmem:[%s5 + $0x1c] sm:$0xf]
      %v2884 = vld [vmem:[%s5 + $0x20] sm:$0xf]
      %v2885 = vld [vmem:[%s5 + $0x24] sm:$0xf]
      %v2886 = vld [vmem:[%s5 + $0x28] sm:$0xf]
      %v2887 = vld [vmem:[%s5 + $0x2c] sm:$0xf]
      %v2888 = vld [vmem:[%s5 + $0x30] sm:$0xf]
      %v2889 = vld [vmem:[%s5 + $0x34] sm:$0xf]
      %v2890 = vld [vmem:[%s5 + $0x38] sm:$0xf]
      %v2891 = vld [vmem:[%s5 + $0x3c] sm:$0xf]
      %v2892 = vld [vmem:[%s6] sm:$0x1]
      %v2894 = vlaneseq
      %v2895 = vshrl.u32 %v2894, 7
      %v2896 = vsub.s32 0, %v2895
      %v2897 = vrot.slane %v2892, %v2896
      %v2915 = vunpack.c.l.b16 %v2876
      %v2916 = vunpack.c.l.b16 %v2877
      %v2917 = vunpack.c.l.b16 %v2878
      %v2918 = vunpack.c.l.b16 %v2879
      %v2919 = vunpack.c.l.b16 %v2880
      %v2920 = vunpack.c.l.b16 %v2881
      %v2921 = vunpack.c.l.b16 %v2882
      %v2922 = vunpack.c.l.b16 %v2883
      %v2923 = vunpack.c.l.b16 %v2884
      %v2924 = vunpack.c.l.b16 %v2885
      %v2925 = vunpack.c.l.b16 %v2886
      %v2926 = vunpack.c.l.b16 %v2887
      %v2927 = vunpack.c.l.b16 %v2888
      %v2928 = vunpack.c.l.b16 %v2889
      %v2929 = vunpack.c.l.b16 %v2890
      %v2930 = vunpack.c.l.b16 %v2891
      %v2931 = vpack.c.b16 %v2916, %v2915
      %v2932 = vpack.c.b16 %v2918, %v2917
      %v2933 = vpack.c.b16 %v2920, %v2919
      %v2934 = vpack.c.b16 %v2922, %v2921
      %v2935 = vpack.c.b16 %v2924, %v2923
      %v2936 = vpack.c.b16 %v2926, %v2925
      %v2937 = vpack.c.b16 %v2928, %v2927
      %v2938 = vpack.c.b16 %v2930, %v2929
      %2947 = vmatprep.subr.bf16.mxu0 0
      %2948 = vmatpush1.bf16.msra.mxu0 %v2931
      %2949 = vmatprep.subr.bf16.mxu0 0
      %2950 = vmatpush1.bf16.msra.mxu0 %v2932
      %2951 = vmatprep.subr.bf16.mxu0 0
      %2952 = vmatpush1.bf16.msra.mxu0 %v2933
      %2953 = vmatprep.subr.bf16.mxu0 0
      %2954 = vmatpush1.bf16.msra.mxu0 %v2934
      %2955 = vmatprep.subr.bf16.mxu0 0
      %2956 = vmatpush1.bf16.msra.mxu0 %v2935
      %2957 = vmatprep.subr.bf16.mxu0 0
      %2958 = vmatpush1.bf16.msra.mxu0 %v2936
      %2959 = vmatprep.subr.bf16.mxu0 0
      %2960 = vmatpush1.bf16.msra.mxu0 %v2937
      %2961 = vmatprep.subr.bf16.mxu0 0
      %2962 = vmatpush1.bf16.msra.mxu0 %v2938
      %2963 = vmatprep.subr.bf16.mxu0 0
      %2964 = vmatpush1.bf16.msra.mxu0 0
      %2965 = vmatprep.subr.bf16.mxu0 0
      %2966 = vmatpush1.bf16.msra.mxu0 0
      %2967 = vmatprep.subr.bf16.mxu0 0
      %2968 = vmatpush1.bf16.msra.mxu0 0
      %2969 = vmatprep.subr.bf16.mxu0 0
      %2970 = vmatpush1.bf16.msra.mxu0 0
      %2971 = vmatprep.subr.bf16.mxu0 0
      %2972 = vmatpush1.bf16.msra.mxu0 0
      %2973 = vmatprep.subr.bf16.mxu0 0
      %2974 = vmatpush1.bf16.msra.mxu0 0
      %2975 = vmatprep.subr.bf16.mxu0 0
      %2976 = vmatpush1.bf16.msra.mxu0 0
      %2977 = vmatprep.subr.bf16.mxu0 0
      %2978 = vmatpush1.bf16.msra.mxu0 0
      %2979 = vmatprep.mubr.bf16.mxu0 0
      %2980 = vmatmul.mubr.bf16.gmra.mrb[0].mxu0 %v2860
      %v2981 = vpop.f32.mrb[0].mxu0
      %v2982 = vadd.f32 %v2897, %v2981
      %v2983 = vpop.f32.mrb[0].mxu0
      %v2984 = vpop.f32.mrb[0].mxu0
      %v2985 = vadd.f32 %v2897, %v2984
      %v2986 = vpop.f32.mrb[0].mxu0
      %2987 = vmatprep.mubr.bf16.mxu0 0
      %2988 = vmatmul.mubr.bf16.gmra.mrb[0].mxu0 %v2861
      %v2989 = vpop.f32.mrb[0].mxu0
      %v2990 = vadd.f32 %v2897, %v2989
      %v2991 = vpop.f32.mrb[0].mxu0
      %v2992 = vpop.f32.mrb[0].mxu0
      %v2993 = vadd.f32 %v2897, %v2992
      %v2994 = vpop.f32.mrb[0].mxu0
      %2995 = vmatprep.mubr.bf16.mxu0 0
      %2996 = vmatmul.mubr.bf16.gmra.mrb[0].mxu0 %v2862
      %v2997 = vpop.f32.mrb[0].mxu0
      %v2998 = vadd.f32 %v2897, %v2997
      %v2999 = vpop.f32.mrb[0].mxu0
      %v3000 = vpop.f32.mrb[0].mxu0
      %v3001 = vadd.f32 %v2897, %v3000
      %v3002 = vpop.f32.mrb[0].mxu0
      %3003 = vmatprep.mubr.bf16.mxu0 0
      %3004 = vmatmul.mubr.bf16.gmra.mrb[0].mxu0 %v2863
      %v3005 = vpop.f32.mrb[0].mxu0
      %v3006 = vadd.f32 %v2897, %v3005
      %v3007 = vpop.f32.mrb[0].mxu0
      %v3008 = vpop.f32.mrb[0].mxu0
      %v3009 = vadd.f32 %v2897, %v3008
      %v3010 = vpop.f32.mrb[0].mxu0
      %3011 = vmatprep.mubr.bf16.mxu0 0
      %3012 = vmatmul.mubr.bf16.gmra.mrb[0].mxu0 %v2864
      %v3013 = vpop.f32.mrb[0].mxu0
      %v3014 = vadd.f32 %v2897, %v3013
      %v3015 = vpop.f32.mrb[0].mxu0
      %v3016 = vpop.f32.mrb[0].mxu0
      %v3017 = vadd.f32 %v2897, %v3016
      %v3018 = vpop.f32.mrb[0].mxu0
      %3019 = vmatprep.mubr.bf16.mxu0 0
      %3020 = vmatmul.mubr.bf16.gmra.mrb[0].mxu0 %v2865
      %v3021 = vpop.f32.mrb[0].mxu0
      %v3022 = vadd.f32 %v2897, %v3021
      %v3023 = vpop.f32.mrb[0].mxu0
      %v3024 = vpop.f32.mrb[0].mxu0
      %v3025 = vadd.f32 %v2897, %v3024
      %v3026 = vpop.f32.mrb[0].mxu0
      %3027 = vmatprep.mubr.bf16.mxu0 0
      %3028 = vmatmul.mubr.bf16.gmra.mrb[0].mxu0 %v2866
      %v3029 = vpop.f32.mrb[0].mxu0
      %v3030 = vadd.f32 %v2897, %v3029
      %v3031 = vpop.f32.mrb[0].mxu0
      %v3032 = vpop.f32.mrb[0].mxu0
      %v3033 = vadd.f32 %v2897, %v3032
      %v3034 = vpop.f32.mrb[0].mxu0
      %3035 = vmatprep.mubr.bf16.mxu0 0
      %3036 = vmatmul.mubr.bf16.gmra.mrb[0].mxu0 %v2867
      %v3037 = vpop.f32.mrb[0].mxu0
      %v3038 = vadd.f32 %v2897, %v3037
      %v3039 = vpop.f32.mrb[0].mxu0
      %v3040 = vpop.f32.mrb[0].mxu0
      %v3041 = vadd.f32 %v2897, %v3040
      %v3042 = vpop.f32.mrb[0].mxu0
      %3043 = vmatprep.mubr.bf16.mxu0 0
      %3044 = vmatmul.mubr.bf16.gmra.mrb[0].mxu0 %v2868
      %v3045 = vpop.f32.mrb[0].mxu0
      %v3046 = vadd.f32 %v2897, %v3045
      %v3047 = vpop.f32.mrb[0].mxu0
      %v3048 = vpop.f32.mrb[0].mxu0
      %v3049 = vadd.f32 %v2897, %v3048
      %v3050 = vpop.f32.mrb[0].mxu0
      %3051 = vmatprep.mubr.bf16.mxu0 0
      %3052 = vmatmul.mubr.bf16.gmra.mrb[0].mxu0 %v2869
      %v3053 = vpop.f32.mrb[0].mxu0
      %v3054 = vadd.f32 %v2897, %v3053
      %v3055 = vpop.f32.mrb[0].mxu0
      %v3056 = vpop.f32.mrb[0].mxu0
      %v3057 = vadd.f32 %v2897, %v3056
      %v3058 = vpop.f32.mrb[0].mxu0
      %3059 = vmatprep.mubr.bf16.mxu0 0
      %3060 = vmatmul.mubr.bf16.gmra.mrb[0].mxu0 %v2870
      %v3061 = vpop.f32.mrb[0].mxu0
      %v3062 = vadd.f32 %v2897, %v3061
      %v3063 = vpop.f32.mrb[0].mxu0
      %v3064 = vpop.f32.mrb[0].mxu0
      %v3065 = vadd.f32 %v2897, %v3064
      %v3066 = vpop.f32.mrb[0].mxu0
      %3067 = vmatprep.mubr.bf16.mxu0 0
      %3068 = vmatmul.mubr.bf16.gmra.mrb[0].mxu0 %v2871
      %v3069 = vpop.f32.mrb[0].mxu0
      %v3070 = vadd.f32 %v2897, %v3069
      %v3071 = vpop.f32.mrb[0].mxu0
      %v3072 = vpop.f32.mrb[0].mxu0
      %v3073 = vadd.f32 %v2897, %v3072
      %v3074 = vpop.f32.mrb[0].mxu0
      %3075 = vmatprep.mubr.bf16.mxu0 0
      %3076 = vmatmul.mubr.bf16.gmra.mrb[0].mxu0 %v2872
      %v3077 = vpop.f32.mrb[0].mxu0
      %v3078 = vadd.f32 %v2897, %v3077
      %v3079 = vpop.f32.mrb[0].mxu0
      %v3080 = vpop.f32.mrb[0].mxu0
      %v3081 = vadd.f32 %v2897, %v3080
      %v3082 = vpop.f32.mrb[0].mxu0
      %3083 = vmatprep.mubr.bf16.mxu0 0
      %3084 = vmatmul.mubr.bf16.gmra.mrb[0].mxu0 %v2873
      %v3085 = vpop.f32.mrb[0].mxu0
      %v3086 = vadd.f32 %v2897, %v3085
      %v3087 = vpop.f32.mrb[0].mxu0
      %v3088 = vpop.f32.mrb[0].mxu0
      %v3089 = vadd.f32 %v2897, %v3088
      %v3090 = vpop.f32.mrb[0].mxu0
      %3091 = vmatprep.mubr.bf16.mxu0 0
      %3092 = vmatmul.mubr.bf16.gmra.mrb[0].mxu0 %v2874
      %v3093 = vpop.f32.mrb[0].mxu0
      %v3094 = vadd.f32 %v2897, %v3093
      %v3095 = vpop.f32.mrb[0].mxu0
      %v3096 = vpop.f32.mrb[0].mxu0
      %v3097 = vadd.f32 %v2897, %v3096
      %v3098 = vpop.f32.mrb[0].mxu0
      %3099 = vmatprep.mubr.bf16.mxu0 0
      %3100 = vmatmul.mubr.bf16.gmra.mrb[0].mxu0 %v2875
      %v3101 = vpop.f32.mrb[0].mxu0
      %v3102 = vadd.f32 %v2897, %v3101
      %v3103 = vpop.f32.mrb[0].mxu0
      %v3104 = vpop.f32.mrb[0].mxu0
      %v3105 = vadd.f32 %v2897, %v3104
      %v3106 = vpop.f32.mrb[0].mxu0
      %3107 = vdwg.mxu0
      %v3108 = vmax.f32 %v2982, 0.0
      %v3109 = vmax.f32 %v2985, 0.0
      %v3110 = vmax.f32 %v2990, 0.0
      %v3111 = vmax.f32 %v2993, 0.0
      %v3112 = vmax.f32 %v2998, 0.0
      %v3113 = vmax.f32 %v3001, 0.0
      %v3114 = vmax.f32 %v3006, 0.0
      %v3115 = vmax.f32 %v3009, 0.0
      %v3116 = vmax.f32 %v3014, 0.0
      %v3117 = vmax.f32 %v3017, 0.0
      %v3118 = vmax.f32 %v3022, 0.0
      %v3119 = vmax.f32 %v3025, 0.0
      %v3120 = vmax.f32 %v3030, 0.0
      %v3121 = vmax.f32 %v3033, 0.0
      %v3122 = vmax.f32 %v3038, 0.0
      %v3123 = vmax.f32 %v3041, 0.0
      %v3124 = vmax.f32 %v3046, 0.0
      %v3125 = vmax.f32 %v3049, 0.0
      %v3126 = vmax.f32 %v3054, 0.0
      %v3127 = vmax.f32 %v3057, 0.0
      %v3128 = vmax.f32 %v3062, 0.0
      %v3129 = vmax.f32 %v3065, 0.0
      %v3130 = vmax.f32 %v3070, 0.0
      %v3131 = vmax.f32 %v3073, 0.0
      %v3132 = vmax.f32 %v3078, 0.0
      %v3133 = vmax.f32 %v3081, 0.0
      %v3134 = vmax.f32 %v3086, 0.0
      %v3135 = vmax.f32 %v3089, 0.0
      %v3136 = vmax.f32 %v3094, 0.0
      %v3137 = vmax.f32 %v3097, 0.0
      %v3138 = vmax.f32 %v3102, 0.0
      %v3139 = vmax.f32 %v3105, 0.0
      %v3140 = vpack.c.bf16 %v3109, %v3108
      %v3141 = vpack.c.bf16 %v3111, %v3110
      %v3142 = vpack.c.bf16 %v3113, %v3112
      %v3143 = vpack.c.bf16 %v3115, %v3114
      %v3144 = vpack.c.bf16 %v3117, %v3116
      %v3145 = vpack.c.bf16 %v3119, %v3118
      %v3146 = vpack.c.bf16 %v3121, %v3120
      %v3147 = vpack.c.bf16 %v3123, %v3122
      %v3148 = vpack.c.bf16 %v3125, %v3124
      %v3149 = vpack.c.bf16 %v3127, %v3126
      %v3150 = vpack.c.bf16 %v3129, %v3128
      %v3151 = vpack.c.bf16 %v3131, %v3130
      %v3152 = vpack.c.bf16 %v3133, %v3132
      %v3153 = vpack.c.bf16 %v3135, %v3134
      %v3154 = vpack.c.bf16 %v3137, %v3136
      %v3155 = vpack.c.bf16 %v3139, %v3138
      %v3172 = vunpack.c.l.b16 %v3140
      %v3173 = vunpack.c.h.b16 %v3140
      %v3174 = vunpack.c.l.b16 %v3141
      %v3175 = vunpack.c.h.b16 %v3141
      %v3176 = vunpack.c.l.b16 %v3142
      %v3177 = vunpack.c.h.b16 %v3142
      %v3178 = vunpack.c.l.b16 %v3143
      %v3179 = vunpack.c.h.b16 %v3143
      %v3180 = vunpack.c.l.b16 %v3144
      %v3181 = vunpack.c.h.b16 %v3144
      %v3182 = vunpack.c.l.b16 %v3145
      %v3183 = vunpack.c.h.b16 %v3145
      %v3184 = vunpack.c.l.b16 %v3146
      %v3185 = vunpack.c.h.b16 %v3146
      %v3186 = vunpack.c.l.b16 %v3147
      %v3187 = vunpack.c.h.b16 %v3147
      %v3188 = vunpack.c.l.b16 %v3148
      %v3189 = vunpack.c.h.b16 %v3148
      %v3190 = vunpack.c.l.b16 %v3149
      %v3191 = vunpack.c.h.b16 %v3149
      %v3192 = vunpack.c.l.b16 %v3150
      %v3193 = vunpack.c.h.b16 %v3150
      %v3194 = vunpack.c.l.b16 %v3151
      %v3195 = vunpack.c.h.b16 %v3151
      %v3196 = vunpack.c.l.b16 %v3152
      %v3197 = vunpack.c.h.b16 %v3152
      %v3198 = vunpack.c.l.b16 %v3153
      %v3199 = vunpack.c.h.b16 %v3153
      %v3200 = vunpack.c.l.b16 %v3154
      %v3201 = vunpack.c.h.b16 %v3154
      %v3202 = vunpack.c.l.b16 %v3155
      %v3203 = vunpack.c.h.b16 %v3155
      %v3204 = vpack.c.b16 %v3172, %v3172
      %v3205 = vpack.c.b16 %v3173, %v3173
      %v3206 = vpack.c.b16 %v3174, %v3174
      %v3207 = vpack.c.b16 %v3175, %v3175
      %v3208 = vpack.c.b16 %v3176, %v3176
      %v3209 = vpack.c.b16 %v3177, %v3177
      %v3210 = vpack.c.b16 %v3178, %v3178
      %v3211 = vpack.c.b16 %v3179, %v3179
      %v3212 = vpack.c.b16 %v3180, %v3180
      %v3213 = vpack.c.b16 %v3181, %v3181
      %v3214 = vpack.c.b16 %v3182, %v3182
      %v3215 = vpack.c.b16 %v3183, %v3183
      %v3216 = vpack.c.b16 %v3184, %v3184
      %v3217 = vpack.c.b16 %v3185, %v3185
      %v3218 = vpack.c.b16 %v3186, %v3186
      %v3219 = vpack.c.b16 %v3187, %v3187
      %v3220 = vpack.c.b16 %v3188, %v3188
      %v3221 = vpack.c.b16 %v3189, %v3189
      %v3222 = vpack.c.b16 %v3190, %v3190
      %v3223 = vpack.c.b16 %v3191, %v3191
      %v3224 = vpack.c.b16 %v3192, %v3192
      %v3225 = vpack.c.b16 %v3193, %v3193
      %v3226 = vpack.c.b16 %v3194, %v3194
      %v3227 = vpack.c.b16 %v3195, %v3195
      %v3228 = vpack.c.b16 %v3196, %v3196
      %v3229 = vpack.c.b16 %v3197, %v3197
      %v3230 = vpack.c.b16 %v3198, %v3198
      %v3231 = vpack.c.b16 %v3199, %v3199
      %v3232 = vpack.c.b16 %v3200, %v3200
      %v3233 = vpack.c.b16 %v3201, %v3201
      %v3234 = vpack.c.b16 %v3202, %v3202
      %v3235 = vpack.c.b16 %v3203, %v3203
      %3268 = vst [vmem:[%s321] sm:$0xf] %v3204
      %3269 = vst [vmem:[%s321 + $0x4] sm:$0xf] %v3205
      %3270 = vst [vmem:[%s321 + $0x8] sm:$0xf] %v3206
      %3271 = vst [vmem:[%s321 + $0xc] sm:$0xf] %v3207
      %3272 = vst [vmem:[%s321 + $0x10] sm:$0xf] %v3208
      %3273 = vst [vmem:[%s321 + $0x14] sm:$0xf] %v3209
      %3274 = vst [vmem:[%s321 + $0x18] sm:$0xf] %v3210
      %3275 = vst [vmem:[%s321 + $0x1c] sm:$0xf] %v3211
      %3276 = vst [vmem:[%s321 + $0x20] sm:$0xf] %v3212
      %3277 = vst [vmem:[%s321 + $0x24] sm:$0xf] %v3213
      %3278 = vst [vmem:[%s321 + $0x28] sm:$0xf] %v3214
      %3279 = vst [vmem:[%s321 + $0x2c] sm:$0xf] %v3215
      %3280 = vst [vmem:[%s321 + $0x30] sm:$0xf] %v3216
      %3281 = vst [vmem:[%s321 + $0x34] sm:$0xf] %v3217
      %3282 = vst [vmem:[%s321 + $0x38] sm:$0xf] %v3218
      %3283 = vst [vmem:[%s321 + $0x3c] sm:$0xf] %v3219
      %3284 = vst [vmem:[%s321 + $0x40] sm:$0xf] %v3220
      %3285 = vst [vmem:[%s321 + $0x44] sm:$0xf] %v3221
      %3286 = vst [vmem:[%s321 + $0x48] sm:$0xf] %v3222
      %3287 = vst [vmem:[%s321 + $0x4c] sm:$0xf] %v3223
      %3288 = vst [vmem:[%s321 + $0x50] sm:$0xf] %v3224
      %3289 = vst [vmem:[%s321 + $0x54] sm:$0xf] %v3225
      %3290 = vst [vmem:[%s321 + $0x58] sm:$0xf] %v3226
      %3291 = vst [vmem:[%s321 + $0x5c] sm:$0xf] %v3227
      %3292 = vst [vmem:[%s321 + $0x60] sm:$0xf] %v3228
      %3293 = vst [vmem:[%s321 + $0x64] sm:$0xf] %v3229
      %3294 = vst [vmem:[%s321 + $0x68] sm:$0xf] %v3230
      %3295 = vst [vmem:[%s321 + $0x6c] sm:$0xf] %v3231
      %3296 = vst [vmem:[%s321 + $0x70] sm:$0xf] %v3232
      %3297 = vst [vmem:[%s321 + $0x74] sm:$0xf] %v3233
      %3298 = vst [vmem:[%s321 + $0x78] sm:$0xf] %v3234
      %3299 = vst [vmem:[%s321 + $0x7c] sm:$0xf] %v3235
      %s3300 = smul.u32 16, %s23
      %p3301 = scmp.lt.s32.totalorder %s22, 1
      %s3302 = scalar_select %p3301, %s22, 1
      %p3303 = scmp.lt.s32.totalorder %s3300, 15
      %s3304 = scalar_select %p3303, %s3300, 15
      %s3305 = smul.addr %s3304, 2
      %s3306 = smul.addr %s3302, 32
      %s3307 = sadd.s32 %s3305, %s3306
      %s3308 = smul.addr %s3307, 4
      %s3309 = scalar_lea.vmem %s7, %s3308
      // Predicated region
      $region49: #{backbone_base_forward.4} parent=47 // pred_check
        %p3310 = pneg %p204
      $region50: #{backbone_base_forward.4} parent=47 // pred_check_branch
        %3312 = sbr.rel (%p3310) target = $region52
      $region51: #{backbone_base_forward.4} parent=47 // pred_region
        %s3313 = smul.u32 16, %s23
      $region52: #{backbone_base_forward.4} parent=47 // pred_fallthru
        _
    $region48: #{backbone_base_forward.4} parent=5 // pred_fallthru
      _
    %p3314 = scmp.le.s32.totalorder 2, %s13
    // Predicated region
    $region53: #{backbone_base_forward.4} parent=5 // pred_check
      %p3315 = pneg %p3314
    $region54: #{backbone_base_forward.4} parent=5 // pred_check_branch
      %3317 = sbr.rel (%p3315) target = $region56
    $region55: #{backbone_base_forward.4} parent=5 // pred_region
      %s3318 = ssub.s32 %s13, 2
      // Predicated region
      $region57: #{backbone_base_forward.4} parent=55 // pred_check
        %p3319 = pneg %p210
      $region58: #{backbone_base_forward.4} parent=55 // pred_check_branch
        %3321 = sbr.rel (%p3319) target = $region60
      $region59: #{backbone_base_forward.4} parent=55 // pred_region
        %s3322 = smul.u32 16, %s25
        %p3323 = scmp.lt.s32.totalorder %s24, 1
        %s3324 = scalar_select %p3323, %s24, 1
        %p3325 = scmp.lt.s32.totalorder %s3322, 15
        %s3326 = scalar_select %p3325, %s3322, 15
        %s3327 = smul.addr %s3326, 2
        %s3328 = smul.addr %s3324, 32
        %s3329 = sadd.s32 %s3327, %s3328
        %s3330 = smul.addr %s3329, 4
        %s3331 = scalar_lea.vmem %s7, %s3330
      $region60: #{backbone_base_forward.4} parent=55 // pred_fallthru
        _
    $region56: #{backbone_base_forward.4} parent=5 // pred_fallthru
      _
  $region6: #{backbone_base_forward.4} parent=0 // loop_footer
    %s17 = sadd.s32 1, %s13
  $region7: #{backbone_base_forward.4} parent=0 // loop_footer_branch
    %12 = sbr.rel target = $region3
  $region8: #{backbone_base_forward.4} parent=0 // loop_exit
    _

// kernel: backbone_base_forward.5
$region0: #{backbone_base_forward.5}
  #allocation0 [shape = 'u32[]', space=smem, size = 0x4, offset = 0x4, fixed_abs, tag = 'smem constant byte address 0x4 - core index']
  #allocation1 [shape = 'u32[144,128]{1,0:T(1,128)}', space=vmem, size = 0x12000, scoped, tag = 'internal scratch']
  %s0 = inlined_call_operand.vmem [shape: bf16[2,8,2,8,256], index: 0, kind: input, shape index: {}]
  %s1 = inlined_call_operand.vmem [shape: bf16[2,256,128], index: 1, kind: input, shape index: {}]
  %s2 = inlined_call_operand.vmem [shape: f32[1,128], index: 2, kind: input, shape index: {}]
  %s3 = inlined_call_operand.vmem [shape: bf16[2,8,8,128], index: 3, kind: output, shape index: {}]
  %s4 = sld [smem:[#allocation0]]
  $region45: #{backbone_base_forward.5} parent=0
    _
  %s6 = ssub.s32 1, %s4
  %s7 = scalar_select 0, %s6, %s4
  loop: start=0, step=1, limit=4
  $region2: #{backbone_base_forward.5} parent=0 // loop_pre_header
    _
  $region3: #{backbone_base_forward.5} parent=0 // loop_header
    %s9 = sphi 0, %s13
    %p10 = scmp.ge.s32.totalorder %s9, 4
    %s16 = sphi 0, %s28
    %s17 = sphi 0, %s24
    %s18 = sphi 0, %s16
    %s19 = sphi 0, %s17
    %s20 = sphi 0, %s18
    %s21 = sphi 0, %s19
    %s33 = sphi 0, %s35
    %s36 = sphi 0, %s33
    %s37 = sphi 0, %s36
    %s53 = sphi 0, %s37
    %s57 = sphi 0, %s57
    %s59 = sphi 0, %s57
    %s60 = sphi 0, %s59
    %s74 = sphi 0, %s60
    %s78 = sphi 0, %s78
    %s80 = sphi 0, %s78
    %s81 = sphi 0, %s80
    %s95 = sphi 0, %s81
    %s103 = sphi 0, %s105
    %s106 = sphi 0, %s103
    %s107 = sphi 0, %s106
    %s123 = sphi 0, %s107
  $region4: #{backbone_base_forward.5} parent=0 // loop_header_branch
    %12 = sbr.rel (%p10) target = $region8
  $region5: #{backbone_base_forward.5} parent=0 // loop_body
    %s14 = ssub.s32 %s9, 1
    %s15 = ssub.s32 %s9, 2
    %s22 = sadd.s32 1, %s17
    %p23 = scmp.ge.s32.totalorder %s22, 1
    %s24 = scalar_select %p23, 0, %s22
    %s25 = sadd.s32 1, %s16
    %s26 = scalar_select %p23, %s25, %s16
    %p27 = scmp.ge.s32.totalorder %s26, 2
    %s28 = scalar_select %p27, 0, %s26
    %s29 = ssub.s32 %s16, %s28
    %s30 = ssub.s32 %s17, %s24
    %s31 = sor.u32 %s29, %s30
    %p32 = scmp.eq.s32.totalorder %s31, 0
    %s34 = sadd.s32 %s33, 1
    %s35 = scalar_select %p32, %s33, %s34
    %p38 = pneg %p32
    %p39 = scmp.eq.s32.totalorder %s9, 1
    %p40 = por %p38, %p39
    %p41 = scmp.ne.s32.totalorder %s33, %s36
    %p42 = scmp.eq.s32.totalorder %s9, 0
    %p43 = por %p41, %p42
    %p44 = scmp.ne.s32.totalorder %s33, %s36
    %p45 = scmp.eq.s32.totalorder %s14, 1
    %p46 = por %p44, %p45
    %p47 = scmp.ne.s32.totalorder %s36, %s37
    %p48 = scmp.eq.s32.totalorder %s14, 0
    %p49 = por %p47, %p48
    %p50 = scmp.ne.s32.totalorder %s36, %s37
    %p51 = scmp.eq.s32.totalorder %s15, 1
    %p52 = por %p50, %p51
    %p54 = scmp.ne.s32.totalorder %s37, %s53
    %p55 = scmp.eq.s32.totalorder %s15, 0
    %p56 = por %p54, %p55
    %s58 = sadd.s32 %s57, 1
    %p61 = scmp.eq.s32.totalorder %s9, 1
    %p62 = scmp.ne.s32.totalorder %s57, %s59
    %p63 = scmp.eq.s32.totalorder %s9, 0
    %p64 = por %p62, %p63
    %p65 = scmp.ne.s32.totalorder %s57, %s59
    %p66 = scmp.eq.s32.totalorder %s14, 1
    %p67 = por %p65, %p66
    %p68 = scmp.ne.s32.totalorder %s59, %s60
    %p69 = scmp.eq.s32.totalorder %s14, 0
    %p70 = por %p68, %p69
    %p71 = scmp.ne.s32.totalorder %s59, %s60
    %p72 = scmp.eq.s32.totalorder %s15, 1
    %p73 = por %p71, %p72
    %p75 = scmp.ne.s32.totalorder %s60, %s74
    %p76 = scmp.eq.s32.totalorder %s15, 0
    %p77 = por %p75, %p76
    %s79 = sadd.s32 %s78, 1
    %p82 = scmp.eq.s32.totalorder %s9, 1
    %p83 = scmp.ne.s32.totalorder %s78, %s80
    %p84 = scmp.eq.s32.totalorder %s9, 0
    %p85 = por %p83, %p84
    %p86 = scmp.ne.s32.totalorder %s78, %s80
    %p87 = scmp.eq.s32.totalorder %s14, 1
    %p88 = por %p86, %p87
    %p89 = scmp.ne.s32.totalorder %s80, %s81
    %p90 = scmp.eq.s32.totalorder %s14, 0
    %p91 = por %p89, %p90
    %p92 = scmp.ne.s32.totalorder %s80, %s81
    %p93 = scmp.eq.s32.totalorder %s15, 1
    %p94 = por %p92, %p93
    %p96 = scmp.ne.s32.totalorder %s81, %s95
    %p97 = scmp.eq.s32.totalorder %s15, 0
    %p98 = por %p96, %p97
    %s99 = ssub.s32 %s16, %s28
    %s100 = ssub.s32 %s17, %s24
    %s101 = sor.u32 %s99, %s100
    %p102 = scmp.eq.s32.totalorder %s101, 0
    %s104 = sadd.s32 %s103, 1
    %s105 = scalar_select %p102, %s103, %s104
    %p108 = pneg %p102
    %p109 = scmp.eq.s32.totalorder %s9, 1
    %p110 = por %p108, %p109
    %p111 = scmp.ne.s32.totalorder %s103, %s106
    %p112 = scmp.eq.s32.totalorder %s9, 0
    %p113 = por %p111, %p112
    %p114 = scmp.ne.s32.totalorder %s103, %s106
    %p115 = scmp.eq.s32.totalorder %s14, 1
    %p116 = por %p114, %p115
    %p117 = scmp.ne.s32.totalorder %s106, %s107
    %p118 = scmp.eq.s32.totalorder %s14, 0
    %p119 = por %p117, %p118
    %p120 = scmp.ne.s32.totalorder %s106, %s107
    %p121 = scmp.eq.s32.totalorder %s15, 1
    %p122 = por %p120, %p121
    %p124 = scmp.ne.s32.totalorder %s107, %s123
    %p125 = scmp.eq.s32.totalorder %s15, 0
    %p126 = por %p124, %p125
    %p127 = scmp.le.s32.totalorder 1, %s9
    %p128 = scmp.lt.s32.totalorder %s9, 3
    %p129 = pnand %p127, %p128
    %p130 = pneg %p129
    // Predicated region
    $region9: #{backbone_base_forward.5} parent=5 // pred_check
      _
    $region10: #{backbone_base_forward.5} parent=5 // pred_check_branch
      %132 = sbr.rel (%p129) target = $region12
    $region11: #{backbone_base_forward.5} parent=5 // pred_region
      %s133 = ssub.s32 %s9, 1
      // Predicated region
      $region13: #{backbone_base_forward.5} parent=11 // pred_check
        %p134 = pneg %p70
      $region14: #{backbone_base_forward.5} parent=11 // pred_check_branch
        %136 = sbr.rel (%p134) target = $region16
      $region15: #{backbone_base_forward.5} parent=11 // pred_region
        _
      $region16: #{backbone_base_forward.5} parent=11 // pred_fallthru
        _
      // Predicated region
      $region17: #{backbone_base_forward.5} parent=11 // pred_check
        %p137 = pneg %p91
      $region18: #{backbone_base_forward.5} parent=11 // pred_check_branch
        %139 = sbr.rel (%p137) target = $region20
      $region19: #{backbone_base_forward.5} parent=11 // pred_region
        _
      $region20: #{backbone_base_forward.5} parent=11 // pred_fallthru
        _
    $region12: #{backbone_base_forward.5} parent=5 // pred_fallthru
      _
    %p140 = scmp.lt.s32.totalorder %s9, 2
    // Predicated region
    $region21: #{backbone_base_forward.5} parent=5 // pred_check
      %p141 = pneg %p140
    $region22: #{backbone_base_forward.5} parent=5 // pred_check_branch
      %143 = sbr.rel (%p141) target = $region24
    $region23: #{backbone_base_forward.5} parent=5 // pred_region
      // Predicated region
      $region25: #{backbone_base_forward.5} parent=23 // pred_check
        %p144 = pneg %p43
      $region26: #{backbone_base_forward.5} parent=23 // pred_check_branch
        %146 = sbr.rel (%p144) target = $region28
      $region27: #{backbone_base_forward.5} parent=23 // pred_region
        %s147 = smul.u32 8, %s17
        %p148 = scmp.lt.s32.totalorder %s16, 1
        %s149 = scalar_select %p148, %s16, 1
        %p150 = scmp.lt.s32.totalorder %s147, 7
        %s151 = scalar_select %p150, %s147, 7
        %s152 = smul.addr %s151, 4
        %s153 = smul.addr %s149, 32
        %s154 = sadd.s32 %s152, %s153
        %s155 = smul.addr %s154, 4
        %s156 = scalar_lea.vmem %s0, %s155
        %s157 = smul.u32 8, %s17
      $region28: #{backbone_base_forward.5} parent=23 // pred_fallthru
        _
    $region24: #{backbone_base_forward.5} parent=5 // pred_fallthru
      _
    %p158 = scmp.le.s32.totalorder 1, %s9
    %p159 = scmp.lt.s32.totalorder %s9, 3
    %p160 = pnand %p158, %p159
    %p161 = pneg %p160
    // Predicated region
    $region29: #{backbone_base_forward.5} parent=5 // pred_check
      _
    $region30: #{backbone_base_forward.5} parent=5 // pred_check_branch
      %163 = sbr.rel (%p160) target = $region32
    $region31: #{backbone_base_forward.5} parent=5 // pred_region
      %s164 = ssub.s32 %s9, 1
      %s165 = smul.u32 8, %s19
      %p166 = scmp.lt.s32.totalorder %s18, 1
      %s167 = scalar_select %p166, %s18, 1
      %p168 = scmp.lt.s32.totalorder %s165, 7
      %s169 = scalar_select %p168, %s165, 7
      %s170 = smul.addr %s169, 4
      %s171 = smul.addr %s167, 32
      %s172 = sadd.s32 %s170, %s171
      %s173 = smul.addr %s172, 4
      %s174 = scalar_lea.vmem %s0, %s173
      %p175 = pneg %p49
      %p176 = pneg %p46
      %p177 = pneg %p70
      %p178 = pneg %p67
      %p179 = pneg %p91
      %p180 = pneg %p88
      %p181 = pneg %p119
      %p182 = pneg %p116
      %s183 = smul.u32 8, %s19
      %p184 = scmp.lt.s32.totalorder %s18, 1
      %s185 = scalar_select %p184, %s18, 1
      %p186 = scmp.lt.s32.totalorder %s183, 7
      %s187 = scalar_select %p186, %s183, 7
      %s188 = smul.addr %s185, 8
      %s189 = sadd.s32 %s187, %s188
      %s190 = smul.addr %s189, 4
      %s191 = scalar_lea.vmem %s3, %s190
      %s192 = smul.u32 8, %s19
      %p193 = scmp.lt.s32.totalorder %s18, 1
      %s194 = scalar_select %p193, %s18, 1
      %p195 = scmp.lt.s32.totalorder %s192, 7
      %s196 = scalar_select %p195, %s192, 7
      %s197 = smul.addr %s196, 4
      %s198 = smul.addr %s194, 32
      %s199 = sadd.s32 %s197, %s198
      %s200 = smul.addr %s199, 4
      %s201 = scalar_lea.vmem %s0, %s200
      %s202 = smul.u32 8, %s19
      %s203 = smul.u32 8, %s19
      %p204 = scmp.lt.s32.totalorder %s18, 1
      %s205 = scalar_select %p204, %s18, 1
      %p206 = scmp.lt.s32.totalorder %s203, 7
      %s207 = scalar_select %p206, %s203, 7
      %s208 = smul.addr %s205, 8
      %s209 = sadd.s32 %s207, %s208
      %s210 = smul.addr %s209, 4
      %s211 = scalar_lea.vmem %s3, %s210
      %s212 = smul.u32 8, %s19
      %v214 = vld [vmem:[%s201] sm:$0xff]
      %v215 = vld [vmem:[%s201 + $0x10] sm:$0xff]
      %v216 = vld [vmem:[%s201 + $0x20] sm:$0xff]
      %v217 = vld [vmem:[%s201 + $0x30] sm:$0xff]
      %v218 = vld [vmem:[%s201 + $0x40] sm:$0xff]
      %v219 = vld [vmem:[%s201 + $0x50] sm:$0xff]
      %v220 = vld [vmem:[%s201 + $0x60] sm:$0xff]
      %v221 = vld [vmem:[%s201 + $0x70] sm:$0xff]
      %v222 = vld [vmem:[%s1] sm:$0xf]
      %v223 = vld [vmem:[%s1 + $0x4] sm:$0xf]
      %v224 = vld [vmem:[%s1 + $0x8] sm:$0xf]
      %v225 = vld [vmem:[%s1 + $0xc] sm:$0xf]
      %v226 = vld [vmem:[%s1 + $0x10] sm:$0xf]
      %v227 = vld [vmem:[%s1 + $0x14] sm:$0xf]
      %v228 = vld [vmem:[%s1 + $0x18] sm:$0xf]
      %v229 = vld [vmem:[%s1 + $0x1c] sm:$0xf]
      %v230 = vld [vmem:[%s1 + $0x20] sm:$0xf]
      %v231 = vld [vmem:[%s1 + $0x24] sm:$0xf]
      %v232 = vld [vmem:[%s1 + $0x28] sm:$0xf]
      %v233 = vld [vmem:[%s1 + $0x2c] sm:$0xf]
      %v234 = vld [vmem:[%s1 + $0x30] sm:$0xf]
      %v235 = vld [vmem:[%s1 + $0x34] sm:$0xf]
      %v236 = vld [vmem:[%s1 + $0x38] sm:$0xf]
      %v237 = vld [vmem:[%s1 + $0x3c] sm:$0xf]
      %v238 = vld [vmem:[%s1 + $0x40] sm:$0xf]
      %v239 = vld [vmem:[%s1 + $0x44] sm:$0xf]
      %v240 = vld [vmem:[%s1 + $0x48] sm:$0xf]
      %v241 = vld [vmem:[%s1 + $0x4c] sm:$0xf]
      %v242 = vld [vmem:[%s1 + $0x50] sm:$0xf]
      %v243 = vld [vmem:[%s1 + $0x54] sm:$0xf]
      %v244 = vld [vmem:[%s1 + $0x58] sm:$0xf]
      %v245 = vld [vmem:[%s1 + $0x5c] sm:$0xf]
      %v246 = vld [vmem:[%s1 + $0x60] sm:$0xf]
      %v247 = vld [vmem:[%s1 + $0x64] sm:$0xf]
      %v248 = vld [vmem:[%s1 + $0x68] sm:$0xf]
      %v249 = vld [vmem:[%s1 + $0x6c] sm:$0xf]
      %v250 = vld [vmem:[%s1 + $0x70] sm:$0xf]
      %v251 = vld [vmem:[%s1 + $0x74] sm:$0xf]
      %v252 = vld [vmem:[%s1 + $0x78] sm:$0xf]
      %v253 = vld [vmem:[%s1 + $0x7c] sm:$0xf]
      %s254 = scalar_lea.vmem %s201, 8
      %v255 = vld [vmem:[%s254] sm:$0xff]
      %v256 = vld [vmem:[%s254 + $0x10] sm:$0xff]
      %v257 = vld [vmem:[%s254 + $0x20] sm:$0xff]
      %v258 = vld [vmem:[%s254 + $0x30] sm:$0xff]
      %v259 = vld [vmem:[%s254 + $0x40] sm:$0xff]
      %v260 = vld [vmem:[%s254 + $0x50] sm:$0xff]
      %v261 = vld [vmem:[%s254 + $0x60] sm:$0xff]
      %v262 = vld [vmem:[%s254 + $0x70] sm:$0xff]
      %s263 = scalar_lea.vmem %s1, 128
      %v264 = vld [vmem:[%s263] sm:$0xf]
      %v265 = vld [vmem:[%s263 + $0x4] sm:$0xf]
      %v266 = vld [vmem:[%s263 + $0x8] sm:$0xf]
      %v267 = vld [vmem:[%s263 + $0xc] sm:$0xf]
      %v268 = vld [vmem:[%s263 + $0x10] sm:$0xf]
      %v269 = vld [vmem:[%s263 + $0x14] sm:$0xf]
      %v270 = vld [vmem:[%s263 + $0x18] sm:$0xf]
      %v271 = vld [vmem:[%s263 + $0x1c] sm:$0xf]
      %v272 = vld [vmem:[%s263 + $0x20] sm:$0xf]
      %v273 = vld [vmem:[%s263 + $0x24] sm:$0xf]
      %v274 = vld [vmem:[%s263 + $0x28] sm:$0xf]
      %v275 = vld [vmem:[%s263 + $0x2c] sm:$0xf]
      %v276 = vld [vmem:[%s263 + $0x30] sm:$0xf]
      %v277 = vld [vmem:[%s263 + $0x34] sm:$0xf]
      %v278 = vld [vmem:[%s263 + $0x38] sm:$0xf]
      %v279 = vld [vmem:[%s263 + $0x3c] sm:$0xf]
      %v280 = vld [vmem:[%s263 + $0x40] sm:$0xf]
      %v281 = vld [vmem:[%s263 + $0x44] sm:$0xf]
      %v282 = vld [vmem:[%s263 + $0x48] sm:$0xf]
      %v283 = vld [vmem:[%s263 + $0x4c] sm:$0xf]
      %v284 = vld [vmem:[%s263 + $0x50] sm:$0xf]
      %v285 = vld [vmem:[%s263 + $0x54] sm:$0xf]
      %v286 = vld [vmem:[%s263 + $0x58] sm:$0xf]
      %v287 = vld [vmem:[%s263 + $0x5c] sm:$0xf]
      %v288 = vld [vmem:[%s263 + $0x60] sm:$0xf]
      %v289 = vld [vmem:[%s263 + $0x64] sm:$0xf]
      %v290 = vld [vmem:[%s263 + $0x68] sm:$0xf]
      %v291 = vld [vmem:[%s263 + $0x6c] sm:$0xf]
      %v292 = vld [vmem:[%s263 + $0x70] sm:$0xf]
      %v293 = vld [vmem:[%s263 + $0x74] sm:$0xf]
      %v294 = vld [vmem:[%s263 + $0x78] sm:$0xf]
      %v295 = vld [vmem:[%s263 + $0x7c] sm:$0xf]
      %v304 = vunpack.c.l.b16 %v255
      %v305 = vunpack.c.h.b16 %v255
      %v306 = vunpack.c.l.b16 %v256
      %v307 = vunpack.c.h.b16 %v256
      %v308 = vunpack.c.l.b16 %v257
      %v309 = vunpack.c.h.b16 %v257
      %v310 = vunpack.c.l.b16 %v258
      %v311 = vunpack.c.h.b16 %v258
      %v312 = vunpack.c.l.b16 %v259
      %v313 = vunpack.c.h.b16 %v259
      %v314 = vunpack.c.l.b16 %v260
      %v315 = vunpack.c.h.b16 %v260
      %v316 = vunpack.c.l.b16 %v261
      %v317 = vunpack.c.h.b16 %v261
      %v318 = vunpack.c.l.b16 %v262
      %v319 = vunpack.c.h.b16 %v262
      %v320 = vpack.c.b16 %v306, %v304
      %v321 = vpack.c.b16 %v307, %v305
      %v322 = vpack.c.b16 %v310, %v308
      %v323 = vpack.c.b16 %v311, %v309
      %v324 = vpack.c.b16 %v314, %v312
      %v325 = vpack.c.b16 %v315, %v313
      %v326 = vpack.c.b16 %v318, %v316
      %v327 = vpack.c.b16 %v319, %v317
      %v368 = vunpack.c.l.b16 %v264
      %v369 = vunpack.c.l.b16 %v265
      %v370 = vunpack.c.l.b16 %v266
      %v371 = vunpack.c.l.b16 %v267
      %v372 = vunpack.c.l.b16 %v268
      %v373 = vunpack.c.l.b16 %v269
      %v374 = vunpack.c.l.b16 %v270
      %v375 = vunpack.c.l.b16 %v271
      %v376 = vunpack.c.l.b16 %v272
      %v377 = vunpack.c.l.b16 %v273
      %v378 = vunpack.c.l.b16 %v274
      %v379 = vunpack.c.l.b16 %v275
      %v380 = vunpack.c.l.b16 %v276
      %v381 = vunpack.c.l.b16 %v277
      %v382 = vunpack.c.l.b16 %v278
      %v383 = vunpack.c.l.b16 %v279
      %v384 = vunpack.c.l.b16 %v280
      %v385 = vunpack.c.l.b16 %v281
      %v386 = vunpack.c.l.b16 %v282
      %v387 = vunpack.c.l.b16 %v283
      %v388 = vunpack.c.l.b16 %v284
      %v389 = vunpack.c.l.b16 %v285
      %v390 = vunpack.c.l.b16 %v286
      %v391 = vunpack.c.l.b16 %v287
      %v392 = vunpack.c.l.b16 %v288
      %v393 = vunpack.c.l.b16 %v289
      %v394 = vunpack.c.l.b16 %v290
      %v395 = vunpack.c.l.b16 %v291
      %v396 = vunpack.c.l.b16 %v292
      %v397 = vunpack.c.l.b16 %v293
      %v398 = vunpack.c.l.b16 %v294
      %v399 = vunpack.c.l.b16 %v295
      %v400 = vpack.c.b16 %v369, %v368
      %v401 = vpack.c.b16 %v371, %v370
      %v402 = vpack.c.b16 %v373, %v372
      %v403 = vpack.c.b16 %v375, %v374
      %v404 = vpack.c.b16 %v377, %v376
      %v405 = vpack.c.b16 %v379, %v378
      %v406 = vpack.c.b16 %v381, %v380
      %v407 = vpack.c.b16 %v383, %v382
      %v408 = vpack.c.b16 %v385, %v384
      %v409 = vpack.c.b16 %v387, %v386
      %v410 = vpack.c.b16 %v389, %v388
      %v411 = vpack.c.b16 %v391, %v390
      %v412 = vpack.c.b16 %v393, %v392
      %v413 = vpack.c.b16 %v395, %v394
      %v414 = vpack.c.b16 %v397, %v396
      %v415 = vpack.c.b16 %v399, %v398
      %432 = vmatprep.subr.bf16.mxu0 0
      %433 = vmatpush1.bf16.msra.mxu0 %v400
      %434 = vmatprep.subr.bf16.mxu0 0
      %435 = vmatpush1.bf16.msra.mxu0 %v401
      %436 = vmatprep.subr.bf16.mxu0 0
      %437 = vmatpush1.bf16.msra.mxu0 %v402
      %438 = vmatprep.subr.bf16.mxu0 0
      %439 = vmatpush1.bf16.msra.mxu0 %v403
      %440 = vmatprep.subr.bf16.mxu0 0
      %441 = vmatpush1.bf16.msra.mxu0 %v404
      %442 = vmatprep.subr.bf16.mxu0 0
      %443 = vmatpush1.bf16.msra.mxu0 %v405
      %444 = vmatprep.subr.bf16.mxu0 0
      %445 = vmatpush1.bf16.msra.mxu0 %v406
      %446 = vmatprep.subr.bf16.mxu0 0
      %447 = vmatpush1.bf16.msra.mxu0 %v407
      %448 = vmatprep.subr.bf16.mxu0 0
      %449 = vmatpush1.bf16.msra.mxu0 %v408
      %450 = vmatprep.subr.bf16.mxu0 0
      %451 = vmatpush1.bf16.msra.mxu0 %v409
      %452 = vmatprep.subr.bf16.mxu0 0
      %453 = vmatpush1.bf16.msra.mxu0 %v410
      %454 = vmatprep.subr.bf16.mxu0 0
      %455 = vmatpush1.bf16.msra.mxu0 %v411
      %456 = vmatprep.subr.bf16.mxu0 0
      %457 = vmatpush1.bf16.msra.mxu0 %v412
      %458 = vmatprep.subr.bf16.mxu0 0
      %459 = vmatpush1.bf16.msra.mxu0 %v413
      %460 = vmatprep.subr.bf16.mxu0 0
      %461 = vmatpush1.bf16.msra.mxu0 %v414
      %462 = vmatprep.subr.bf16.mxu0 0
      %463 = vmatpush1.bf16.msra.mxu0 %v415
      %464 = vmatprep.mubr.bf16.mxu0 %v321
      %465 = vmatmul.mubr.bf16.gmra.mrb[0].mxu0 %v320
      %v466 = vpop.f32.mrb[0].mxu0
      %v467 = vadd.f32 0.0, %v466
      %v468 = vpop.f32.mrb[0].mxu0
      %v469 = vpop.f32.mrb[0].mxu0
      %v470 = vadd.f32 0.0, %v469
      %v471 = vpop.f32.mrb[0].mxu0
      %472 = vmatprep.mubr.bf16.mxu0 %v323
      %473 = vmatmul.mubr.bf16.gmra.mrb[0].mxu0 %v322
      %v474 = vpop.f32.mrb[0].mxu0
      %v475 = vadd.f32 0.0, %v474
      %v476 = vpop.f32.mrb[0].mxu0
      %v477 = vpop.f32.mrb[0].mxu0
      %v478 = vadd.f32 0.0, %v477
      %v479 = vpop.f32.mrb[0].mxu0
      %480 = vmatprep.mubr.bf16.mxu0 %v325
      %481 = vmatmul.mubr.bf16.gmra.mrb[0].mxu0 %v324
      %v482 = vpop.f32.mrb[0].mxu0
      %v483 = vadd.f32 0.0, %v482
      %v484 = vpop.f32.mrb[0].mxu0
      %v485 = vpop.f32.mrb[0].mxu0
      %v486 = vadd.f32 0.0, %v485
      %v487 = vpop.f32.mrb[0].mxu0
      %488 = vmatprep.mubr.bf16.mxu0 %v327
      %489 = vmatmul.mubr.bf16.gmra.mrb[0].mxu0 %v326
      %v490 = vpop.f32.mrb[0].mxu0
      %v491 = vadd.f32 0.0, %v490
      %v492 = vpop.f32.mrb[0].mxu0
      %v493 = vpop.f32.mrb[0].mxu0
      %v494 = vadd.f32 0.0, %v493
      %v495 = vpop.f32.mrb[0].mxu0
      %496 = vdwg.mxu0
      %v505 = vunpack.c.l.b16 %v214
      %v506 = vunpack.c.h.b16 %v214
      %v507 = vunpack.c.l.b16 %v215
      %v508 = vunpack.c.h.b16 %v215
      %v509 = vunpack.c.l.b16 %v216
      %v510 = vunpack.c.h.b16 %v216
      %v511 = vunpack.c.l.b16 %v217
      %v512 = vunpack.c.h.b16 %v217
      %v513 = vunpack.c.l.b16 %v218
      %v514 = vunpack.c.h.b16 %v218
      %v515 = vunpack.c.l.b16 %v219
      %v516 = vunpack.c.h.b16 %v219
      %v517 = vunpack.c.l.b16 %v220
      %v518 = vunpack.c.h.b16 %v220
      %v519 = vunpack.c.l.b16 %v221
      %v520 = vunpack.c.h.b16 %v221
      %v521 = vpack.c.b16 %v507, %v505
      %v522 = vpack.c.b16 %v508, %v506
      %v523 = vpack.c.b16 %v511, %v509
      %v524 = vpack.c.b16 %v512, %v510
      %v525 = vpack.c.b16 %v515, %v513
      %v526 = vpack.c.b16 %v516, %v514
      %v527 = vpack.c.b16 %v519, %v517
      %v528 = vpack.c.b16 %v520, %v518
      %v569 = vunpack.c.l.b16 %v222
      %v570 = vunpack.c.l.b16 %v223
      %v571 = vunpack.c.l.b16 %v224
      %v572 = vunpack.c.l.b16 %v225
      %v573 = vunpack.c.l.b16 %v226
      %v574 = vunpack.c.l.b16 %v227
      %v575 = vunpack.c.l.b16 %v228
      %v576 = vunpack.c.l.b16 %v229
      %v577 = vunpack.c.l.b16 %v230
      %v578 = vunpack.c.l.b16 %v231
      %v579 = vunpack.c.l.b16 %v232
      %v580 = vunpack.c.l.b16 %v233
      %v581 = vunpack.c.l.b16 %v234
      %v582 = vunpack.c.l.b16 %v235
      %v583 = vunpack.c.l.b16 %v236
      %v584 = vunpack.c.l.b16 %v237
      %v585 = vunpack.c.l.b16 %v238
      %v586 = vunpack.c.l.b16 %v239
      %v587 = vunpack.c.l.b16 %v240
      %v588 = vunpack.c.l.b16 %v241
      %v589 = vunpack.c.l.b16 %v242
      %v590 = vunpack.c.l.b16 %v243
      %v591 = vunpack.c.l.b16 %v244
      %v592 = vunpack.c.l.b16 %v245
      %v593 = vunpack.c.l.b16 %v246
      %v594 = vunpack.c.l.b16 %v247
      %v595 = vunpack.c.l.b16 %v248
      %v596 = vunpack.c.l.b16 %v249
      %v597 = vunpack.c.l.b16 %v250
      %v598 = vunpack.c.l.b16 %v251
      %v599 = vunpack.c.l.b16 %v252
      %v600 = vunpack.c.l.b16 %v253
      %v601 = vpack.c.b16 %v570, %v569
      %v602 = vpack.c.b16 %v572, %v571
      %v603 = vpack.c.b16 %v574, %v573
      %v604 = vpack.c.b16 %v576, %v575
      %v605 = vpack.c.b16 %v578, %v577
      %v606 = vpack.c.b16 %v580, %v579
      %v607 = vpack.c.b16 %v582, %v581
      %v608 = vpack.c.b16 %v584, %v583
      %v609 = vpack.c.b16 %v586, %v585
      %v610 = vpack.c.b16 %v588, %v587
      %v611 = vpack.c.b16 %v590, %v589
      %v612 = vpack.c.b16 %v592, %v591
      %v613 = vpack.c.b16 %v594, %v593
      %v614 = vpack.c.b16 %v596, %v595
      %v615 = vpack.c.b16 %v598, %v597
      %v616 = vpack.c.b16 %v600, %v599
      %633 = vmatprep.subr.bf16.mxu0 0
      %634 = vmatpush1.bf16.msra.mxu0 %v601
      %635 = vmatprep.subr.bf16.mxu0 0
      %636 = vmatpush1.bf16.msra.mxu0 %v602
      %637 = vmatprep.subr.bf16.mxu0 0
      %638 = vmatpush1.bf16.msra.mxu0 %v603
      %639 = vmatprep.subr.bf16.mxu0 0
      %640 = vmatpush1.bf16.msra.mxu0 %v604
      %641 = vmatprep.subr.bf16.mxu0 0
      %642 = vmatpush1.bf16.msra.mxu0 %v605
      %643 = vmatprep.subr.bf16.mxu0 0
      %644 = vmatpush1.bf16.msra.mxu0 %v606
      %645 = vmatprep.subr.bf16.mxu0 0
      %646 = vmatpush1.bf16.msra.mxu0 %v607
      %647 = vmatprep.subr.bf16.mxu0 0
      %648 = vmatpush1.bf16.msra.mxu0 %v608
      %649 = vmatprep.subr.bf16.mxu0 0
      %650 = vmatpush1.bf16.msra.mxu0 %v609
      %651 = vmatprep.subr.bf16.mxu0 0
      %652 = vmatpush1.bf16.msra.mxu0 %v610
      %653 = vmatprep.subr.bf16.mxu0 0
      %654 = vmatpush1.bf16.msra.mxu0 %v611
      %655 = vmatprep.subr.bf16.mxu0 0
      %656 = vmatpush1.bf16.msra.mxu0 %v612
      %657 = vmatprep.subr.bf16.mxu0 0
      %658 = vmatpush1.bf16.msra.mxu0 %v613
      %659 = vmatprep.subr.bf16.mxu0 0
      %660 = vmatpush1.bf16.msra.mxu0 %v614
      %661 = vmatprep.subr.bf16.mxu0 0
      %662 = vmatpush1.bf16.msra.mxu0 %v615
      %663 = vmatprep.subr.bf16.mxu0 0
      %664 = vmatpush1.bf16.msra.mxu0 %v616
      %665 = vmatprep.mubr.bf16.mxu0 %v522
      %666 = vmatmul.mubr.bf16.gmra.mrb[0].mxu0 %v521
      %v667 = vpop.f32.mrb[0].mxu0
      %v668 = vadd.f32 %v467, %v667
      %v669 = vpop.f32.mrb[0].mxu0
      %v670 = vpop.f32.mrb[0].mxu0
      %v671 = vadd.f32 %v470, %v670
      %v672 = vpop.f32.mrb[0].mxu0
      %673 = vmatprep.mubr.bf16.mxu0 %v524
      %674 = vmatmul.mubr.bf16.gmra.mrb[0].mxu0 %v523
      %v675 = vpop.f32.mrb[0].mxu0
      %v676 = vadd.f32 %v475, %v675
      %v677 = vpop.f32.mrb[0].mxu0
      %v678 = vpop.f32.mrb[0].mxu0
      %v679 = vadd.f32 %v478, %v678
      %v680 = vpop.f32.mrb[0].mxu0
      %681 = vmatprep.mubr.bf16.mxu0 %v526
      %682 = vmatmul.mubr.bf16.gmra.mrb[0].mxu0 %v525
      %v683 = vpop.f32.mrb[0].mxu0
      %v684 = vadd.f32 %v483, %v683
      %v685 = vpop.f32.mrb[0].mxu0
      %v686 = vpop.f32.mrb[0].mxu0
      %v687 = vadd.f32 %v486, %v686
      %v688 = vpop.f32.mrb[0].mxu0
      %689 = vmatprep.mubr.bf16.mxu0 %v528
      %690 = vmatmul.mubr.bf16.gmra.mrb[0].mxu0 %v527
      %v691 = vpop.f32.mrb[0].mxu0
      %v692 = vadd.f32 %v491, %v691
      %v693 = vpop.f32.mrb[0].mxu0
      %v694 = vpop.f32.mrb[0].mxu0
      %v695 = vadd.f32 %v494, %v694
      %v696 = vpop.f32.mrb[0].mxu0
      %697 = vdwg.mxu0
      %v698 = vld [vmem:[%s2] sm:$0x1]
      %v700 = vlaneseq
      %v701 = vshrl.u32 %v700, 7
      %v702 = vsub.s32 0, %v701
      %v703 = vrot.slane %v698, %v702
      %v705 = vadd.f32 %v668, %v703
      %v706 = vadd.f32 %v671, %v703
      %v707 = vadd.f32 %v676, %v703
      %v708 = vadd.f32 %v679, %v703
      %v709 = vadd.f32 %v684, %v703
      %v710 = vadd.f32 %v687, %v703
      %v711 = vadd.f32 %v692, %v703
      %v712 = vadd.f32 %v695, %v703
      %v713 = vmax.f32 %v705, 0.0
      %v714 = vmax.f32 %v706, 0.0
      %v715 = vmax.f32 %v707, 0.0
      %v716 = vmax.f32 %v708, 0.0
      %v717 = vmax.f32 %v709, 0.0
      %v718 = vmax.f32 %v710, 0.0
      %v719 = vmax.f32 %v711, 0.0
      %v720 = vmax.f32 %v712, 0.0
      %v721 = vpack.c.bf16 %v713, %v713
      %v722 = vpack.c.bf16 %v714, %v714
      %v723 = vpack.c.bf16 %v715, %v715
      %v724 = vpack.c.bf16 %v716, %v716
      %v725 = vpack.c.bf16 %v717, %v717
      %v726 = vpack.c.bf16 %v718, %v718
      %v727 = vpack.c.bf16 %v719, %v719
      %v728 = vpack.c.bf16 %v720, %v720
      %729 = vst [vmem:[%s211] sm:$0xf] %v721
      %730 = vst [vmem:[%s211 + $0x4] sm:$0xf] %v722
      %731 = vst [vmem:[%s211 + $0x8] sm:$0xf] %v723
      %732 = vst [vmem:[%s211 + $0xc] sm:$0xf] %v724
      %733 = vst [vmem:[%s211 + $0x10] sm:$0xf] %v725
      %734 = vst [vmem:[%s211 + $0x14] sm:$0xf] %v726
      %735 = vst [vmem:[%s211 + $0x18] sm:$0xf] %v727
      %736 = vst [vmem:[%s211 + $0x1c] sm:$0xf] %v728
      %s737 = smul.u32 8, %s19
      %p738 = scmp.lt.s32.totalorder %s18, 1
      %s739 = scalar_select %p738, %s18, 1
      %p740 = scmp.lt.s32.totalorder %s737, 7
      %s741 = scalar_select %p740, %s737, 7
      %s742 = smul.addr %s739, 8
      %s743 = sadd.s32 %s741, %s742
      %s744 = smul.addr %s743, 4
      %s745 = scalar_lea.vmem %s3, %s744
      // Predicated region
      $region33: #{backbone_base_forward.5} parent=31 // pred_check
        %p746 = pneg %p116
      $region34: #{backbone_base_forward.5} parent=31 // pred_check_branch
        %748 = sbr.rel (%p746) target = $region36
      $region35: #{backbone_base_forward.5} parent=31 // pred_region
        %s749 = smul.u32 8, %s19
      $region36: #{backbone_base_forward.5} parent=31 // pred_fallthru
        _
    $region32: #{backbone_base_forward.5} parent=5 // pred_fallthru
      _
    %p750 = scmp.le.s32.totalorder 2, %s9
    // Predicated region
    $region37: #{backbone_base_forward.5} parent=5 // pred_check
      %p751 = pneg %p750
    $region38: #{backbone_base_forward.5} parent=5 // pred_check_branch
      %753 = sbr.rel (%p751) target = $region40
    $region39: #{backbone_base_forward.5} parent=5 // pred_region
      %s754 = ssub.s32 %s9, 2
      // Predicated region
      $region41: #{backbone_base_forward.5} parent=39 // pred_check
        %p755 = pneg %p122
      $region42: #{backbone_base_forward.5} parent=39 // pred_check_branch
        %757 = sbr.rel (%p755) target = $region44
      $region43: #{backbone_base_forward.5} parent=39 // pred_region
        %s758 = smul.u32 8, %s21
        %p759 = scmp.lt.s32.totalorder %s20, 1
        %s760 = scalar_select %p759, %s20, 1
        %p761 = scmp.lt.s32.totalorder %s758, 7
        %s762 = scalar_select %p761, %s758, 7
        %s763 = smul.addr %s760, 8
        %s764 = sadd.s32 %s762, %s763
        %s765 = smul.addr %s764, 4
        %s766 = scalar_lea.vmem %s3, %s765
      $region44: #{backbone_base_forward.5} parent=39 // pred_fallthru
        _
    $region40: #{backbone_base_forward.5} parent=5 // pred_fallthru
      _
  $region6: #{backbone_base_forward.5} parent=0 // loop_footer
    %s13 = sadd.s32 1, %s9
  $region7: #{backbone_base_forward.5} parent=0 // loop_footer_branch
    %8 = sbr.rel target = $region3
  $region8: #{backbone_base_forward.5} parent=0 // loop_exit
    _

// kernel: backbone_base_forward.6
$region0: #{backbone_base_forward.6}
  #allocation0 [shape = 'u32[]', space=smem, size = 0x4, offset = 0x4, fixed_abs, tag = 'smem constant byte address 0x4 - core index']
  #allocation1 [shape = 'u32[144,128]{1,0:T(1,128)}', space=vmem, size = 0x12000, scoped, tag = 'internal scratch']
  %s0 = inlined_call_operand.vmem [shape: bf16[2,4,2,8,256], index: 0, kind: input, shape index: {}]
  %s1 = inlined_call_operand.vmem [shape: bf16[2,256,128], index: 1, kind: input, shape index: {}]
  %s2 = inlined_call_operand.vmem [shape: f32[1,128], index: 2, kind: input, shape index: {}]
  %s3 = inlined_call_operand.vmem [shape: bf16[2,4,8,128], index: 3, kind: output, shape index: {}]
  %s4 = sld [smem:[#allocation0]]
  $region45: #{backbone_base_forward.6} parent=0
    _
  %s6 = ssub.s32 1, %s4
  %s7 = scalar_select 0, %s6, %s4
  loop: start=0, step=1, limit=4
  $region2: #{backbone_base_forward.6} parent=0 // loop_pre_header
    _
  $region3: #{backbone_base_forward.6} parent=0 // loop_header
    %s9 = sphi 0, %s13
    %p10 = scmp.ge.s32.totalorder %s9, 4
    %s16 = sphi 0, %s28
    %s17 = sphi 0, %s24
    %s18 = sphi 0, %s16
    %s19 = sphi 0, %s17
    %s20 = sphi 0, %s18
    %s21 = sphi 0, %s19
    %s33 = sphi 0, %s35
    %s36 = sphi 0, %s33
    %s37 = sphi 0, %s36
    %s53 = sphi 0, %s37
    %s57 = sphi 0, %s57
    %s59 = sphi 0, %s57
    %s60 = sphi 0, %s59
    %s74 = sphi 0, %s60
    %s78 = sphi 0, %s78
    %s80 = sphi 0, %s78
    %s81 = sphi 0, %s80
    %s95 = sphi 0, %s81
    %s103 = sphi 0, %s105
    %s106 = sphi 0, %s103
    %s107 = sphi 0, %s106
    %s123 = sphi 0, %s107
  $region4: #{backbone_base_forward.6} parent=0 // loop_header_branch
    %12 = sbr.rel (%p10) target = $region8
  $region5: #{backbone_base_forward.6} parent=0 // loop_body
    %s14 = ssub.s32 %s9, 1
    %s15 = ssub.s32 %s9, 2
    %s22 = sadd.s32 1, %s17
    %p23 = scmp.ge.s32.totalorder %s22, 1
    %s24 = scalar_select %p23, 0, %s22
    %s25 = sadd.s32 1, %s16
    %s26 = scalar_select %p23, %s25, %s16
    %p27 = scmp.ge.s32.totalorder %s26, 2
    %s28 = scalar_select %p27, 0, %s26
    %s29 = ssub.s32 %s16, %s28
    %s30 = ssub.s32 %s17, %s24
    %s31 = sor.u32 %s29, %s30
    %p32 = scmp.eq.s32.totalorder %s31, 0
    %s34 = sadd.s32 %s33, 1
    %s35 = scalar_select %p32, %s33, %s34
    %p38 = pneg %p32
    %p39 = scmp.eq.s32.totalorder %s9, 1
    %p40 = por %p38, %p39
    %p41 = scmp.ne.s32.totalorder %s33, %s36
    %p42 = scmp.eq.s32.totalorder %s9, 0
    %p43 = por %p41, %p42
    %p44 = scmp.ne.s32.totalorder %s33, %s36
    %p45 = scmp.eq.s32.totalorder %s14, 1
    %p46 = por %p44, %p45
    %p47 = scmp.ne.s32.totalorder %s36, %s37
    %p48 = scmp.eq.s32.totalorder %s14, 0
    %p49 = por %p47, %p48
    %p50 = scmp.ne.s32.totalorder %s36, %s37
    %p51 = scmp.eq.s32.totalorder %s15, 1
    %p52 = por %p50, %p51
    %p54 = scmp.ne.s32.totalorder %s37, %s53
    %p55 = scmp.eq.s32.totalorder %s15, 0
    %p56 = por %p54, %p55
    %s58 = sadd.s32 %s57, 1
    %p61 = scmp.eq.s32.totalorder %s9, 1
    %p62 = scmp.ne.s32.totalorder %s57, %s59
    %p63 = scmp.eq.s32.totalorder %s9, 0
    %p64 = por %p62, %p63
    %p65 = scmp.ne.s32.totalorder %s57, %s59
    %p66 = scmp.eq.s32.totalorder %s14, 1
    %p67 = por %p65, %p66
    %p68 = scmp.ne.s32.totalorder %s59, %s60
    %p69 = scmp.eq.s32.totalorder %s14, 0
    %p70 = por %p68, %p69
    %p71 = scmp.ne.s32.totalorder %s59, %s60
    %p72 = scmp.eq.s32.totalorder %s15, 1
    %p73 = por %p71, %p72
    %p75 = scmp.ne.s32.totalorder %s60, %s74
    %p76 = scmp.eq.s32.totalorder %s15, 0
    %p77 = por %p75, %p76
    %s79 = sadd.s32 %s78, 1
    %p82 = scmp.eq.s32.totalorder %s9, 1
    %p83 = scmp.ne.s32.totalorder %s78, %s80
    %p84 = scmp.eq.s32.totalorder %s9, 0
    %p85 = por %p83, %p84
    %p86 = scmp.ne.s32.totalorder %s78, %s80
    %p87 = scmp.eq.s32.totalorder %s14, 1
    %p88 = por %p86, %p87
    %p89 = scmp.ne.s32.totalorder %s80, %s81
    %p90 = scmp.eq.s32.totalorder %s14, 0
    %p91 = por %p89, %p90
    %p92 = scmp.ne.s32.totalorder %s80, %s81
    %p93 = scmp.eq.s32.totalorder %s15, 1
    %p94 = por %p92, %p93
    %p96 = scmp.ne.s32.totalorder %s81, %s95
    %p97 = scmp.eq.s32.totalorder %s15, 0
    %p98 = por %p96, %p97
    %s99 = ssub.s32 %s16, %s28
    %s100 = ssub.s32 %s17, %s24
    %s101 = sor.u32 %s99, %s100
    %p102 = scmp.eq.s32.totalorder %s101, 0
    %s104 = sadd.s32 %s103, 1
    %s105 = scalar_select %p102, %s103, %s104
    %p108 = pneg %p102
    %p109 = scmp.eq.s32.totalorder %s9, 1
    %p110 = por %p108, %p109
    %p111 = scmp.ne.s32.totalorder %s103, %s106
    %p112 = scmp.eq.s32.totalorder %s9, 0
    %p113 = por %p111, %p112
    %p114 = scmp.ne.s32.totalorder %s103, %s106
    %p115 = scmp.eq.s32.totalorder %s14, 1
    %p116 = por %p114, %p115
    %p117 = scmp.ne.s32.totalorder %s106, %s107
    %p118 = scmp.eq.s32.totalorder %s14, 0
    %p119 = por %p117, %p118
    %p120 = scmp.ne.s32.totalorder %s106, %s107
    %p121 = scmp.eq.s32.totalorder %s15, 1
    %p122 = por %p120, %p121
    %p124 = scmp.ne.s32.totalorder %s107, %s123
    %p125 = scmp.eq.s32.totalorder %s15, 0
    %p126 = por %p124, %p125
    %p127 = scmp.le.s32.totalorder 1, %s9
    %p128 = scmp.lt.s32.totalorder %s9, 3
    %p129 = pnand %p127, %p128
    %p130 = pneg %p129
    // Predicated region
    $region9: #{backbone_base_forward.6} parent=5 // pred_check
      _
    $region10: #{backbone_base_forward.6} parent=5 // pred_check_branch
      %132 = sbr.rel (%p129) target = $region12
    $region11: #{backbone_base_forward.6} parent=5 // pred_region
      %s133 = ssub.s32 %s9, 1
      // Predicated region
      $region13: #{backbone_base_forward.6} parent=11 // pred_check
        %p134 = pneg %p70
      $region14: #{backbone_base_forward.6} parent=11 // pred_check_branch
        %136 = sbr.rel (%p134) target = $region16
      $region15: #{backbone_base_forward.6} parent=11 // pred_region
        _
      $region16: #{backbone_base_forward.6} parent=11 // pred_fallthru
        _
      // Predicated region
      $region17: #{backbone_base_forward.6} parent=11 // pred_check
        %p137 = pneg %p91
      $region18: #{backbone_base_forward.6} parent=11 // pred_check_branch
        %139 = sbr.rel (%p137) target = $region20
      $region19: #{backbone_base_forward.6} parent=11 // pred_region
        _
      $region20: #{backbone_base_forward.6} parent=11 // pred_fallthru
        _
    $region12: #{backbone_base_forward.6} parent=5 // pred_fallthru
      _
    %p140 = scmp.lt.s32.totalorder %s9, 2
    // Predicated region
    $region21: #{backbone_base_forward.6} parent=5 // pred_check
      %p141 = pneg %p140
    $region22: #{backbone_base_forward.6} parent=5 // pred_check_branch
      %143 = sbr.rel (%p141) target = $region24
    $region23: #{backbone_base_forward.6} parent=5 // pred_region
      // Predicated region
      $region25: #{backbone_base_forward.6} parent=23 // pred_check
        %p144 = pneg %p43
      $region26: #{backbone_base_forward.6} parent=23 // pred_check_branch
        %146 = sbr.rel (%p144) target = $region28
      $region27: #{backbone_base_forward.6} parent=23 // pred_region
        %s147 = smul.u32 4, %s17
        %p148 = scmp.lt.s32.totalorder %s16, 1
        %s149 = scalar_select %p148, %s16, 1
        %p150 = scmp.lt.s32.totalorder %s147, 3
        %s151 = scalar_select %p150, %s147, 3
        %s152 = smul.addr %s151, 4
        %s153 = smul.addr %s149, 16
        %s154 = sadd.s32 %s152, %s153
        %s155 = smul.addr %s154, 4
        %s156 = scalar_lea.vmem %s0, %s155
        %s157 = smul.u32 4, %s17
      $region28: #{backbone_base_forward.6} parent=23 // pred_fallthru
        _
    $region24: #{backbone_base_forward.6} parent=5 // pred_fallthru
      _
    %p158 = scmp.le.s32.totalorder 1, %s9
    %p159 = scmp.lt.s32.totalorder %s9, 3
    %p160 = pnand %p158, %p159
    %p161 = pneg %p160
    // Predicated region
    $region29: #{backbone_base_forward.6} parent=5 // pred_check
      _
    $region30: #{backbone_base_forward.6} parent=5 // pred_check_branch
      %163 = sbr.rel (%p160) target = $region32
    $region31: #{backbone_base_forward.6} parent=5 // pred_region
      %s164 = ssub.s32 %s9, 1
      %s165 = smul.u32 4, %s19
      %p166 = scmp.lt.s32.totalorder %s18, 1
      %s167 = scalar_select %p166, %s18, 1
      %p168 = scmp.lt.s32.totalorder %s165, 3
      %s169 = scalar_select %p168, %s165, 3
      %s170 = smul.addr %s169, 4
      %s171 = smul.addr %s167, 16
      %s172 = sadd.s32 %s170, %s171
      %s173 = smul.addr %s172, 4
      %s174 = scalar_lea.vmem %s0, %s173
      %p175 = pneg %p49
      %p176 = pneg %p46
      %p177 = pneg %p70
      %p178 = pneg %p67
      %p179 = pneg %p91
      %p180 = pneg %p88
      %p181 = pneg %p119
      %p182 = pneg %p116
      %s183 = smul.u32 4, %s19
      %p184 = scmp.lt.s32.totalorder %s18, 1
      %s185 = scalar_select %p184, %s18, 1
      %p186 = scmp.lt.s32.totalorder %s183, 3
      %s187 = scalar_select %p186, %s183, 3
      %s188 = smul.addr %s185, 4
      %s189 = sadd.s32 %s187, %s188
      %s190 = smul.addr %s189, 4
      %s191 = scalar_lea.vmem %s3, %s190
      %s192 = smul.u32 4, %s19
      %p193 = scmp.lt.s32.totalorder %s18, 1
      %s194 = scalar_select %p193, %s18, 1
      %p195 = scmp.lt.s32.totalorder %s192, 3
      %s196 = scalar_select %p195, %s192, 3
      %s197 = smul.addr %s196, 4
      %s198 = smul.addr %s194, 16
      %s199 = sadd.s32 %s197, %s198
      %s200 = smul.addr %s199, 4
      %s201 = scalar_lea.vmem %s0, %s200
      %s202 = smul.u32 4, %s19
      %s203 = smul.u32 4, %s19
      %p204 = scmp.lt.s32.totalorder %s18, 1
      %s205 = scalar_select %p204, %s18, 1
      %p206 = scmp.lt.s32.totalorder %s203, 3
      %s207 = scalar_select %p206, %s203, 3
      %s208 = smul.addr %s205, 4
      %s209 = sadd.s32 %s207, %s208
      %s210 = smul.addr %s209, 4
      %s211 = scalar_lea.vmem %s3, %s210
      %s212 = smul.u32 4, %s19
      %v214 = vld [vmem:[%s201] sm:$0xff]
      %v215 = vld [vmem:[%s201 + $0x10] sm:$0xff]
      %v216 = vld [vmem:[%s201 + $0x20] sm:$0xff]
      %v217 = vld [vmem:[%s201 + $0x30] sm:$0xff]
      %v218 = vld [vmem:[%s1] sm:$0xf]
      %v219 = vld [vmem:[%s1 + $0x4] sm:$0xf]
      %v220 = vld [vmem:[%s1 + $0x8] sm:$0xf]
      %v221 = vld [vmem:[%s1 + $0xc] sm:$0xf]
      %v222 = vld [vmem:[%s1 + $0x10] sm:$0xf]
      %v223 = vld [vmem:[%s1 + $0x14] sm:$0xf]
      %v224 = vld [vmem:[%s1 + $0x18] sm:$0xf]
      %v225 = vld [vmem:[%s1 + $0x1c] sm:$0xf]
      %v226 = vld [vmem:[%s1 + $0x20] sm:$0xf]
      %v227 = vld [vmem:[%s1 + $0x24] sm:$0xf]
      %v228 = vld [vmem:[%s1 + $0x28] sm:$0xf]
      %v229 = vld [vmem:[%s1 + $0x2c] sm:$0xf]
      %v230 = vld [vmem:[%s1 + $0x30] sm:$0xf]
      %v231 = vld [vmem:[%s1 + $0x34] sm:$0xf]
      %v232 = vld [vmem:[%s1 + $0x38] sm:$0xf]
      %v233 = vld [vmem:[%s1 + $0x3c] sm:$0xf]
      %v234 = vld [vmem:[%s1 + $0x40] sm:$0xf]
      %v235 = vld [vmem:[%s1 + $0x44] sm:$0xf]
      %v236 = vld [vmem:[%s1 + $0x48] sm:$0xf]
      %v237 = vld [vmem:[%s1 + $0x4c] sm:$0xf]
      %v238 = vld [vmem:[%s1 + $0x50] sm:$0xf]
      %v239 = vld [vmem:[%s1 + $0x54] sm:$0xf]
      %v240 = vld [vmem:[%s1 + $0x58] sm:$0xf]
      %v241 = vld [vmem:[%s1 + $0x5c] sm:$0xf]
      %v242 = vld [vmem:[%s1 + $0x60] sm:$0xf]
      %v243 = vld [vmem:[%s1 + $0x64] sm:$0xf]
      %v244 = vld [vmem:[%s1 + $0x68] sm:$0xf]
      %v245 = vld [vmem:[%s1 + $0x6c] sm:$0xf]
      %v246 = vld [vmem:[%s1 + $0x70] sm:$0xf]
      %v247 = vld [vmem:[%s1 + $0x74] sm:$0xf]
      %v248 = vld [vmem:[%s1 + $0x78] sm:$0xf]
      %v249 = vld [vmem:[%s1 + $0x7c] sm:$0xf]
      %s250 = scalar_lea.vmem %s201, 8
      %v251 = vld [vmem:[%s250] sm:$0xff]
      %v252 = vld [vmem:[%s250 + $0x10] sm:$0xff]
      %v253 = vld [vmem:[%s250 + $0x20] sm:$0xff]
      %v254 = vld [vmem:[%s250 + $0x30] sm:$0xff]
      %s255 = scalar_lea.vmem %s1, 128
      %v256 = vld [vmem:[%s255] sm:$0xf]
      %v257 = vld [vmem:[%s255 + $0x4] sm:$0xf]
      %v258 = vld [vmem:[%s255 + $0x8] sm:$0xf]
      %v259 = vld [vmem:[%s255 + $0xc] sm:$0xf]
      %v260 = vld [vmem:[%s255 + $0x10] sm:$0xf]
      %v261 = vld [vmem:[%s255 + $0x14] sm:$0xf]
      %v262 = vld [vmem:[%s255 + $0x18] sm:$0xf]
      %v263 = vld [vmem:[%s255 + $0x1c] sm:$0xf]
      %v264 = vld [vmem:[%s255 + $0x20] sm:$0xf]
      %v265 = vld [vmem:[%s255 + $0x24] sm:$0xf]
      %v266 = vld [vmem:[%s255 + $0x28] sm:$0xf]
      %v267 = vld [vmem:[%s255 + $0x2c] sm:$0xf]
      %v268 = vld [vmem:[%s255 + $0x30] sm:$0xf]
      %v269 = vld [vmem:[%s255 + $0x34] sm:$0xf]
      %v270 = vld [vmem:[%s255 + $0x38] sm:$0xf]
      %v271 = vld [vmem:[%s255 + $0x3c] sm:$0xf]
      %v272 = vld [vmem:[%s255 + $0x40] sm:$0xf]
      %v273 = vld [vmem:[%s255 + $0x44] sm:$0xf]
      %v274 = vld [vmem:[%s255 + $0x48] sm:$0xf]
      %v275 = vld [vmem:[%s255 + $0x4c] sm:$0xf]
      %v276 = vld [vmem:[%s255 + $0x50] sm:$0xf]
      %v277 = vld [vmem:[%s255 + $0x54] sm:$0xf]
      %v278 = vld [vmem:[%s255 + $0x58] sm:$0xf]
      %v279 = vld [vmem:[%s255 + $0x5c] sm:$0xf]
      %v280 = vld [vmem:[%s255 + $0x60] sm:$0xf]
      %v281 = vld [vmem:[%s255 + $0x64] sm:$0xf]
      %v282 = vld [vmem:[%s255 + $0x68] sm:$0xf]
      %v283 = vld [vmem:[%s255 + $0x6c] sm:$0xf]
      %v284 = vld [vmem:[%s255 + $0x70] sm:$0xf]
      %v285 = vld [vmem:[%s255 + $0x74] sm:$0xf]
      %v286 = vld [vmem:[%s255 + $0x78] sm:$0xf]
      %v287 = vld [vmem:[%s255 + $0x7c] sm:$0xf]
      %v292 = vunpack.c.l.b16 %v251
      %v293 = vunpack.c.h.b16 %v251
      %v294 = vunpack.c.l.b16 %v252
      %v295 = vunpack.c.h.b16 %v252
      %v296 = vunpack.c.l.b16 %v253
      %v297 = vunpack.c.h.b16 %v253
      %v298 = vunpack.c.l.b16 %v254
      %v299 = vunpack.c.h.b16 %v254
      %v300 = vpack.c.b16 %v294, %v292
      %v301 = vpack.c.b16 %v295, %v293
      %v302 = vpack.c.b16 %v298, %v296
      %v303 = vpack.c.b16 %v299, %v297
      %v340 = vunpack.c.l.b16 %v256
      %v341 = vunpack.c.l.b16 %v257
      %v342 = vunpack.c.l.b16 %v258
      %v343 = vunpack.c.l.b16 %v259
      %v344 = vunpack.c.l.b16 %v260
      %v345 = vunpack.c.l.b16 %v261
      %v346 = vunpack.c.l.b16 %v262
      %v347 = vunpack.c.l.b16 %v263
      %v348 = vunpack.c.l.b16 %v264
      %v349 = vunpack.c.l.b16 %v265
      %v350 = vunpack.c.l.b16 %v266
      %v351 = vunpack.c.l.b16 %v267
      %v352 = vunpack.c.l.b16 %v268
      %v353 = vunpack.c.l.b16 %v269
      %v354 = vunpack.c.l.b16 %v270
      %v355 = vunpack.c.l.b16 %v271
      %v356 = vunpack.c.l.b16 %v272
      %v357 = vunpack.c.l.b16 %v273
      %v358 = vunpack.c.l.b16 %v274
      %v359 = vunpack.c.l.b16 %v275
      %v360 = vunpack.c.l.b16 %v276
      %v361 = vunpack.c.l.b16 %v277
      %v362 = vunpack.c.l.b16 %v278
      %v363 = vunpack.c.l.b16 %v279
      %v364 = vunpack.c.l.b16 %v280
      %v365 = vunpack.c.l.b16 %v281
      %v366 = vunpack.c.l.b16 %v282
      %v367 = vunpack.c.l.b16 %v283
      %v368 = vunpack.c.l.b16 %v284
      %v369 = vunpack.c.l.b16 %v285
      %v370 = vunpack.c.l.b16 %v286
      %v371 = vunpack.c.l.b16 %v287
      %v372 = vpack.c.b16 %v341, %v340
      %v373 = vpack.c.b16 %v343, %v342
      %v374 = vpack.c.b16 %v345, %v344
      %v375 = vpack.c.b16 %v347, %v346
      %v376 = vpack.c.b16 %v349, %v348
      %v377 = vpack.c.b16 %v351, %v350
      %v378 = vpack.c.b16 %v353, %v352
      %v379 = vpack.c.b16 %v355, %v354
      %v380 = vpack.c.b16 %v357, %v356
      %v381 = vpack.c.b16 %v359, %v358
      %v382 = vpack.c.b16 %v361, %v360
      %v383 = vpack.c.b16 %v363, %v362
      %v384 = vpack.c.b16 %v365, %v364
      %v385 = vpack.c.b16 %v367, %v366
      %v386 = vpack.c.b16 %v369, %v368
      %v387 = vpack.c.b16 %v371, %v370
      %404 = vmatprep.subr.bf16.mxu0 0
      %405 = vmatpush1.bf16.msra.mxu0 %v372
      %406 = vmatprep.subr.bf16.mxu0 0
      %407 = vmatpush1.bf16.msra.mxu0 %v373
      %408 = vmatprep.subr.bf16.mxu0 0
      %409 = vmatpush1.bf16.msra.mxu0 %v374
      %410 = vmatprep.subr.bf16.mxu0 0
      %411 = vmatpush1.bf16.msra.mxu0 %v375
      %412 = vmatprep.subr.bf16.mxu0 0
      %413 = vmatpush1.bf16.msra.mxu0 %v376
      %414 = vmatprep.subr.bf16.mxu0 0
      %415 = vmatpush1.bf16.msra.mxu0 %v377
      %416 = vmatprep.subr.bf16.mxu0 0
      %417 = vmatpush1.bf16.msra.mxu0 %v378
      %418 = vmatprep.subr.bf16.mxu0 0
      %419 = vmatpush1.bf16.msra.mxu0 %v379
      %420 = vmatprep.subr.bf16.mxu0 0
      %421 = vmatpush1.bf16.msra.mxu0 %v380
      %422 = vmatprep.subr.bf16.mxu0 0
      %423 = vmatpush1.bf16.msra.mxu0 %v381
      %424 = vmatprep.subr.bf16.mxu0 0
      %425 = vmatpush1.bf16.msra.mxu0 %v382
      %426 = vmatprep.subr.bf16.mxu0 0
      %427 = vmatpush1.bf16.msra.mxu0 %v383
      %428 = vmatprep.subr.bf16.mxu0 0
      %429 = vmatpush1.bf16.msra.mxu0 %v384
      %430 = vmatprep.subr.bf16.mxu0 0
      %431 = vmatpush1.bf16.msra.mxu0 %v385
      %432 = vmatprep.subr.bf16.mxu0 0
      %433 = vmatpush1.bf16.msra.mxu0 %v386
      %434 = vmatprep.subr.bf16.mxu0 0
      %435 = vmatpush1.bf16.msra.mxu0 %v387
      %436 = vmatprep.mubr.bf16.mxu0 %v301
      %437 = vmatmul.mubr.bf16.gmra.mrb[0].mxu0 %v300
      %v438 = vpop.f32.mrb[0].mxu0
      %v439 = vadd.f32 0.0, %v438
      %v440 = vpop.f32.mrb[0].mxu0
      %v441 = vpop.f32.mrb[0].mxu0
      %v442 = vadd.f32 0.0, %v441
      %v443 = vpop.f32.mrb[0].mxu0
      %444 = vmatprep.mubr.bf16.mxu0 %v303
      %445 = vmatmul.mubr.bf16.gmra.mrb[0].mxu0 %v302
      %v446 = vpop.f32.mrb[0].mxu0
      %v447 = vadd.f32 0.0, %v446
      %v448 = vpop.f32.mrb[0].mxu0
      %v449 = vpop.f32.mrb[0].mxu0
      %v450 = vadd.f32 0.0, %v449
      %v451 = vpop.f32.mrb[0].mxu0
      %452 = vdwg.mxu0
      %v457 = vunpack.c.l.b16 %v214
      %v458 = vunpack.c.h.b16 %v214
      %v459 = vunpack.c.l.b16 %v215
      %v460 = vunpack.c.h.b16 %v215
      %v461 = vunpack.c.l.b16 %v216
      %v462 = vunpack.c.h.b16 %v216
      %v463 = vunpack.c.l.b16 %v217
      %v464 = vunpack.c.h.b16 %v217
      %v465 = vpack.c.b16 %v459, %v457
      %v466 = vpack.c.b16 %v460, %v458
      %v467 = vpack.c.b16 %v463, %v461
      %v468 = vpack.c.b16 %v464, %v462
      %v505 = vunpack.c.l.b16 %v218
      %v506 = vunpack.c.l.b16 %v219
      %v507 = vunpack.c.l.b16 %v220
      %v508 = vunpack.c.l.b16 %v221
      %v509 = vunpack.c.l.b16 %v222
      %v510 = vunpack.c.l.b16 %v223
      %v511 = vunpack.c.l.b16 %v224
      %v512 = vunpack.c.l.b16 %v225
      %v513 = vunpack.c.l.b16 %v226
      %v514 = vunpack.c.l.b16 %v227
      %v515 = vunpack.c.l.b16 %v228
      %v516 = vunpack.c.l.b16 %v229
      %v517 = vunpack.c.l.b16 %v230
      %v518 = vunpack.c.l.b16 %v231
      %v519 = vunpack.c.l.b16 %v232
      %v520 = vunpack.c.l.b16 %v233
      %v521 = vunpack.c.l.b16 %v234
      %v522 = vunpack.c.l.b16 %v235
      %v523 = vunpack.c.l.b16 %v236
      %v524 = vunpack.c.l.b16 %v237
      %v525 = vunpack.c.l.b16 %v238
      %v526 = vunpack.c.l.b16 %v239
      %v527 = vunpack.c.l.b16 %v240
      %v528 = vunpack.c.l.b16 %v241
      %v529 = vunpack.c.l.b16 %v242
      %v530 = vunpack.c.l.b16 %v243
      %v531 = vunpack.c.l.b16 %v244
      %v532 = vunpack.c.l.b16 %v245
      %v533 = vunpack.c.l.b16 %v246
      %v534 = vunpack.c.l.b16 %v247
      %v535 = vunpack.c.l.b16 %v248
      %v536 = vunpack.c.l.b16 %v249
      %v537 = vpack.c.b16 %v506, %v505
      %v538 = vpack.c.b16 %v508, %v507
      %v539 = vpack.c.b16 %v510, %v509
      %v540 = vpack.c.b16 %v512, %v511
      %v541 = vpack.c.b16 %v514, %v513
      %v542 = vpack.c.b16 %v516, %v515
      %v543 = vpack.c.b16 %v518, %v517
      %v544 = vpack.c.b16 %v520, %v519
      %v545 = vpack.c.b16 %v522, %v521
      %v546 = vpack.c.b16 %v524, %v523
      %v547 = vpack.c.b16 %v526, %v525
      %v548 = vpack.c.b16 %v528, %v527
      %v549 = vpack.c.b16 %v530, %v529
      %v550 = vpack.c.b16 %v532, %v531
      %v551 = vpack.c.b16 %v534, %v533
      %v552 = vpack.c.b16 %v536, %v535
      %569 = vmatprep.subr.bf16.mxu0 0
      %570 = vmatpush1.bf16.msra.mxu0 %v537
      %571 = vmatprep.subr.bf16.mxu0 0
      %572 = vmatpush1.bf16.msra.mxu0 %v538
      %573 = vmatprep.subr.bf16.mxu0 0
      %574 = vmatpush1.bf16.msra.mxu0 %v539
      %575 = vmatprep.subr.bf16.mxu0 0
      %576 = vmatpush1.bf16.msra.mxu0 %v540
      %577 = vmatprep.subr.bf16.mxu0 0
      %578 = vmatpush1.bf16.msra.mxu0 %v541
      %579 = vmatprep.subr.bf16.mxu0 0
      %580 = vmatpush1.bf16.msra.mxu0 %v542
      %581 = vmatprep.subr.bf16.mxu0 0
      %582 = vmatpush1.bf16.msra.mxu0 %v543
      %583 = vmatprep.subr.bf16.mxu0 0
      %584 = vmatpush1.bf16.msra.mxu0 %v544
      %585 = vmatprep.subr.bf16.mxu0 0
      %586 = vmatpush1.bf16.msra.mxu0 %v545
      %587 = vmatprep.subr.bf16.mxu0 0
      %588 = vmatpush1.bf16.msra.mxu0 %v546
      %589 = vmatprep.subr.bf16.mxu0 0
      %590 = vmatpush1.bf16.msra.mxu0 %v547
      %591 = vmatprep.subr.bf16.mxu0 0
      %592 = vmatpush1.bf16.msra.mxu0 %v548
      %593 = vmatprep.subr.bf16.mxu0 0
      %594 = vmatpush1.bf16.msra.mxu0 %v549
      %595 = vmatprep.subr.bf16.mxu0 0
      %596 = vmatpush1.bf16.msra.mxu0 %v550
      %597 = vmatprep.subr.bf16.mxu0 0
      %598 = vmatpush1.bf16.msra.mxu0 %v551
      %599 = vmatprep.subr.bf16.mxu0 0
      %600 = vmatpush1.bf16.msra.mxu0 %v552
      %601 = vmatprep.mubr.bf16.mxu0 %v466
      %602 = vmatmul.mubr.bf16.gmra.mrb[0].mxu0 %v465
      %v603 = vpop.f32.mrb[0].mxu0
      %v604 = vadd.f32 %v439, %v603
      %v605 = vpop.f32.mrb[0].mxu0
      %v606 = vpop.f32.mrb[0].mxu0
      %v607 = vadd.f32 %v442, %v606
      %v608 = vpop.f32.mrb[0].mxu0
      %609 = vmatprep.mubr.bf16.mxu0 %v468
      %610 = vmatmul.mubr.bf16.gmra.mrb[0].mxu0 %v467
      %v611 = vpop.f32.mrb[0].mxu0
      %v612 = vadd.f32 %v447, %v611
      %v613 = vpop.f32.mrb[0].mxu0
      %v614 = vpop.f32.mrb[0].mxu0
      %v615 = vadd.f32 %v450, %v614
      %v616 = vpop.f32.mrb[0].mxu0
      %617 = vdwg.mxu0
      %v618 = vld [vmem:[%s2] sm:$0x1]
      %v620 = vlaneseq
      %v621 = vshrl.u32 %v620, 7
      %v622 = vsub.s32 0, %v621
      %v623 = vrot.slane %v618, %v622
      %v625 = vadd.f32 %v604, %v623
      %v626 = vadd.f32 %v607, %v623
      %v627 = vadd.f32 %v612, %v623
      %v628 = vadd.f32 %v615, %v623
      %v629 = vmax.f32 %v625, 0.0
      %v630 = vmax.f32 %v626, 0.0
      %v631 = vmax.f32 %v627, 0.0
      %v632 = vmax.f32 %v628, 0.0
      %v633 = vpack.c.bf16 %v629, %v629
      %v634 = vpack.c.bf16 %v630, %v630
      %v635 = vpack.c.bf16 %v631, %v631
      %v636 = vpack.c.bf16 %v632, %v632
      %637 = vst [vmem:[%s211] sm:$0xf] %v633
      %638 = vst [vmem:[%s211 + $0x4] sm:$0xf] %v634
      %639 = vst [vmem:[%s211 + $0x8] sm:$0xf] %v635
      %640 = vst [vmem:[%s211 + $0xc] sm:$0xf] %v636
      %s641 = smul.u32 4, %s19
      %p642 = scmp.lt.s32.totalorder %s18, 1
      %s643 = scalar_select %p642, %s18, 1
      %p644 = scmp.lt.s32.totalorder %s641, 3
      %s645 = scalar_select %p644, %s641, 3
      %s646 = smul.addr %s643, 4
      %s647 = sadd.s32 %s645, %s646
      %s648 = smul.addr %s647, 4
      %s649 = scalar_lea.vmem %s3, %s648
      // Predicated region
      $region33: #{backbone_base_forward.6} parent=31 // pred_check
        %p650 = pneg %p116
      $region34: #{backbone_base_forward.6} parent=31 // pred_check_branch
        %652 = sbr.rel (%p650) target = $region36
      $region35: #{backbone_base_forward.6} parent=31 // pred_region
        %s653 = smul.u32 4, %s19
      $region36: #{backbone_base_forward.6} parent=31 // pred_fallthru
        _
    $region32: #{backbone_base_forward.6} parent=5 // pred_fallthru
      _
    %p654 = scmp.le.s32.totalorder 2, %s9
    // Predicated region
    $region37: #{backbone_base_forward.6} parent=5 // pred_check
      %p655 = pneg %p654
    $region38: #{backbone_base_forward.6} parent=5 // pred_check_branch
      %657 = sbr.rel (%p655) target = $region40
    $region39: #{backbone_base_forward.6} parent=5 // pred_region
      %s658 = ssub.s32 %s9, 2
      // Predicated region
      $region41: #{backbone_base_forward.6} parent=39 // pred_check
        %p659 = pneg %p122
      $region42: #{backbone_base_forward.6} parent=39 // pred_check_branch
        %661 = sbr.rel (%p659) target = $region44
      $region43: #{backbone_base_forward.6} parent=39 // pred_region
        %s662 = smul.u32 4, %s21
        %p663 = scmp.lt.s32.totalorder %s20, 1
        %s664 = scalar_select %p663, %s20, 1
        %p665 = scmp.lt.s32.totalorder %s662, 3
        %s666 = scalar_select %p665, %s662, 3
        %s667 = smul.addr %s664, 4
        %s668 = sadd.s32 %s666, %s667
        %s669 = smul.addr %s668, 4
        %s670 = scalar_lea.vmem %s3, %s669
      $region44: #{backbone_base_forward.6} parent=39 // pred_fallthru
        _
    $region40: #{backbone_base_forward.6} parent=5 // pred_fallthru
      _
  $region6: #{backbone_base_forward.6} parent=0 // loop_footer
    %s13 = sadd.s32 1, %s9
  $region7: #{backbone_base_forward.6} parent=0 // loop_footer_branch
    %8 = sbr.rel target = $region3
  $region8: #{backbone_base_forward.6} parent=0 // loop_exit
    _

// kernel: backbone_base_forward.7
$region0: #{backbone_base_forward.7}
  #allocation0 [shape = 'u32[]', space=smem, size = 0x4, offset = 0x4, fixed_abs, tag = 'smem constant byte address 0x4 - core index']
  #allocation1 [shape = 'u32[144,128]{1,0:T(1,128)}', space=vmem, size = 0x12000, scoped, tag = 'internal scratch']
  %s0 = inlined_call_operand.vmem [shape: bf16[2,2,2,8,256], index: 0, kind: input, shape index: {}]
  %s1 = inlined_call_operand.vmem [shape: bf16[2,256,256], index: 1, kind: input, shape index: {}]
  %s2 = inlined_call_operand.vmem [shape: f32[1,256], index: 2, kind: input, shape index: {}]
  %s3 = inlined_call_operand.vmem [shape: f32[2,2,8,256], index: 3, kind: output, shape index: {}]
  %s4 = sld [smem:[#allocation0]]
  $region45: #{backbone_base_forward.7} parent=0
    _
  %s6 = ssub.s32 1, %s4
  %s7 = scalar_select 0, %s6, %s4
  loop: start=0, step=1, limit=4
  $region2: #{backbone_base_forward.7} parent=0 // loop_pre_header
    _
  $region3: #{backbone_base_forward.7} parent=0 // loop_header
    %s9 = sphi 0, %s13
    %p10 = scmp.ge.s32.totalorder %s9, 4
    %s16 = sphi 0, %s28
    %s17 = sphi 0, %s24
    %s18 = sphi 0, %s16
    %s19 = sphi 0, %s17
    %s20 = sphi 0, %s18
    %s21 = sphi 0, %s19
    %s33 = sphi 0, %s35
    %s36 = sphi 0, %s33
    %s37 = sphi 0, %s36
    %s53 = sphi 0, %s37
    %s57 = sphi 0, %s57
    %s59 = sphi 0, %s57
    %s60 = sphi 0, %s59
    %s74 = sphi 0, %s60
    %s78 = sphi 0, %s78
    %s80 = sphi 0, %s78
    %s81 = sphi 0, %s80
    %s95 = sphi 0, %s81
    %s103 = sphi 0, %s105
    %s106 = sphi 0, %s103
    %s107 = sphi 0, %s106
    %s123 = sphi 0, %s107
  $region4: #{backbone_base_forward.7} parent=0 // loop_header_branch
    %12 = sbr.rel (%p10) target = $region8
  $region5: #{backbone_base_forward.7} parent=0 // loop_body
    %s14 = ssub.s32 %s9, 1
    %s15 = ssub.s32 %s9, 2
    %s22 = sadd.s32 1, %s17
    %p23 = scmp.ge.s32.totalorder %s22, 1
    %s24 = scalar_select %p23, 0, %s22
    %s25 = sadd.s32 1, %s16
    %s26 = scalar_select %p23, %s25, %s16
    %p27 = scmp.ge.s32.totalorder %s26, 2
    %s28 = scalar_select %p27, 0, %s26
    %s29 = ssub.s32 %s16, %s28
    %s30 = ssub.s32 %s17, %s24
    %s31 = sor.u32 %s29, %s30
    %p32 = scmp.eq.s32.totalorder %s31, 0
    %s34 = sadd.s32 %s33, 1
    %s35 = scalar_select %p32, %s33, %s34
    %p38 = pneg %p32
    %p39 = scmp.eq.s32.totalorder %s9, 1
    %p40 = por %p38, %p39
    %p41 = scmp.ne.s32.totalorder %s33, %s36
    %p42 = scmp.eq.s32.totalorder %s9, 0
    %p43 = por %p41, %p42
    %p44 = scmp.ne.s32.totalorder %s33, %s36
    %p45 = scmp.eq.s32.totalorder %s14, 1
    %p46 = por %p44, %p45
    %p47 = scmp.ne.s32.totalorder %s36, %s37
    %p48 = scmp.eq.s32.totalorder %s14, 0
    %p49 = por %p47, %p48
    %p50 = scmp.ne.s32.totalorder %s36, %s37
    %p51 = scmp.eq.s32.totalorder %s15, 1
    %p52 = por %p50, %p51
    %p54 = scmp.ne.s32.totalorder %s37, %s53
    %p55 = scmp.eq.s32.totalorder %s15, 0
    %p56 = por %p54, %p55
    %s58 = sadd.s32 %s57, 1
    %p61 = scmp.eq.s32.totalorder %s9, 1
    %p62 = scmp.ne.s32.totalorder %s57, %s59
    %p63 = scmp.eq.s32.totalorder %s9, 0
    %p64 = por %p62, %p63
    %p65 = scmp.ne.s32.totalorder %s57, %s59
    %p66 = scmp.eq.s32.totalorder %s14, 1
    %p67 = por %p65, %p66
    %p68 = scmp.ne.s32.totalorder %s59, %s60
    %p69 = scmp.eq.s32.totalorder %s14, 0
    %p70 = por %p68, %p69
    %p71 = scmp.ne.s32.totalorder %s59, %s60
    %p72 = scmp.eq.s32.totalorder %s15, 1
    %p73 = por %p71, %p72
    %p75 = scmp.ne.s32.totalorder %s60, %s74
    %p76 = scmp.eq.s32.totalorder %s15, 0
    %p77 = por %p75, %p76
    %s79 = sadd.s32 %s78, 1
    %p82 = scmp.eq.s32.totalorder %s9, 1
    %p83 = scmp.ne.s32.totalorder %s78, %s80
    %p84 = scmp.eq.s32.totalorder %s9, 0
    %p85 = por %p83, %p84
    %p86 = scmp.ne.s32.totalorder %s78, %s80
    %p87 = scmp.eq.s32.totalorder %s14, 1
    %p88 = por %p86, %p87
    %p89 = scmp.ne.s32.totalorder %s80, %s81
    %p90 = scmp.eq.s32.totalorder %s14, 0
    %p91 = por %p89, %p90
    %p92 = scmp.ne.s32.totalorder %s80, %s81
    %p93 = scmp.eq.s32.totalorder %s15, 1
    %p94 = por %p92, %p93
    %p96 = scmp.ne.s32.totalorder %s81, %s95
    %p97 = scmp.eq.s32.totalorder %s15, 0
    %p98 = por %p96, %p97
    %s99 = ssub.s32 %s16, %s28
    %s100 = ssub.s32 %s17, %s24
    %s101 = sor.u32 %s99, %s100
    %p102 = scmp.eq.s32.totalorder %s101, 0
    %s104 = sadd.s32 %s103, 1
    %s105 = scalar_select %p102, %s103, %s104
    %p108 = pneg %p102
    %p109 = scmp.eq.s32.totalorder %s9, 1
    %p110 = por %p108, %p109
    %p111 = scmp.ne.s32.totalorder %s103, %s106
    %p112 = scmp.eq.s32.totalorder %s9, 0
    %p113 = por %p111, %p112
    %p114 = scmp.ne.s32.totalorder %s103, %s106
    %p115 = scmp.eq.s32.totalorder %s14, 1
    %p116 = por %p114, %p115
    %p117 = scmp.ne.s32.totalorder %s106, %s107
    %p118 = scmp.eq.s32.totalorder %s14, 0
    %p119 = por %p117, %p118
    %p120 = scmp.ne.s32.totalorder %s106, %s107
    %p121 = scmp.eq.s32.totalorder %s15, 1
    %p122 = por %p120, %p121
    %p124 = scmp.ne.s32.totalorder %s107, %s123
    %p125 = scmp.eq.s32.totalorder %s15, 0
    %p126 = por %p124, %p125
    %p127 = scmp.le.s32.totalorder 1, %s9
    %p128 = scmp.lt.s32.totalorder %s9, 3
    %p129 = pnand %p127, %p128
    %p130 = pneg %p129
    // Predicated region
    $region9: #{backbone_base_forward.7} parent=5 // pred_check
      _
    $region10: #{backbone_base_forward.7} parent=5 // pred_check_branch
      %132 = sbr.rel (%p129) target = $region12
    $region11: #{backbone_base_forward.7} parent=5 // pred_region
      %s133 = ssub.s32 %s9, 1
      // Predicated region
      $region13: #{backbone_base_forward.7} parent=11 // pred_check
        %p134 = pneg %p70
      $region14: #{backbone_base_forward.7} parent=11 // pred_check_branch
        %136 = sbr.rel (%p134) target = $region16
      $region15: #{backbone_base_forward.7} parent=11 // pred_region
        _
      $region16: #{backbone_base_forward.7} parent=11 // pred_fallthru
        _
      // Predicated region
      $region17: #{backbone_base_forward.7} parent=11 // pred_check
        %p137 = pneg %p91
      $region18: #{backbone_base_forward.7} parent=11 // pred_check_branch
        %139 = sbr.rel (%p137) target = $region20
      $region19: #{backbone_base_forward.7} parent=11 // pred_region
        _
      $region20: #{backbone_base_forward.7} parent=11 // pred_fallthru
        _
    $region12: #{backbone_base_forward.7} parent=5 // pred_fallthru
      _
    %p140 = scmp.lt.s32.totalorder %s9, 2
    // Predicated region
    $region21: #{backbone_base_forward.7} parent=5 // pred_check
      %p141 = pneg %p140
    $region22: #{backbone_base_forward.7} parent=5 // pred_check_branch
      %143 = sbr.rel (%p141) target = $region24
    $region23: #{backbone_base_forward.7} parent=5 // pred_region
      // Predicated region
      $region25: #{backbone_base_forward.7} parent=23 // pred_check
        %p144 = pneg %p43
      $region26: #{backbone_base_forward.7} parent=23 // pred_check_branch
        %146 = sbr.rel (%p144) target = $region28
      $region27: #{backbone_base_forward.7} parent=23 // pred_region
        %s147 = smul.u32 2, %s17
        %p148 = scmp.lt.s32.totalorder %s16, 1
        %s149 = scalar_select %p148, %s16, 1
        %p150 = scmp.lt.s32.totalorder %s147, 1
        %s151 = scalar_select %p150, %s147, 1
        %s152 = smul.addr %s151, 4
        %s153 = smul.addr %s149, 8
        %s154 = sadd.s32 %s152, %s153
        %s155 = smul.addr %s154, 4
        %s156 = scalar_lea.vmem %s0, %s155
        %s157 = smul.u32 2, %s17
      $region28: #{backbone_base_forward.7} parent=23 // pred_fallthru
        _
    $region24: #{backbone_base_forward.7} parent=5 // pred_fallthru
      _
    %p158 = scmp.le.s32.totalorder 1, %s9
    %p159 = scmp.lt.s32.totalorder %s9, 3
    %p160 = pnand %p158, %p159
    %p161 = pneg %p160
    // Predicated region
    $region29: #{backbone_base_forward.7} parent=5 // pred_check
      _
    $region30: #{backbone_base_forward.7} parent=5 // pred_check_branch
      %163 = sbr.rel (%p160) target = $region32
    $region31: #{backbone_base_forward.7} parent=5 // pred_region
      %s164 = ssub.s32 %s9, 1
      %s165 = smul.u32 2, %s19
      %p166 = scmp.lt.s32.totalorder %s18, 1
      %s167 = scalar_select %p166, %s18, 1
      %p168 = scmp.lt.s32.totalorder %s165, 1
      %s169 = scalar_select %p168, %s165, 1
      %s170 = smul.addr %s169, 4
      %s171 = smul.addr %s167, 8
      %s172 = sadd.s32 %s170, %s171
      %s173 = smul.addr %s172, 4
      %s174 = scalar_lea.vmem %s0, %s173
      %p175 = pneg %p49
      %p176 = pneg %p46
      %p177 = pneg %p70
      %p178 = pneg %p67
      %p179 = pneg %p91
      %p180 = pneg %p88
      %p181 = pneg %p119
      %p182 = pneg %p116
      %s183 = smul.u32 2, %s19
      %p184 = scmp.lt.s32.totalorder %s18, 1
      %s185 = scalar_select %p184, %s18, 1
      %p186 = scmp.lt.s32.totalorder %s183, 1
      %s187 = scalar_select %p186, %s183, 1
      %s188 = smul.addr %s187, 2
      %s189 = smul.addr %s185, 4
      %s190 = sadd.s32 %s188, %s189
      %s191 = smul.addr %s190, 8
      %s192 = scalar_lea.vmem %s3, %s191
      %s193 = smul.u32 2, %s19
      %p194 = scmp.lt.s32.totalorder %s18, 1
      %s195 = scalar_select %p194, %s18, 1
      %p196 = scmp.lt.s32.totalorder %s193, 1
      %s197 = scalar_select %p196, %s193, 1
      %s198 = smul.addr %s197, 4
      %s199 = smul.addr %s195, 8
      %s200 = sadd.s32 %s198, %s199
      %s201 = smul.addr %s200, 4
      %s202 = scalar_lea.vmem %s0, %s201
      %s203 = smul.u32 2, %s19
      %s204 = smul.u32 2, %s19
      %p205 = scmp.lt.s32.totalorder %s18, 1
      %s206 = scalar_select %p205, %s18, 1
      %p207 = scmp.lt.s32.totalorder %s204, 1
      %s208 = scalar_select %p207, %s204, 1
      %s209 = smul.addr %s208, 2
      %s210 = smul.addr %s206, 4
      %s211 = sadd.s32 %s209, %s210
      %s212 = smul.addr %s211, 8
      %s213 = scalar_lea.vmem %s3, %s212
      %s214 = smul.u32 2, %s19
      %v215 = vld [vmem:[%s202] sm:$0xff]
      %v216 = vld [vmem:[%s202 + $0x10] sm:$0xff]
      %v217 = vld [vmem:[%s1] sm:$0xff]
      %v218 = vld [vmem:[%s1 + $0x8] sm:$0xff]
      %v219 = vld [vmem:[%s1 + $0x10] sm:$0xff]
      %v220 = vld [vmem:[%s1 + $0x18] sm:$0xff]
      %v221 = vld [vmem:[%s1 + $0x20] sm:$0xff]
      %v222 = vld [vmem:[%s1 + $0x28] sm:$0xff]
      %v223 = vld [vmem:[%s1 + $0x30] sm:$0xff]
      %v224 = vld [vmem:[%s1 + $0x38] sm:$0xff]
      %v225 = vld [vmem:[%s1 + $0x40] sm:$0xff]
      %v226 = vld [vmem:[%s1 + $0x48] sm:$0xff]
      %v227 = vld [vmem:[%s1 + $0x50] sm:$0xff]
      %v228 = vld [vmem:[%s1 + $0x58] sm:$0xff]
      %v229 = vld [vmem:[%s1 + $0x60] sm:$0xff]
      %v230 = vld [vmem:[%s1 + $0x68] sm:$0xff]
      %v231 = vld [vmem:[%s1 + $0x70] sm:$0xff]
      %v232 = vld [vmem:[%s1 + $0x78] sm:$0xff]
      %v233 = vld [vmem:[%s1 + $0x80] sm:$0xff]
      %v234 = vld [vmem:[%s1 + $0x88] sm:$0xff]
      %v235 = vld [vmem:[%s1 + $0x90] sm:$0xff]
      %v236 = vld [vmem:[%s1 + $0x98] sm:$0xff]
      %v237 = vld [vmem:[%s1 + $0xa0] sm:$0xff]
      %v238 = vld [vmem:[%s1 + $0xa8] sm:$0xff]
      %v239 = vld [vmem:[%s1 + $0xb0] sm:$0xff]
      %v240 = vld [vmem:[%s1 + $0xb8] sm:$0xff]
      %v241 = vld [vmem:[%s1 + $0xc0] sm:$0xff]
      %v242 = vld [vmem:[%s1 + $0xc8] sm:$0xff]
      %v243 = vld [vmem:[%s1 + $0xd0] sm:$0xff]
      %v244 = vld [vmem:[%s1 + $0xd8] sm:$0xff]
      %v245 = vld [vmem:[%s1 + $0xe0] sm:$0xff]
      %v246 = vld [vmem:[%s1 + $0xe8] sm:$0xff]
      %v247 = vld [vmem:[%s1 + $0xf0] sm:$0xff]
      %v248 = vld [vmem:[%s1 + $0xf8] sm:$0xff]
      %s249 = scalar_lea.vmem %s202, 8
      %v250 = vld [vmem:[%s249] sm:$0xff]
      %v251 = vld [vmem:[%s249 + $0x10] sm:$0xff]
      %s252 = scalar_lea.vmem %s1, 256
      %v253 = vld [vmem:[%s252] sm:$0xff]
      %v254 = vld [vmem:[%s252 + $0x8] sm:$0xff]
      %v255 = vld [vmem:[%s252 + $0x10] sm:$0xff]
      %v256 = vld [vmem:[%s252 + $0x18] sm:$0xff]
      %v257 = vld [vmem:[%s252 + $0x20] sm:$0xff]
      %v258 = vld [vmem:[%s252 + $0x28] sm:$0xff]
      %v259 = vld [vmem:[%s252 + $0x30] sm:$0xff]
      %v260 = vld [vmem:[%s252 + $0x38] sm:$0xff]
      %v261 = vld [vmem:[%s252 + $0x40] sm:$0xff]
      %v262 = vld [vmem:[%s252 + $0x48] sm:$0xff]
      %v263 = vld [vmem:[%s252 + $0x50] sm:$0xff]
      %v264 = vld [vmem:[%s252 + $0x58] sm:$0xff]
      %v265 = vld [vmem:[%s252 + $0x60] sm:$0xff]
      %v266 = vld [vmem:[%s252 + $0x68] sm:$0xff]
      %v267 = vld [vmem:[%s252 + $0x70] sm:$0xff]
      %v268 = vld [vmem:[%s252 + $0x78] sm:$0xff]
      %v269 = vld [vmem:[%s252 + $0x80] sm:$0xff]
      %v270 = vld [vmem:[%s252 + $0x88] sm:$0xff]
      %v271 = vld [vmem:[%s252 + $0x90] sm:$0xff]
      %v272 = vld [vmem:[%s252 + $0x98] sm:$0xff]
      %v273 = vld [vmem:[%s252 + $0xa0] sm:$0xff]
      %v274 = vld [vmem:[%s252 + $0xa8] sm:$0xff]
      %v275 = vld [vmem:[%s252 + $0xb0] sm:$0xff]
      %v276 = vld [vmem:[%s252 + $0xb8] sm:$0xff]
      %v277 = vld [vmem:[%s252 + $0xc0] sm:$0xff]
      %v278 = vld [vmem:[%s252 + $0xc8] sm:$0xff]
      %v279 = vld [vmem:[%s252 + $0xd0] sm:$0xff]
      %v280 = vld [vmem:[%s252 + $0xd8] sm:$0xff]
      %v281 = vld [vmem:[%s252 + $0xe0] sm:$0xff]
      %v282 = vld [vmem:[%s252 + $0xe8] sm:$0xff]
      %v283 = vld [vmem:[%s252 + $0xf0] sm:$0xff]
      %v284 = vld [vmem:[%s252 + $0xf8] sm:$0xff]
      %v287 = vunpack.c.l.b16 %v250
      %v288 = vunpack.c.h.b16 %v250
      %v289 = vunpack.c.l.b16 %v251
      %v290 = vunpack.c.h.b16 %v251
      %v291 = vpack.c.b16 %v289, %v287
      %v292 = vpack.c.b16 %v290, %v288
      %v327 = vunpack.c.l.b16 %v253
      %v328 = vunpack.c.h.b16 %v253
      %v329 = vunpack.c.l.b16 %v254
      %v330 = vunpack.c.h.b16 %v254
      %v331 = vunpack.c.l.b16 %v255
      %v332 = vunpack.c.h.b16 %v255
      %v333 = vunpack.c.l.b16 %v256
      %v334 = vunpack.c.h.b16 %v256
      %v335 = vunpack.c.l.b16 %v257
      %v336 = vunpack.c.h.b16 %v257
      %v337 = vunpack.c.l.b16 %v258
      %v338 = vunpack.c.h.b16 %v258
      %v339 = vunpack.c.l.b16 %v259
      %v340 = vunpack.c.h.b16 %v259
      %v341 = vunpack.c.l.b16 %v260
      %v342 = vunpack.c.h.b16 %v260
      %v343 = vunpack.c.l.b16 %v261
      %v344 = vunpack.c.h.b16 %v261
      %v345 = vunpack.c.l.b16 %v262
      %v346 = vunpack.c.h.b16 %v262
      %v347 = vunpack.c.l.b16 %v263
      %v348 = vunpack.c.h.b16 %v263
      %v349 = vunpack.c.l.b16 %v264
      %v350 = vunpack.c.h.b16 %v264
      %v351 = vunpack.c.l.b16 %v265
      %v352 = vunpack.c.h.b16 %v265
      %v353 = vunpack.c.l.b16 %v266
      %v354 = vunpack.c.h.b16 %v266
      %v355 = vunpack.c.l.b16 %v267
      %v356 = vunpack.c.h.b16 %v267
      %v357 = vunpack.c.l.b16 %v268
      %v358 = vunpack.c.h.b16 %v268
      %v359 = vunpack.c.l.b16 %v269
      %v360 = vunpack.c.h.b16 %v269
      %v361 = vunpack.c.l.b16 %v270
      %v362 = vunpack.c.h.b16 %v270
      %v363 = vunpack.c.l.b16 %v271
      %v364 = vunpack.c.h.b16 %v271
      %v365 = vunpack.c.l.b16 %v272
      %v366 = vunpack.c.h.b16 %v272
      %v367 = vunpack.c.l.b16 %v273
      %v368 = vunpack.c.h.b16 %v273
      %v369 = vunpack.c.l.b16 %v274
      %v370 = vunpack.c.h.b16 %v274
      %v371 = vunpack.c.l.b16 %v275
      %v372 = vunpack.c.h.b16 %v275
      %v373 = vunpack.c.l.b16 %v276
      %v374 = vunpack.c.h.b16 %v276
      %v375 = vunpack.c.l.b16 %v277
      %v376 = vunpack.c.h.b16 %v277
      %v377 = vunpack.c.l.b16 %v278
      %v378 = vunpack.c.h.b16 %v278
      %v379 = vunpack.c.l.b16 %v279
      %v380 = vunpack.c.h.b16 %v279
      %v381 = vunpack.c.l.b16 %v280
      %v382 = vunpack.c.h.b16 %v280
      %v383 = vunpack.c.l.b16 %v281
      %v384 = vunpack.c.h.b16 %v281
      %v385 = vunpack.c.l.b16 %v282
      %v386 = vunpack.c.h.b16 %v282
      %v387 = vunpack.c.l.b16 %v283
      %v388 = vunpack.c.h.b16 %v283
      %v389 = vunpack.c.l.b16 %v284
      %v390 = vunpack.c.h.b16 %v284
      %v391 = vpack.c.b16 %v329, %v327
      %v392 = vpack.c.b16 %v330, %v328
      %v393 = vpack.c.b16 %v333, %v331
      %v394 = vpack.c.b16 %v334, %v332
      %v395 = vpack.c.b16 %v337, %v335
      %v396 = vpack.c.b16 %v338, %v336
      %v397 = vpack.c.b16 %v341, %v339
      %v398 = vpack.c.b16 %v342, %v340
      %v399 = vpack.c.b16 %v345, %v343
      %v400 = vpack.c.b16 %v346, %v344
      %v401 = vpack.c.b16 %v349, %v347
      %v402 = vpack.c.b16 %v350, %v348
      %v403 = vpack.c.b16 %v353, %v351
      %v404 = vpack.c.b16 %v354, %v352
      %v405 = vpack.c.b16 %v357, %v355
      %v406 = vpack.c.b16 %v358, %v356
      %v407 = vpack.c.b16 %v361, %v359
      %v408 = vpack.c.b16 %v362, %v360
      %v409 = vpack.c.b16 %v365, %v363
      %v410 = vpack.c.b16 %v366, %v364
      %v411 = vpack.c.b16 %v369, %v367
      %v412 = vpack.c.b16 %v370, %v368
      %v413 = vpack.c.b16 %v373, %v371
      %v414 = vpack.c.b16 %v374, %v372
      %v415 = vpack.c.b16 %v377, %v375
      %v416 = vpack.c.b16 %v378, %v376
      %v417 = vpack.c.b16 %v381, %v379
      %v418 = vpack.c.b16 %v382, %v380
      %v419 = vpack.c.b16 %v385, %v383
      %v420 = vpack.c.b16 %v386, %v384
      %v421 = vpack.c.b16 %v389, %v387
      %v422 = vpack.c.b16 %v390, %v388
      %455 = vmatprep.subr.bf16.mxu0 %v392
      %456 = vmatpush1.bf16.msra.mxu0 %v391
      %457 = vmatprep.subr.bf16.mxu0 %v394
      %458 = vmatpush1.bf16.msra.mxu0 %v393
      %459 = vmatprep.subr.bf16.mxu0 %v396
      %460 = vmatpush1.bf16.msra.mxu0 %v395
      %461 = vmatprep.subr.bf16.mxu0 %v398
      %462 = vmatpush1.bf16.msra.mxu0 %v397
      %463 = vmatprep.subr.bf16.mxu0 %v400
      %464 = vmatpush1.bf16.msra.mxu0 %v399
      %465 = vmatprep.subr.bf16.mxu0 %v402
      %466 = vmatpush1.bf16.msra.mxu0 %v401
      %467 = vmatprep.subr.bf16.mxu0 %v404
      %468 = vmatpush1.bf16.msra.mxu0 %v403
      %469 = vmatprep.subr.bf16.mxu0 %v406
      %470 = vmatpush1.bf16.msra.mxu0 %v405
      %471 = vmatprep.subr.bf16.mxu0 %v408
      %472 = vmatpush1.bf16.msra.mxu0 %v407
      %473 = vmatprep.subr.bf16.mxu0 %v410
      %474 = vmatpush1.bf16.msra.mxu0 %v409
      %475 = vmatprep.subr.bf16.mxu0 %v412
      %476 = vmatpush1.bf16.msra.mxu0 %v411
      %477 = vmatprep.subr.bf16.mxu0 %v414
      %478 = vmatpush1.bf16.msra.mxu0 %v413
      %479 = vmatprep.subr.bf16.mxu0 %v416
      %480 = vmatpush1.bf16.msra.mxu0 %v415
      %481 = vmatprep.subr.bf16.mxu0 %v418
      %482 = vmatpush1.bf16.msra.mxu0 %v417
      %483 = vmatprep.subr.bf16.mxu0 %v420
      %484 = vmatpush1.bf16.msra.mxu0 %v419
      %485 = vmatprep.subr.bf16.mxu0 %v422
      %486 = vmatpush1.bf16.msra.mxu0 %v421
      %487 = vmatprep.mubr.bf16.mxu0 %v292
      %488 = vmatmul.mubr.bf16.gmra.mrb[0].mxu0 %v291
      %v489 = vpop.f32.mrb[0].mxu0
      %v490 = vadd.f32 0.0, %v489
      %v491 = vpop.f32.mrb[0].mxu0
      %v492 = vadd.f32 0.0, %v491
      %v493 = vpop.f32.mrb[0].mxu0
      %v494 = vadd.f32 0.0, %v493
      %v495 = vpop.f32.mrb[0].mxu0
      %v496 = vadd.f32 0.0, %v495
      %497 = vdwg.mxu0
      %v500 = vunpack.c.l.b16 %v215
      %v501 = vunpack.c.h.b16 %v215
      %v502 = vunpack.c.l.b16 %v216
      %v503 = vunpack.c.h.b16 %v216
      %v504 = vpack.c.b16 %v502, %v500
      %v505 = vpack.c.b16 %v503, %v501
      %v540 = vunpack.c.l.b16 %v217
      %v541 = vunpack.c.h.b16 %v217
      %v542 = vunpack.c.l.b16 %v218
      %v543 = vunpack.c.h.b16 %v218
      %v544 = vunpack.c.l.b16 %v219
      %v545 = vunpack.c.h.b16 %v219
      %v546 = vunpack.c.l.b16 %v220
      %v547 = vunpack.c.h.b16 %v220
      %v548 = vunpack.c.l.b16 %v221
      %v549 = vunpack.c.h.b16 %v221
      %v550 = vunpack.c.l.b16 %v222
      %v551 = vunpack.c.h.b16 %v222
      %v552 = vunpack.c.l.b16 %v223
      %v553 = vunpack.c.h.b16 %v223
      %v554 = vunpack.c.l.b16 %v224
      %v555 = vunpack.c.h.b16 %v224
      %v556 = vunpack.c.l.b16 %v225
      %v557 = vunpack.c.h.b16 %v225
      %v558 = vunpack.c.l.b16 %v226
      %v559 = vunpack.c.h.b16 %v226
      %v560 = vunpack.c.l.b16 %v227
      %v561 = vunpack.c.h.b16 %v227
      %v562 = vunpack.c.l.b16 %v228
      %v563 = vunpack.c.h.b16 %v228
      %v564 = vunpack.c.l.b16 %v229
      %v565 = vunpack.c.h.b16 %v229
      %v566 = vunpack.c.l.b16 %v230
      %v567 = vunpack.c.h.b16 %v230
      %v568 = vunpack.c.l.b16 %v231
      %v569 = vunpack.c.h.b16 %v231
      %v570 = vunpack.c.l.b16 %v232
      %v571 = vunpack.c.h.b16 %v232
      %v572 = vunpack.c.l.b16 %v233
      %v573 = vunpack.c.h.b16 %v233
      %v574 = vunpack.c.l.b16 %v234
      %v575 = vunpack.c.h.b16 %v234
      %v576 = vunpack.c.l.b16 %v235
      %v577 = vunpack.c.h.b16 %v235
      %v578 = vunpack.c.l.b16 %v236
      %v579 = vunpack.c.h.b16 %v236
      %v580 = vunpack.c.l.b16 %v237
      %v581 = vunpack.c.h.b16 %v237
      %v582 = vunpack.c.l.b16 %v238
      %v583 = vunpack.c.h.b16 %v238
      %v584 = vunpack.c.l.b16 %v239
      %v585 = vunpack.c.h.b16 %v239
      %v586 = vunpack.c.l.b16 %v240
      %v587 = vunpack.c.h.b16 %v240
      %v588 = vunpack.c.l.b16 %v241
      %v589 = vunpack.c.h.b16 %v241
      %v590 = vunpack.c.l.b16 %v242
      %v591 = vunpack.c.h.b16 %v242
      %v592 = vunpack.c.l.b16 %v243
      %v593 = vunpack.c.h.b16 %v243
      %v594 = vunpack.c.l.b16 %v244
      %v595 = vunpack.c.h.b16 %v244
      %v596 = vunpack.c.l.b16 %v245
      %v597 = vunpack.c.h.b16 %v245
      %v598 = vunpack.c.l.b16 %v246
      %v599 = vunpack.c.h.b16 %v246
      %v600 = vunpack.c.l.b16 %v247
      %v601 = vunpack.c.h.b16 %v247
      %v602 = vunpack.c.l.b16 %v248
      %v603 = vunpack.c.h.b16 %v248
      %v604 = vpack.c.b16 %v542, %v540
      %v605 = vpack.c.b16 %v543, %v541
      %v606 = vpack.c.b16 %v546, %v544
      %v607 = vpack.c.b16 %v547, %v545
      %v608 = vpack.c.b16 %v550, %v548
      %v609 = vpack.c.b16 %v551, %v549
      %v610 = vpack.c.b16 %v554, %v552
      %v611 = vpack.c.b16 %v555, %v553
      %v612 = vpack.c.b16 %v558, %v556
      %v613 = vpack.c.b16 %v559, %v557
      %v614 = vpack.c.b16 %v562, %v560
      %v615 = vpack.c.b16 %v563, %v561
      %v616 = vpack.c.b16 %v566, %v564
      %v617 = vpack.c.b16 %v567, %v565
      %v618 = vpack.c.b16 %v570, %v568
      %v619 = vpack.c.b16 %v571, %v569
      %v620 = vpack.c.b16 %v574, %v572
      %v621 = vpack.c.b16 %v575, %v573
      %v622 = vpack.c.b16 %v578, %v576
      %v623 = vpack.c.b16 %v579, %v577
      %v624 = vpack.c.b16 %v582, %v580
      %v625 = vpack.c.b16 %v583, %v581
      %v626 = vpack.c.b16 %v586, %v584
      %v627 = vpack.c.b16 %v587, %v585
      %v628 = vpack.c.b16 %v590, %v588
      %v629 = vpack.c.b16 %v591, %v589
      %v630 = vpack.c.b16 %v594, %v592
      %v631 = vpack.c.b16 %v595, %v593
      %v632 = vpack.c.b16 %v598, %v596
      %v633 = vpack.c.b16 %v599, %v597
      %v634 = vpack.c.b16 %v602, %v600
      %v635 = vpack.c.b16 %v603, %v601
      %668 = vmatprep.subr.bf16.mxu0 %v605
      %669 = vmatpush1.bf16.msra.mxu0 %v604
      %670 = vmatprep.subr.bf16.mxu0 %v607
      %671 = vmatpush1.bf16.msra.mxu0 %v606
      %672 = vmatprep.subr.bf16.mxu0 %v609
      %673 = vmatpush1.bf16.msra.mxu0 %v608
      %674 = vmatprep.subr.bf16.mxu0 %v611
      %675 = vmatpush1.bf16.msra.mxu0 %v610
      %676 = vmatprep.subr.bf16.mxu0 %v613
      %677 = vmatpush1.bf16.msra.mxu0 %v612
      %678 = vmatprep.subr.bf16.mxu0 %v615
      %679 = vmatpush1.bf16.msra.mxu0 %v614
      %680 = vmatprep.subr.bf16.mxu0 %v617
      %681 = vmatpush1.bf16.msra.mxu0 %v616
      %682 = vmatprep.subr.bf16.mxu0 %v619
      %683 = vmatpush1.bf16.msra.mxu0 %v618
      %684 = vmatprep.subr.bf16.mxu0 %v621
      %685 = vmatpush1.bf16.msra.mxu0 %v620
      %686 = vmatprep.subr.bf16.mxu0 %v623
      %687 = vmatpush1.bf16.msra.mxu0 %v622
      %688 = vmatprep.subr.bf16.mxu0 %v625
      %689 = vmatpush1.bf16.msra.mxu0 %v624
      %690 = vmatprep.subr.bf16.mxu0 %v627
      %691 = vmatpush1.bf16.msra.mxu0 %v626
      %692 = vmatprep.subr.bf16.mxu0 %v629
      %693 = vmatpush1.bf16.msra.mxu0 %v628
      %694 = vmatprep.subr.bf16.mxu0 %v631
      %695 = vmatpush1.bf16.msra.mxu0 %v630
      %696 = vmatprep.subr.bf16.mxu0 %v633
      %697 = vmatpush1.bf16.msra.mxu0 %v632
      %698 = vmatprep.subr.bf16.mxu0 %v635
      %699 = vmatpush1.bf16.msra.mxu0 %v634
      %700 = vmatprep.mubr.bf16.mxu0 %v505
      %701 = vmatmul.mubr.bf16.gmra.mrb[0].mxu0 %v504
      %v702 = vpop.f32.mrb[0].mxu0
      %v703 = vadd.f32 %v490, %v702
      %v704 = vpop.f32.mrb[0].mxu0
      %v705 = vadd.f32 %v492, %v704
      %v706 = vpop.f32.mrb[0].mxu0
      %v707 = vadd.f32 %v494, %v706
      %v708 = vpop.f32.mrb[0].mxu0
      %v709 = vadd.f32 %v496, %v708
      %710 = vdwg.mxu0
      %v711 = vld [vmem:[%s2] sm:$0x3]
      %v713 = vlaneseq
      %v714 = vshrl.u32 %v713, 7
      %v715 = vsub.s32 0, %v714
      %v716 = vrot.slane %v711, %v715
      %v717 = vlaneseq
      %v718 = vshrl.u32 %v717, 7
      %v719 = vsub.s32 1, %v718
      %v720 = vrot.slane %v711, %v719
      %v723 = vadd.f32 %v703, %v716
      %v724 = vadd.f32 %v705, %v720
      %v725 = vadd.f32 %v707, %v716
      %v726 = vadd.f32 %v709, %v720
      %v727 = vmax.f32 %v723, 0.0
      %v728 = vmax.f32 %v724, 0.0
      %v729 = vmax.f32 %v725, 0.0
      %v730 = vmax.f32 %v726, 0.0
      %731 = vst [vmem:[%s213] sm:$0xff] %v727
      %732 = vst [vmem:[%s213 + $0x8] sm:$0xff] %v728
      %733 = vst [vmem:[%s213 + $0x10] sm:$0xff] %v729
      %734 = vst [vmem:[%s213 + $0x18] sm:$0xff] %v730
      %s735 = smul.u32 2, %s19
      %p736 = scmp.lt.s32.totalorder %s18, 1
      %s737 = scalar_select %p736, %s18, 1
      %p738 = scmp.lt.s32.totalorder %s735, 1
      %s739 = scalar_select %p738, %s735, 1
      %s740 = smul.addr %s739, 2
      %s741 = smul.addr %s737, 4
      %s742 = sadd.s32 %s740, %s741
      %s743 = smul.addr %s742, 8
      %s744 = scalar_lea.vmem %s3, %s743
      // Predicated region
      $region33: #{backbone_base_forward.7} parent=31 // pred_check
        %p745 = pneg %p116
      $region34: #{backbone_base_forward.7} parent=31 // pred_check_branch
        %747 = sbr.rel (%p745) target = $region36
      $region35: #{backbone_base_forward.7} parent=31 // pred_region
        %s748 = smul.u32 2, %s19
      $region36: #{backbone_base_forward.7} parent=31 // pred_fallthru
        _
    $region32: #{backbone_base_forward.7} parent=5 // pred_fallthru
      _
    %p749 = scmp.le.s32.totalorder 2, %s9
    // Predicated region
    $region37: #{backbone_base_forward.7} parent=5 // pred_check
      %p750 = pneg %p749
    $region38: #{backbone_base_forward.7} parent=5 // pred_check_branch
      %752 = sbr.rel (%p750) target = $region40
    $region39: #{backbone_base_forward.7} parent=5 // pred_region
      %s753 = ssub.s32 %s9, 2
      // Predicated region
      $region41: #{backbone_base_forward.7} parent=39 // pred_check
        %p754 = pneg %p122
      $region42: #{backbone_base_forward.7} parent=39 // pred_check_branch
        %756 = sbr.rel (%p754) target = $region44
      $region43: #{backbone_base_forward.7} parent=39 // pred_region
        %s757 = smul.u32 2, %s21
        %p758 = scmp.lt.s32.totalorder %s20, 1
        %s759 = scalar_select %p758, %s20, 1
        %p760 = scmp.lt.s32.totalorder %s757, 1
        %s761 = scalar_select %p760, %s757, 1
        %s762 = smul.addr %s761, 2
        %s763 = smul.addr %s759, 4
        %s764 = sadd.s32 %s762, %s763
        %s765 = smul.addr %s764, 8
        %s766 = scalar_lea.vmem %s3, %s765
      $region44: #{backbone_base_forward.7} parent=39 // pred_fallthru
        _
    $region40: #{backbone_base_forward.7} parent=5 // pred_fallthru
      _
  $region6: #{backbone_base_forward.7} parent=0 // loop_footer
    %s13 = sadd.s32 1, %s9
  $region7: #{backbone_base_forward.7} parent=0 // loop_footer_branch
    %8 = sbr.rel target = $region3
  $region8: #{backbone_base_forward.7} parent=0 // loop_exit
    _

</llo_original>
